<compile_context>
chip_gen: v5e
topology: v5e:2x2
jax: 0.10.0
libtpu: 0.0.40
codegen_flags: <defaults>
</compile_context>

<pallas_src>
import functools

import numpy as np
import jax
import jax.numpy as jnp
from jax.experimental import pallas as pl
from jax.experimental.pallas import tpu as pltpu


# ------------------------------ small helpers ------------------------------- #
def _round_up(x, m):
    return -(-int(x) // m) * m


def _blk_bytes(shape, dtype):
    s = list(shape)
    if len(s) >= 2:
        s[-1] = _round_up(s[-1], 128)
        s[-2] = _round_up(s[-2], 8)
    else:
        s[-1] = _round_up(s[-1], 128)
    return int(np.prod(s)) * jnp.dtype(dtype).itemsize


def _pick_batch_block(B, requested):
    """B is already padded to a multiple of 8."""
    if (requested is not None and B % int(requested) == 0
            and (int(requested) % 8 == 0 or int(requested) == B)):
        return int(requested)
    divisors = [c for c in range(8, min(B, 128) + 1, 8) if B % c == 0]
    if not divisors:
        return B
    two_block = [c for c in divisors if B // c >= 2]
    # prefer >=2 batch blocks (megacore / v7x sharding) only when the tile is
    # still large enough (>=64 rows) to keep MXU row occupancy reasonable.
    if two_block and max(two_block) >= 64:
        return max(two_block)
    return max(divisors)


# --------------- one-time probe for single-buffered weight specs ------------ #
_BUFFERED_ONE_SUPPORTED = None


def _buffered_one_supported():
    """Probe (exactly once) whether this Pallas/Mosaic build accepts
    BlockSpec(..., pipeline_mode=pl.Buffered(1)).  Only this tiny probe kernel
    is guarded by a broad except — the main kernel call never is."""
    global _BUFFERED_ONE_SUPPORTED
    if _BUFFERED_ONE_SUPPORTED is not None:
        return _BUFFERED_ONE_SUPPORTED
    try:
        if not hasattr(pl, "Buffered"):
            raise AttributeError("pl.Buffered not available")

        def _probe(x_ref, w_ref, o_ref):
            o_ref[...] = x_ref[...] + w_ref[...]

        x = jnp.zeros((8, 128), jnp.float32)
        w = jnp.ones((8, 128), jnp.float32)
        out = pl.pallas_call(
            _probe,
            out_shape=jax.ShapeDtypeStruct((8, 128), jnp.float32),
            grid_spec=pltpu.PrefetchScalarGridSpec(
                num_scalar_prefetch=0,
                grid=(2,),
                in_specs=[pl.BlockSpec((8, 128), lambda i: (0, 0)),
                          pl.BlockSpec((8, 128), lambda i: (0, 0),
                                       pipeline_mode=pl.Buffered(1))],
                out_specs=pl.BlockSpec((8, 128), lambda i: (0, 0))),
        )(x, w)
        jax.block_until_ready(out)
        _BUFFERED_ONE_SUPPORTED = bool(np.allclose(np.asarray(out), 1.0))
    except Exception:
        _BUFFERED_ONE_SUPPORTED = False
    return _BUFFERED_ONE_SUPPORTED


# ----------------------------- Pallas kernel ------------------------------- #
def _decoder_kernel(dl_ref, h0_ref, c0_ref, enc_ref, att1_ref, emb_ref,
                    Wdec_ref, wful_ref, Wxe_ref, Wwh_ref, bg_ref,
                    Wfc_ref, bfc_ref,
                    pred_ref, alpha_ref,
                    h_sc, c_sc, *, approx_recip=False):
    t_blk = pl.program_id(1)                       # time-block index (innermost)
    time_block, tb, EMB = emb_ref.shape
    D = h_sc.shape[1]
    N = enc_ref.shape[1]
    Npad = alpha_ref.shape[2]
    Vp = Wfc_ref.shape[1]

    # Seed the carried LSTM state once per batch block (h0/c0 hoisted to XLA).
    @pl.when(t_blk == 0)
    def _init():
        h_sc[...] = h0_ref[...]
        c_sc[...] = c0_ref[...]

    # -------- loop-invariant loads / casts (hoisted out of the time loop) -----
    enc_f = enc_ref[...].astype(jnp.float32)       # (tb, N, E)
    # TODO(synk): for very large tb*N*E tiles, chunk the weighted-sum over N
    # instead of materializing the full f32 copy (vreg/VMEM pressure).
    att1 = att1_ref[...].astype(jnp.float32)       # (tb, N, A) — enc/dec biases folded
    dl = dl_ref[...]                               # (tb, 1) int32 decode lengths
    wful = wful_ref[...].reshape(1, 1, -1)         # (1, 1, A) f32 row vector
    Wdec = Wdec_ref[...]
    Wwh = Wwh_ref[...]                             # (E+D, 4D) fused recurrent gates
    Wfc = Wfc_ref[...]                             # (D, Vp)
    bfc = bfc_ref[...]                             # (1, Vp)
    cd = Wdec.dtype                                # matmul input dtype (f32 / bf16)

    # -------- batched non-recurrent matmul #1: embedding half of the gates ----
    # (time_block*tb, EMB) @ (EMB, 4D); gate bias added once here.
    emb2 = emb_ref[...].reshape(time_block * tb, EMB).astype(cd)
    gate_x = jnp.dot(emb2, Wxe_ref[...],
                     preferred_element_type=jnp.float32) + bg_ref[...]

    t0 = t_blk * time_block
    h_list, a_list, m_list = [], [], []
    for i in range(time_block):                    # unrolled short inner loop
        h = h_sc[...]                              # (tb, D) f32
        c = c_sc[...]

        # ---- attention: only the h-dependent half is recomputed per step ----
        att2 = jnp.dot(h.astype(cd), Wdec,
                       preferred_element_type=jnp.float32)              # (tb, A)
        act = jnp.maximum(att1 + att2[:, None, :], 0.0)                 # (tb, N, A)
        # width-1 ful_attn "matmul" -> VPU multiply + cross-lane reduce (XLU).
        # (ful_attn bias omitted: softmax is shift-invariant.)
        att = jnp.sum(act * wful, axis=-1)                              # (tb, N)
        att_max = jnp.max(att, axis=-1, keepdims=True)
        e = jnp.exp(att - att_max)
        alpha = e * pl.reciprocal(jnp.sum(e, axis=-1, keepdims=True),
                                  approx=approx_recip)                  # (tb, N)
        weighted = jnp.sum(enc_f * alpha[:, :, None], axis=1)           # (tb, E)

        # ---- LSTMCell: precomputed emb gates + recurrent [weighted|h] matmul --
        wh = jnp.concatenate([weighted, h], axis=-1).astype(cd)         # K = E+D
        gates = (gate_x[i * tb:(i + 1) * tb, :]
                 + jnp.dot(wh, Wwh, preferred_element_type=jnp.float32))  # (tb, 4D)
        i_g = jax.nn.sigmoid(gates[:, 0:D])
        f_g = jax.nn.sigmoid(gates[:, D:2 * D])
        g_g = jnp.tanh(gates[:, 2 * D:3 * D])
        o_g = jax.nn.sigmoid(gates[:, 3 * D:4 * D])
        c = f_g * c + i_g * g_g
        h = o_g * jnp.tanh(c)
        h_sc[...] = h
        c_sc[...] = c

        h_list.append(h)
        a_list.append(alpha[None])                                      # (1, tb, N)
        m_list.append((dl > (t0 + i)).astype(jnp.float32))              # (tb, 1)

    # -------- batched non-recurrent matmul #2: vocab projection over the block
    H = jnp.concatenate(h_list, axis=0)                    # (time_block*tb, D)
    valid2 = jnp.concatenate(m_list, axis=0)               # (time_block*tb, 1)
    preds = jnp.dot(H.astype(cd), Wfc,
                    preferred_element_type=jnp.float32) + bfc
    preds = preds * valid2                                 # rows past batch_size_t -> 0
    pred_ref[...] = preds.reshape(time_block, tb, Vp).astype(pred_ref.dtype)

    # single lane-dense alpha slab (padded to Npad lanes, invalid rows -> 0)
    alpha3 = jnp.concatenate(a_list, axis=0)               # (time_block, tb, N)
    if Npad > N:
        alpha3 = jnp.concatenate(
            [alpha3, jnp.zeros((time_block, tb, Npad - N), jnp.float32)], axis=-1)
    alpha_ref[...] = (alpha3 * valid2.reshape(time_block, tb, 1)
                      ).astype(alpha_ref.dtype)


# ----------------------------- VMEM budgeting ------------------------------- #
def _vmem_limit_bytes(tb, time_block, N, E, A, D, EMB, Vp, Npad, cd, od, buffered):
    f32 = jnp.float32
    streamed = (_blk_bytes((tb, 1), jnp.int32)
                + 2 * _blk_bytes((tb, D), f32)
                + _blk_bytes((tb, N, E), cd)
                + _blk_bytes((tb, N, A), cd)
                + _blk_bytes((time_block, tb, EMB), cd))
    weights = (_blk_bytes((D, A), cd) + _blk_bytes((1, A), f32)
               + _blk_bytes((EMB, 4 * D), cd) + _blk_bytes((E + D, 4 * D), cd)
               + _blk_bytes((1, 4 * D), f32)
               + _blk_bytes((D, Vp), cd) + _blk_bytes((1, Vp), f32))
    outputs = (_blk_bytes((time_block, tb, Vp), od)
               + _blk_bytes((time_block, tb, Npad), od))
    scratch = 2 * _blk_bytes((tb, D), f32)
    temps = (_blk_bytes((time_block * tb, 4 * D), f32)     # gate_x
             + _blk_bytes((time_block * tb, Vp), f32)       # batched vocab proj
             + _blk_bytes((tb, N, A), f32)                  # relu activations
             + _blk_bytes((tb, N, E), f32)                  # enc in f32
             + _blk_bytes((time_block, tb, Npad), f32))     # alpha slab
    wmult = 1 if buffered else 2
    total = 2 * streamed + wmult * weights + 2 * outputs + scratch + temps
    return int(min(max(int(1.5 * total) + (8 << 20), 32 << 20), 112 << 20))


# ------------------------------ Python wrapper ------------------------------ #
def decoder_forward(params, encoder_out, encoded_captions, caption_length,
                    *, time_block=8, batch_block=None,
                    compute_dtype=jnp.float32, out_dtype=jnp.float32,
                    single_buffer_weights=True, approx_recip=False):
    B, N, E = encoder_out.shape
    A = params['Wenc'].shape[1]
    D = params['Whh'].shape[0]
    V = params['Wfc'].shape[1]
    EMB = params['Wxe'].shape[0]
    G = 4 * D

    # ---- sort by caption length, descending (torch .sort(descending=True)) ----
    sort_index = jnp.argsort(-caption_length)
    caption_length_s = caption_length[sort_index]
    encoder_out_s = encoder_out[sort_index]
    encoded_captions_s = encoded_captions[sort_index]
    decode_lengths = caption_length_s - 1

    # max(decode_lengths) is the static trip count for the grid.
    # TODO(synk): this forces a host sync on a data-dependent value, so the
    # wrapper is not jittable end-to-end (the pallas_call itself is compiled).
    T = int(np.max(np.asarray(decode_lengths)))
    assert T >= 1
    T_pad = _round_up(T, time_block)

    # ---- pad batch to a sublane multiple so reshapes/concats stay aligned ----
    B_pad = max(8, _round_up(B, 8))
    dl_full = decode_lengths.astype(jnp.int32)
    if B_pad != B:
        pad = B_pad - B
        encoder_out_p = jnp.pad(encoder_out_s, ((0, pad), (0, 0), (0, 0)))
        encoded_captions_p = jnp.pad(encoded_captions_s, ((0, pad), (0, 0)))
        dl_full = jnp.pad(dl_full, ((0, pad),))       # dl=0 -> padded rows masked
    else:
        encoder_out_p = encoder_out_s
        encoded_captions_p = encoded_captions_s
    tb = _pick_batch_block(B_pad, batch_block)

    hp = jax.lax.Precision.HIGHEST
    # ---- hoisted, time-invariant work (plain XLA, computed exactly once) ----
    # encoder half of the attention, with BOTH attention biases folded in.
    att1_pre = (jnp.einsum('bne,ea->bna', encoder_out_p, params['Wenc'],
                           precision=hp)
                + params['benc'] + params['bdec'])                 # (B_pad, N, A)
    # torch init_hidden_state uses .sum(dim=1) (despite the "mean" name)
    sum_enc = jnp.sum(encoder_out_p, axis=1)
    h0 = jnp.dot(sum_enc, params['Wih'], precision=hp) + params['bih']   # (B_pad, D)
    c0 = jnp.dot(sum_enc, params['Wic'], precision=hp) + params['bic']   # (B_pad, D)
    # recurrent half of the fused LSTMCell gates: [weighted | h] @ [Wxw; Whh]
    Wwh = jnp.concatenate([params['Wxw'], params['Whh']], axis=0)        # (E+D, 4D)
    bg = params['bx'] + params['bhh']                                    # (1, 4D)

    # lane-dense outputs: zero-pad vocab / numstamps to multiples of 128
    Vp = max(128, _round_up(V, 128))
    Npad = max(128, _round_up(N, 128))
    Wfc = jnp.pad(params['Wfc'], ((0, 0), (0, Vp - V)))
    bfc = jnp.pad(params['bfc'], ((0, 0), (0, Vp - V)))

    embeddings = jnp.take(params['emb_table'], encoded_captions_p, axis=0)  # (B_pad, L, EMB)
    emb_tmajor = jnp.transpose(embeddings, (1, 0, 2))[:T]                   # (T, B_pad, EMB)
    emb_tmajor = jnp.pad(emb_tmajor, ((0, T_pad - T), (0, 0), (0, 0)))      # (T_pad, B_pad, EMB)
    dl = dl_full.reshape(B_pad, 1)

    cd = compute_dtype
    args = (dl,
            h0.astype(jnp.float32), c0.astype(jnp.float32),
            encoder_out_p.astype(cd), att1_pre.astype(cd), emb_tmajor.astype(cd),
            params['Wdec'].astype(cd), params['wful'].reshape(1, A),
            params['Wxe'].astype(cd), Wwh.astype(cd), bg,
            Wfc.astype(cd), bfc)

    buffered = bool(single_buffer_weights) and _buffered_one_supported()

    def wspec(shape):
        # true grid-constant weights: single-buffer when supported
        if buffered:
            return pl.BlockSpec(shape, lambda b, t: (0, 0),
                                pipeline_mode=pl.Buffered(1))
        return pl.BlockSpec(shape, lambda b, t: (0, 0))

    in_specs = [
        pl.BlockSpec((tb, 1), lambda b, t: (b, 0)),           # decode lengths
        pl.BlockSpec((tb, D), lambda b, t: (b, 0)),           # h0
        pl.BlockSpec((tb, D), lambda b, t: (b, 0)),           # c0
        pl.BlockSpec((tb, N, E), lambda b, t: (b, 0, 0)),     # encoder_out
        pl.BlockSpec((tb, N, A), lambda b, t: (b, 0, 0)),     # hoisted att1 (+biases)
        pl.BlockSpec((time_block, tb, EMB), lambda b, t: (t, b, 0)),  # embeddings
        wspec((D, A)),        # Wdec
        wspec((1, A)),        # wful
        wspec((EMB, G)),      # Wxe (embedding half of gates)
        wspec((E + D, G)),    # Wwh (recurrent half [Wxw; Whh])
        wspec((1, G)),        # bg
        wspec((D, Vp)),       # Wfc
        wspec((1, Vp)),       # bfc
    ]
    out_specs = [
        pl.BlockSpec((time_block, tb, Vp), lambda b, t: (t, b, 0)),
        pl.BlockSpec((time_block, tb, Npad), lambda b, t: (t, b, 0)),
    ]
    out_shape = (jax.ShapeDtypeStruct((T_pad, B_pad, Vp), out_dtype),
                 jax.ShapeDtypeStruct((T_pad, B_pad, Npad), out_dtype))

    vmem_limit = _vmem_limit_bytes(tb, time_block, N, E, A, D, EMB, Vp, Npad,
                                   cd, out_dtype, buffered)

    kernel = functools.partial(_decoder_kernel, approx_recip=approx_recip)
    preds_t, alphas_t = pl.pallas_call(
        kernel,
        out_shape=out_shape,
        grid_spec=pltpu.PrefetchScalarGridSpec(
            num_scalar_prefetch=0,
            grid=(B_pad // tb, T_pad // time_block),   # batch outer, time inner
            in_specs=in_specs,
            out_specs=out_specs,
            scratch_shapes=[pltpu.VMEM((tb, D), jnp.float32),    # h carry
                            pltpu.VMEM((tb, D), jnp.float32)]),  # c carry
        compiler_params=pltpu.CompilerParams(
            dimension_semantics=("parallel", "arbitrary"),       # batch ||, time seq
            vmem_limit_bytes=vmem_limit),
    )(*args)

    predictions = jnp.transpose(preds_t[:T, :B, :V], (1, 0, 2))      # (B, T, V)
    alphas = jnp.transpose(alphas_t[:T, :B, :N], (1, 0, 2))          # (B, T, N)
    return predictions, encoded_captions_s, decode_lengths, alphas, sort_index


# --------------------------- deterministic params --------------------------- #
def make_params(key, E, D, A, EMB, V):
    ks = jax.random.split(key, 18)
    lin = lambda k, shape: 0.1 * jax.random.normal(k, shape, dtype=jnp.float32)
    # TODO(synk): f_beta + sigmoid gate exist in __init__ but are unused in forward; omitted.
    return {
        'Wenc': lin(ks[0], (E, A)), 'benc': lin(ks[1], (1, A)),
        'Wdec': lin(ks[2], (D, A)), 'bdec': lin(ks[3], (1, A)),
        'wful': lin(ks[4], (A, 1)), 'bful': lin(ks[5], (1, 1)),
        'emb_table': lin(ks[6], (V, EMB)),
        'Wih': lin(ks[7], (E, D)), 'bih': lin(ks[8], (1, D)),
        'Wic': lin(ks[9], (E, D)), 'bic': lin(ks[10], (1, D)),
        'Wxe': lin(ks[11], (EMB, 4 * D)), 'Wxw': lin(ks[12], (E, 4 * D)),
        'bx': lin(ks[13], (1, 4 * D)),
        'Whh': lin(ks[14], (D, 4 * D)), 'bhh': lin(ks[15], (1, 4 * D)),
        'Wfc': lin(ks[16], (D, V)), 'bfc': lin(ks[17], (1, V)),
    }


# ------------------------- pure-JAX reference check ------------------------- #
def reference_forward(params, encoder_out, encoded_captions, caption_length):
    hp = jax.lax.Precision.HIGHEST
    sort_index = jnp.argsort(-caption_length)
    caption_length = caption_length[sort_index]
    encoder_out = encoder_out[sort_index]
    encoded_captions = encoded_captions[sort_index]
    embeddings = params['emb_table'][encoded_captions]
    decode_lengths = caption_length - 1
    T = int(np.max(np.asarray(decode_lengths)))
    B, N, E = encoder_out.shape
    D = params['Whh'].shape[0]
    V = params['Wfc'].shape[1]

    sum_enc = encoder_out.sum(axis=1)
    h = jnp.dot(sum_enc, params['Wih'], precision=hp) + params['bih']
    c = jnp.dot(sum_enc, params['Wic'], precision=hp) + params['bic']
    preds_all = jnp.zeros((B, T, V), jnp.float32)
    alphas_all = jnp.zeros((B, T, N), jnp.float32)
    att1 = jnp.einsum('bne,ea->bna', encoder_out, params['Wenc'],
                      precision=hp) + params['benc']
    for t in range(T):
        valid = (decode_lengths > t)[:, None]
        att2 = jnp.dot(h, params['Wdec'], precision=hp) + params['bdec']
        act = jnp.maximum(att1 + att2[:, None, :], 0.0)
        att = jnp.einsum('bna,ao->bn', act, params['wful'],
                         precision=hp) + params['bful'][0, 0]
        alpha = jax.nn.softmax(att, axis=1)
        weighted = (encoder_out * alpha[:, :, None]).sum(axis=1)
        gates = (jnp.dot(embeddings[:, t, :], params['Wxe'], precision=hp)
                 + jnp.dot(weighted, params['Wxw'], precision=hp) + params['bx']
                 + jnp.dot(h, params['Whh'], precision=hp) + params['bhh'])
        i_g = jax.nn.sigmoid(gates[:, 0:D])
        f_g = jax.nn.sigmoid(gates[:, D:2 * D])
        g_g = jnp.tanh(gates[:, 2 * D:3 * D])
        o_g = jax.nn.sigmoid(gates[:, 3 * D:4 * D])
        c = f_g * c + i_g * g_g
        h = o_g * jnp.tanh(c)
        p = jnp.dot(h, params['Wfc'], precision=hp) + params['bfc']
        preds_all = preds_all.at[:, t, :].set(jnp.where(valid, p, 0.0))
        alphas_all = alphas_all.at[:, t, :].set(jnp.where(valid, alpha, 0.0))
    return preds_all, encoded_captions, decode_lengths, alphas_all, sort_index


if __name__ == "__main__":
    B, N, E, D, A, EMB, V, L = 16, 16, 64, 64, 32, 32, 100, 8
    key = jax.random.PRNGKey(0)
    k_enc, k_cap, k_par, k_len = jax.random.split(key, 4)

    encoder_out = jax.random.normal(k_enc, (B, N, E), dtype=jnp.float32)
    encoded_captions = jax.random.randint(k_cap, (B, L), 0, V, dtype=jnp.int32)
    caption_length = jax.random.randint(k_len, (B,), 2, L + 1, dtype=jnp.int32)
    params = make_params(k_par, E, D, A, EMB, V)

    ref_preds, _, _, ref_alphas, _ = reference_forward(
        params, encoder_out, encoded_captions, caption_length)

    # config 1: multi batch-block + multi time-block grid, f32 compute
    preds, caps_sorted, dec_lens, alphas, sort_index = decoder_forward(
        params, encoder_out, encoded_captions, caption_length,
        time_block=2, batch_block=8)
    jax.block_until_ready((preds, alphas, caps_sorted, dec_lens, sort_index))
    np.testing.assert_allclose(np.asarray(preds), np.asarray(ref_preds),
                               rtol=2e-3, atol=2e-3)
    np.testing.assert_allclose(np.asarray(alphas), np.asarray(ref_alphas),
                               rtol=2e-3, atol=2e-3)

    # config 2: default tiling (larger time block, auto batch tile), f32 compute
    preds2, _, _, alphas2, _ = decoder_forward(
        params, encoder_out, encoded_captions, caption_length)
    jax.block_until_ready((preds2, alphas2))
    np.testing.assert_allclose(np.asarray(preds2), np.asarray(ref_preds),
                               rtol=2e-3, atol=2e-3)
    np.testing.assert_allclose(np.asarray(alphas2), np.asarray(ref_alphas),
                               rtol=2e-3, atol=2e-3)

    # config 3: bf16 weights / streamed activations (f32 accumulation), looser tol
    preds_bf, _, _, alphas_bf, _ = decoder_forward(
        params, encoder_out, encoded_captions, caption_length,
        time_block=4, batch_block=8, compute_dtype=jnp.bfloat16)
    jax.block_until_ready((preds_bf, alphas_bf))
    np.testing.assert_allclose(np.asarray(preds_bf), np.asarray(ref_preds),
                               rtol=5e-2, atol=5e-2)
    np.testing.assert_allclose(np.asarray(alphas_bf), np.asarray(ref_alphas),
                               rtol=5e-2, atol=5e-2)

    print("KERNEL_OK")
</pallas_src>

<mosaic_0001>
module attributes {stable_mosaic.version = 11 : i64} {
  func.func @_probe(%arg0: i32, %arg1: memref<8x128xf32, #tpu.memory_space<vmem>>, %arg2: memref<8x128xf32, #tpu.memory_space<vmem>>, %arg3: memref<8x128xf32, #tpu.memory_space<vmem>>) attributes {dimension_semantics = [#tpu.dimension_semantics<arbitrary>], iteration_bounds = array<i64: 2>, scalar_prefetch = 0 : i64, scratch_operands = 0 : i64, tpu.core_type = #tpu.core_type<tc>, window_params = [{pipeline_mode = #tpu.pipeline_mode<synchronous>, transform_indices = @transform_0, window_bounds = array<i64: 8, 128>}, {pipeline_mode = #tpu.pipeline_mode<synchronous>, transform_indices = @transform_1, window_bounds = array<i64: 8, 128>}, {pipeline_mode = #tpu.pipeline_mode<synchronous>, transform_indices = @transform_2, window_bounds = array<i64: 8, 128>}]} {
    %c0 = arith.constant 0 : index
    %c0_0 = arith.constant 0 : index
    %0 = vector.load %arg1[%c0, %c0_0] : memref<8x128xf32, #tpu.memory_space<vmem>>, vector<8x128xf32>
    %c0_1 = arith.constant 0 : index
    %c0_2 = arith.constant 0 : index
    %1 = vector.load %arg2[%c0_1, %c0_2] : memref<8x128xf32, #tpu.memory_space<vmem>>, vector<8x128xf32>
    %2 = arith.addf %0, %1 : vector<8x128xf32>
    %c0_3 = arith.constant 0 : index
    %c0_4 = arith.constant 0 : index
    %3 = vector.load %arg3[%c0_3, %c0_4] : memref<8x128xf32, #tpu.memory_space<vmem>>, vector<8x128xf32>
    tpu.vector_store %arg3[%c0_3, %c0_4], %2 {strides = array<i32>} : memref<8x128xf32, #tpu.memory_space<vmem>>, vector<8x128xf32>,
    return
  }
  func.func @transform_0(%arg0: i32) -> (i32, i32) {
    %c0_i32 = arith.constant 0 : i32
    %c0_i32_0 = arith.constant 0 : i32
    %c0_i32_1 = arith.constant 0 : i32
    return %c0_i32, %c0_i32_0 : i32, i32
  }
  func.func @transform_1(%arg0: i32) -> (i32, i32) {
    %c0_i32 = arith.constant 0 : i32
    %c0_i32_0 = arith.constant 0 : i32
    %c0_i32_1 = arith.constant 0 : i32
    return %c0_i32, %c0_i32_0 : i32, i32
  }
  func.func @transform_2(%arg0: i32) -> (i32, i32) {
    %c0_i32 = arith.constant 0 : i32
    %c0_i32_0 = arith.constant 0 : i32
    %c0_i32_1 = arith.constant 0 : i32
    return %c0_i32, %c0_i32_0 : i32, i32
  }
}

module attributes {stable_mosaic.version = 11 : i64} {
  func.func @_decoder_kernel(%arg0: i32, %arg1: i32, %arg2: memref<8x1xi32, #tpu.memory_space<vmem>>, %arg3: memref<8x64xf32, #tpu.memory_space<vmem>>, %arg4: memref<8x64xf32, #tpu.memory_space<vmem>>, %arg5: memref<8x16x64xf32, #tpu.memory_space<vmem>>, %arg6: memref<8x16x32xf32, #tpu.memory_space<vmem>>, %arg7: memref<2x8x32xf32, #tpu.memory_space<vmem>>, %arg8: memref<64x32xf32, #tpu.memory_space<vmem>>, %arg9: memref<1x32xf32, #tpu.memory_space<vmem>>, %arg10: memref<32x256xf32, #tpu.memory_space<vmem>>, %arg11: memref<128x256xf32, #tpu.memory_space<vmem>>, %arg12: memref<1x256xf32, #tpu.memory_space<vmem>>, %arg13: memref<64x128xf32, #tpu.memory_space<vmem>>, %arg14: memref<1x128xf32, #tpu.memory_space<vmem>>, %arg15: memref<2x8x128xf32, #tpu.memory_space<vmem>>, %arg16: memref<2x8x128xf32, #tpu.memory_space<vmem>>, %arg17: memref<8x64xf32, #tpu.memory_space<vmem>>, %arg18: memref<8x64xf32, #tpu.memory_space<vmem>>) attributes {dimension_semantics = [#tpu.dimension_semantics<parallel>, #tpu.dimension_semantics<arbitrary>], iteration_bounds = array<i64: 2, 4>, scalar_prefetch = 0 : i64, scratch_operands = 2 : i64, tpu.core_type = #tpu.core_type<tc>, window_params = [{transform_indices = @transform_0, window_bounds = array<i64: 8, 1>}, {transform_indices = @transform_1, window_bounds = array<i64: 8, 64>}, {transform_indices = @transform_2, window_bounds = array<i64: 8, 64>}, {transform_indices = @transform_3, window_bounds = array<i64: 8, 16, 64>}, {transform_indices = @transform_4, window_bounds = array<i64: 8, 16, 32>}, {transform_indices = @transform_5, window_bounds = array<i64: 2, 8, 32>}, {pipeline_mode = #tpu.pipeline_mode<synchronous>, transform_indices = @transform_6, window_bounds = array<i64: 64, 32>}, {pipeline_mode = #tpu.pipeline_mode<synchronous>, transform_indices = @transform_7, window_bounds = array<i64: 1, 32>}, {pipeline_mode = #tpu.pipeline_mode<synchronous>, transform_indices = @transform_8, window_bounds = array<i64: 32, 256>}, {pipeline_mode = #tpu.pipeline_mode<synchronous>, transform_indices = @transform_9, window_bounds = array<i64: 128, 256>}, {pipeline_mode = #tpu.pipeline_mode<synchronous>, transform_indices = @transform_10, window_bounds = array<i64: 1, 256>}, {pipeline_mode = #tpu.pipeline_mode<synchronous>, transform_indices = @transform_11, window_bounds = array<i64: 64, 128>}, {pipeline_mode = #tpu.pipeline_mode<synchronous>, transform_indices = @transform_12, window_bounds = array<i64: 1, 128>}, {transform_indices = @transform_13, window_bounds = array<i64: 2, 8, 128>}, {transform_indices = @transform_14, window_bounds = array<i64: 2, 8, 128>}]} {
    %c0_i32 = arith.constant 0 : i32
    %0 = arith.cmpi eq, %arg1, %c0_i32 : i32
    %1 = arith.extui %0 : i1 to i32
    %c0_i32_0 = arith.constant 0 : i32
    %2 = arith.cmpi ne, %1, %c0_i32_0 : i32
    scf.if %2 {
      %c0_70 = arith.constant 0 : index
      %c0_71 = arith.constant 0 : index
      %160 = vector.load %arg3[%c0_70, %c0_71] : memref<8x64xf32, #tpu.memory_space<vmem>>, vector<8x64xf32>
      %c0_72 = arith.constant 0 : index
      %c0_73 = arith.constant 0 : index
      %161 = vector.load %arg17[%c0_72, %c0_73] : memref<8x64xf32, #tpu.memory_space<vmem>>, vector<8x64xf32>
      tpu.vector_store %arg17[%c0_72, %c0_73], %160 {strides = array<i32>} : memref<8x64xf32, #tpu.memory_space<vmem>>, vector<8x64xf32>,
      %c0_74 = arith.constant 0 : index
      %c0_75 = arith.constant 0 : index
      %162 = vector.load %arg4[%c0_74, %c0_75] : memref<8x64xf32, #tpu.memory_space<vmem>>, vector<8x64xf32>
      %c0_76 = arith.constant 0 : index
      %c0_77 = arith.constant 0 : index
      %163 = vector.load %arg18[%c0_76, %c0_77] : memref<8x64xf32, #tpu.memory_space<vmem>>, vector<8x64xf32>
      tpu.vector_store %arg18[%c0_76, %c0_77], %162 {strides = array<i32>} : memref<8x64xf32, #tpu.memory_space<vmem>>, vector<8x64xf32>,
    } else {
    }
    %c0 = arith.constant 0 : index
    %c0_1 = arith.constant 0 : index
    %c0_2 = arith.constant 0 : index
    %3 = vector.load %arg5[%c0, %c0_1, %c0_2] : memref<8x16x64xf32, #tpu.memory_space<vmem>>, vector<8x16x64xf32>
    %c0_3 = arith.constant 0 : index
    %c0_4 = arith.constant 0 : index
    %c0_5 = arith.constant 0 : index
    %4 = vector.load %arg6[%c0_3, %c0_4, %c0_5] : memref<8x16x32xf32, #tpu.memory_space<vmem>>, vector<8x16x32xf32>
    %c0_6 = arith.constant 0 : index
    %c0_7 = arith.constant 0 : index
    %5 = vector.load %arg2[%c0_6, %c0_7] : memref<8x1xi32, #tpu.memory_space<vmem>>, vector<8x1xi32>
    %c0_8 = arith.constant 0 : index
    %c0_9 = arith.constant 0 : index
    %6 = vector.load %arg9[%c0_8, %c0_9] : memref<1x32xf32, #tpu.memory_space<vmem>>, vector<1x32xf32>
    %7 = vector.shape_cast %6 : vector<1x32xf32> to vector<1x1x32xf32>
    %c0_10 = arith.constant 0 : index
    %c0_11 = arith.constant 0 : index
    %8 = vector.load %arg8[%c0_10, %c0_11] : memref<64x32xf32, #tpu.memory_space<vmem>>, vector<64x32xf32>
    %c0_12 = arith.constant 0 : index
    %c0_13 = arith.constant 0 : index
    %9 = vector.load %arg11[%c0_12, %c0_13] : memref<128x256xf32, #tpu.memory_space<vmem>>, vector<128x256xf32>
    %c0_14 = arith.constant 0 : index
    %c0_15 = arith.constant 0 : index
    %10 = vector.load %arg13[%c0_14, %c0_15] : memref<64x128xf32, #tpu.memory_space<vmem>>, vector<64x128xf32>
    %c0_16 = arith.constant 0 : index
    %c0_17 = arith.constant 0 : index
    %11 = vector.load %arg14[%c0_16, %c0_17] : memref<1x128xf32, #tpu.memory_space<vmem>>, vector<1x128xf32>
    %c0_18 = arith.constant 0 : index
    %c0_19 = arith.constant 0 : index
    %c0_20 = arith.constant 0 : index
    %12 = vector.load %arg7[%c0_18, %c0_19, %c0_20] : memref<2x8x32xf32, #tpu.memory_space<vmem>>, vector<2x8x32xf32>
    %13 = vector.shape_cast %12 : vector<2x8x32xf32> to vector<16x32xf32>
    %c0_21 = arith.constant 0 : index
    %c0_22 = arith.constant 0 : index
    %14 = vector.load %arg10[%c0_21, %c0_22] : memref<32x256xf32, #tpu.memory_space<vmem>>, vector<32x256xf32>
    %cst = arith.constant dense<0.000000e+00> : vector<16x256xf32>
    %15 = tpu.matmul %13, %14, %cst {dimension_numbers = #tpu.dot_dimension_numbers<[1], [0], [0], [1], [0, 0, 1, 1], [], []>} : vector<16x32xf32>, vector<32x256xf32>, vector<16x256xf32> -> vector<16x256xf32>
    %c0_23 = arith.constant 0 : index
    %c0_24 = arith.constant 0 : index
    %16 = vector.load %arg12[%c0_23, %c0_24] : memref<1x256xf32, #tpu.memory_space<vmem>>, vector<1x256xf32>
    %17 = vector.broadcast %16 : vector<1x256xf32> to vector<16x256xf32>
    %18 = arith.addf %15, %17 : vector<16x256xf32>
    %c2_i32 = arith.constant 2 : i32
    %19 = arith.muli %arg1, %c2_i32 : i32
    %c0_25 = arith.constant 0 : index
    %c0_26 = arith.constant 0 : index
    %20 = vector.load %arg17[%c0_25, %c0_26] : memref<8x64xf32, #tpu.memory_space<vmem>>, vector<8x64xf32>
    %c0_27 = arith.constant 0 : index
    %c0_28 = arith.constant 0 : index
    %21 = vector.load %arg18[%c0_27, %c0_28] : memref<8x64xf32, #tpu.memory_space<vmem>>, vector<8x64xf32>
    %cst_29 = arith.constant dense<0.000000e+00> : vector<8x32xf32>
    %22 = tpu.matmul %20, %8, %cst_29 {dimension_numbers = #tpu.dot_dimension_numbers<[1], [0], [0], [1], [0, 0, 1, 1], [], []>} : vector<8x64xf32>, vector<64x32xf32>, vector<8x32xf32> -> vector<8x32xf32>
    %23 = vector.shape_cast %22 : vector<8x32xf32> to vector<8x1x32xf32>
    %24 = vector.broadcast %23 : vector<8x1x32xf32> to vector<8x16x32xf32>
    %25 = arith.addf %4, %24 : vector<8x16x32xf32>
    %cst_30 = arith.constant 0.000000e+00 : f32
    %26 = vector.broadcast %cst_30 : f32 to vector<8x16x32xf32>
    %27 = arith.maximumf %25, %26 : vector<8x16x32xf32>
    %28 = vector.broadcast %7 : vector<1x1x32xf32> to vector<8x16x32xf32>
    %29 = arith.mulf %27, %28 : vector<8x16x32xf32>
    %cst_31 = arith.constant dense<0.000000e+00> : vector<8x16xf32>
    %30 = vector.multi_reduction <add>, %29, %cst_31 [2] : vector<8x16x32xf32> to vector<8x16xf32>
    %cst_32 = arith.constant dense<0xFF800000> : vector<8xf32>
    %31 = vector.multi_reduction <maximumf>, %30, %cst_32 [1] : vector<8x16xf32> to vector<8xf32>
    %32 = vector.shape_cast %31 : vector<8xf32> to vector<8x1xf32>
    %33 = vector.broadcast %32 : vector<8x1xf32> to vector<8x16xf32>
    %34 = arith.subf %30, %33 : vector<8x16xf32>
    %35 = math.exp %34 : vector<8x16xf32>
    %cst_33 = arith.constant dense<0.000000e+00> : vector<8xf32>
    %36 = vector.multi_reduction <add>, %35, %cst_33 [1] : vector<8x16xf32> to vector<8xf32>
    %37 = vector.shape_cast %36 : vector<8xf32> to vector<8x1xf32>
    %38 = tpu.reciprocal %37 : vector<8x1xf32> -> vector<8x1xf32>
    %39 = vector.broadcast %38 : vector<8x1xf32> to vector<8x16xf32>
    %40 = arith.mulf %35, %39 : vector<8x16xf32>
    %41 = vector.shape_cast %40 : vector<8x16xf32> to vector<8x16x1xf32>
    %42 = vector.broadcast %41 : vector<8x16x1xf32> to vector<8x16x64xf32>
    %43 = arith.mulf %3, %42 : vector<8x16x64xf32>
    %cst_34 = arith.constant dense<0.000000e+00> : vector<8x64xf32>
    %44 = vector.multi_reduction <add>, %43, %cst_34 [1] : vector<8x16x64xf32> to vector<8x64xf32>
    %45 = tpu.concatenate %44, %20 in 1 : vector<8x64xf32>, vector<8x64xf32> -> vector<8x128xf32>
    %46 = vector.extract_strided_slice %18 {offsets = [0, 0], sizes = [8, 256], strides = [1, 1]} : vector<16x256xf32> to vector<8x256xf32>
    %cst_35 = arith.constant dense<0.000000e+00> : vector<8x256xf32>
    %47 = tpu.matmul %45, %9, %cst_35 {dimension_numbers = #tpu.dot_dimension_numbers<[1], [0], [0], [1], [0, 0, 1, 1], [], []>} : vector<8x128xf32>, vector<128x256xf32>, vector<8x256xf32> -> vector<8x256xf32>
    %48 = arith.addf %46, %47 : vector<8x256xf32>
    %49 = vector.extract_strided_slice %48 {offsets = [0, 0], sizes = [8, 64], strides = [1, 1]} : vector<8x256xf32> to vector<8x64xf32>
    %50 = arith.negf %49 : vector<8x64xf32>
    %51 = math.exp %50 : vector<8x64xf32>
    %cst_36 = arith.constant 1.000000e+00 : f32
    %52 = vector.broadcast %cst_36 : f32 to vector<8x64xf32>
    %53 = arith.addf %52, %51 : vector<8x64xf32>
    %54 = arith.divf %52, %53 : vector<8x64xf32>
    %55 = vector.extract_strided_slice %48 {offsets = [0, 64], sizes = [8, 64], strides = [1, 1]} : vector<8x256xf32> to vector<8x64xf32>
    %56 = arith.negf %55 : vector<8x64xf32>
    %57 = math.exp %56 : vector<8x64xf32>
    %cst_37 = arith.constant 1.000000e+00 : f32
    %58 = vector.broadcast %cst_37 : f32 to vector<8x64xf32>
    %59 = arith.addf %58, %57 : vector<8x64xf32>
    %60 = arith.divf %58, %59 : vector<8x64xf32>
    %61 = vector.extract_strided_slice %48 {offsets = [0, 128], sizes = [8, 64], strides = [1, 1]} : vector<8x256xf32> to vector<8x64xf32>
    %62 = math.tanh %61 : vector<8x64xf32>
    %63 = vector.extract_strided_slice %48 {offsets = [0, 192], sizes = [8, 64], strides = [1, 1]} : vector<8x256xf32> to vector<8x64xf32>
    %64 = arith.negf %63 : vector<8x64xf32>
    %65 = math.exp %64 : vector<8x64xf32>
    %cst_38 = arith.constant 1.000000e+00 : f32
    %66 = vector.broadcast %cst_38 : f32 to vector<8x64xf32>
    %67 = arith.addf %66, %65 : vector<8x64xf32>
    %68 = arith.divf %66, %67 : vector<8x64xf32>
    %69 = arith.mulf %60, %21 : vector<8x64xf32>
    %70 = arith.mulf %54, %62 : vector<8x64xf32>
    %71 = arith.addf %69, %70 : vector<8x64xf32>
    %72 = math.tanh %71 : vector<8x64xf32>
    %73 = arith.mulf %68, %72 : vector<8x64xf32>
    %c0_39 = arith.constant 0 : index
    %c0_40 = arith.constant 0 : index
    %74 = vector.load %arg17[%c0_39, %c0_40] : memref<8x64xf32, #tpu.memory_space<vmem>>, vector<8x64xf32>
    tpu.vector_store %arg17[%c0_39, %c0_40], %73 {strides = array<i32>} : memref<8x64xf32, #tpu.memory_space<vmem>>, vector<8x64xf32>,
    %c0_41 = arith.constant 0 : index
    %c0_42 = arith.constant 0 : index
    %75 = vector.load %arg18[%c0_41, %c0_42] : memref<8x64xf32, #tpu.memory_space<vmem>>, vector<8x64xf32>
    tpu.vector_store %arg18[%c0_41, %c0_42], %71 {strides = array<i32>} : memref<8x64xf32, #tpu.memory_space<vmem>>, vector<8x64xf32>,
    %76 = vector.shape_cast %40 : vector<8x16xf32> to vector<1x8x16xf32>
    %c0_i32_43 = arith.constant 0 : i32
    %77 = arith.addi %19, %c0_i32_43 : i32
    %78 = vector.broadcast %77 : i32 to vector<8x1xi32>
    %79 = arith.cmpi sgt, %5, %78 : vector<8x1xi32>
    %80 = arith.extui %79 : vector<8x1xi1> to vector<8x1xi32>
    %81 = arith.sitofp %80 : vector<8x1xi32> to vector<8x1xf32>
    %c0_44 = arith.constant 0 : index
    %c0_45 = arith.constant 0 : index
    %82 = vector.load %arg17[%c0_44, %c0_45] : memref<8x64xf32, #tpu.memory_space<vmem>>, vector<8x64xf32>
    %c0_46 = arith.constant 0 : index
    %c0_47 = arith.constant 0 : index
    %83 = vector.load %arg18[%c0_46, %c0_47] : memref<8x64xf32, #tpu.memory_space<vmem>>, vector<8x64xf32>
    %cst_48 = arith.constant dense<0.000000e+00> : vector<8x32xf32>
    %84 = tpu.matmul %82, %8, %cst_48 {dimension_numbers = #tpu.dot_dimension_numbers<[1], [0], [0], [1], [0, 0, 1, 1], [], []>} : vector<8x64xf32>, vector<64x32xf32>, vector<8x32xf32> -> vector<8x32xf32>
    %85 = vector.shape_cast %84 : vector<8x32xf32> to vector<8x1x32xf32>
    %86 = vector.broadcast %85 : vector<8x1x32xf32> to vector<8x16x32xf32>
    %87 = arith.addf %4, %86 : vector<8x16x32xf32>
    %cst_49 = arith.constant 0.000000e+00 : f32
    %88 = vector.broadcast %cst_49 : f32 to vector<8x16x32xf32>
    %89 = arith.maximumf %87, %88 : vector<8x16x32xf32>
    %90 = vector.broadcast %7 : vector<1x1x32xf32> to vector<8x16x32xf32>
    %91 = arith.mulf %89, %90 : vector<8x16x32xf32>
    %cst_50 = arith.constant dense<0.000000e+00> : vector<8x16xf32>
    %92 = vector.multi_reduction <add>, %91, %cst_50 [2] : vector<8x16x32xf32> to vector<8x16xf32>
    %cst_51 = arith.constant dense<0xFF800000> : vector<8xf32>
    %93 = vector.multi_reduction <maximumf>, %92, %cst_51 [1] : vector<8x16xf32> to vector<8xf32>
    %94 = vector.shape_cast %93 : vector<8xf32> to vector<8x1xf32>
    %95 = vector.broadcast %94 : vector<8x1xf32> to vector<8x16xf32>
    %96 = arith.subf %92, %95 : vector<8x16xf32>
    %97 = math.exp %96 : vector<8x16xf32>
    %cst_52 = arith.constant dense<0.000000e+00> : vector<8xf32>
    %98 = vector.multi_reduction <add>, %97, %cst_52 [1] : vector<8x16xf32> to vector<8xf32>
    %99 = vector.shape_cast %98 : vector<8xf32> to vector<8x1xf32>
    %100 = tpu.reciprocal %99 : vector<8x1xf32> -> vector<8x1xf32>
    %101 = vector.broadcast %100 : vector<8x1xf32> to vector<8x16xf32>
    %102 = arith.mulf %97, %101 : vector<8x16xf32>
    %103 = vector.shape_cast %102 : vector<8x16xf32> to vector<8x16x1xf32>
    %104 = vector.broadcast %103 : vector<8x16x1xf32> to vector<8x16x64xf32>
    %105 = arith.mulf %3, %104 : vector<8x16x64xf32>
    %cst_53 = arith.constant dense<0.000000e+00> : vector<8x64xf32>
    %106 = vector.multi_reduction <add>, %105, %cst_53 [1] : vector<8x16x64xf32> to vector<8x64xf32>
    %107 = tpu.concatenate %106, %82 in 1 : vector<8x64xf32>, vector<8x64xf32> -> vector<8x128xf32>
    %108 = vector.extract_strided_slice %18 {offsets = [8, 0], sizes = [8, 256], strides = [1, 1]} : vector<16x256xf32> to vector<8x256xf32>
    %cst_54 = arith.constant dense<0.000000e+00> : vector<8x256xf32>
    %109 = tpu.matmul %107, %9, %cst_54 {dimension_numbers = #tpu.dot_dimension_numbers<[1], [0], [0], [1], [0, 0, 1, 1], [], []>} : vector<8x128xf32>, vector<128x256xf32>, vector<8x256xf32> -> vector<8x256xf32>
    %110 = arith.addf %108, %109 : vector<8x256xf32>
    %111 = vector.extract_strided_slice %110 {offsets = [0, 0], sizes = [8, 64], strides = [1, 1]} : vector<8x256xf32> to vector<8x64xf32>
    %112 = arith.negf %111 : vector<8x64xf32>
    %113 = math.exp %112 : vector<8x64xf32>
    %cst_55 = arith.constant 1.000000e+00 : f32
    %114 = vector.broadcast %cst_55 : f32 to vector<8x64xf32>
    %115 = arith.addf %114, %113 : vector<8x64xf32>
    %116 = arith.divf %114, %115 : vector<8x64xf32>
    %117 = vector.extract_strided_slice %110 {offsets = [0, 64], sizes = [8, 64], strides = [1, 1]} : vector<8x256xf32> to vector<8x64xf32>
    %118 = arith.negf %117 : vector<8x64xf32>
    %119 = math.exp %118 : vector<8x64xf32>
    %cst_56 = arith.constant 1.000000e+00 : f32
    %120 = vector.broadcast %cst_56 : f32 to vector<8x64xf32>
    %121 = arith.addf %120, %119 : vector<8x64xf32>
    %122 = arith.divf %120, %121 : vector<8x64xf32>
    %123 = vector.extract_strided_slice %110 {offsets = [0, 128], sizes = [8, 64], strides = [1, 1]} : vector<8x256xf32> to vector<8x64xf32>
    %124 = math.tanh %123 : vector<8x64xf32>
    %125 = vector.extract_strided_slice %110 {offsets = [0, 192], sizes = [8, 64], strides = [1, 1]} : vector<8x256xf32> to vector<8x64xf32>
    %126 = arith.negf %125 : vector<8x64xf32>
    %127 = math.exp %126 : vector<8x64xf32>
    %cst_57 = arith.constant 1.000000e+00 : f32
    %128 = vector.broadcast %cst_57 : f32 to vector<8x64xf32>
    %129 = arith.addf %128, %127 : vector<8x64xf32>
    %130 = arith.divf %128, %129 : vector<8x64xf32>
    %131 = arith.mulf %122, %83 : vector<8x64xf32>
    %132 = arith.mulf %116, %124 : vector<8x64xf32>
    %133 = arith.addf %131, %132 : vector<8x64xf32>
    %134 = math.tanh %133 : vector<8x64xf32>
    %135 = arith.mulf %130, %134 : vector<8x64xf32>
    %c0_58 = arith.constant 0 : index
    %c0_59 = arith.constant 0 : index
    %136 = vector.load %arg17[%c0_58, %c0_59] : memref<8x64xf32, #tpu.memory_space<vmem>>, vector<8x64xf32>
    tpu.vector_store %arg17[%c0_58, %c0_59], %135 {strides = array<i32>} : memref<8x64xf32, #tpu.memory_space<vmem>>, vector<8x64xf32>,
    %c0_60 = arith.constant 0 : index
    %c0_61 = arith.constant 0 : index
    %137 = vector.load %arg18[%c0_60, %c0_61] : memref<8x64xf32, #tpu.memory_space<vmem>>, vector<8x64xf32>
    tpu.vector_store %arg18[%c0_60, %c0_61], %133 {strides = array<i32>} : memref<8x64xf32, #tpu.memory_space<vmem>>, vector<8x64xf32>,
    %138 = vector.shape_cast %102 : vector<8x16xf32> to vector<1x8x16xf32>
    %c1_i32 = arith.constant 1 : i32
    %139 = arith.addi %19, %c1_i32 : i32
    %140 = vector.broadcast %139 : i32 to vector<8x1xi32>
    %141 = arith.cmpi sgt, %5, %140 : vector<8x1xi32>
    %142 = arith.extui %141 : vector<8x1xi1> to vector<8x1xi32>
    %143 = arith.sitofp %142 : vector<8x1xi32> to vector<8x1xf32>
    %144 = tpu.concatenate %73, %135 in 0 : vector<8x64xf32>, vector<8x64xf32> -> vector<16x64xf32>
    %145 = tpu.concatenate %81, %143 in 0 : vector<8x1xf32>, vector<8x1xf32> -> vector<16x1xf32>
    %cst_62 = arith.constant dense<0.000000e+00> : vector<16x128xf32>
    %146 = tpu.matmul %144, %10, %cst_62 {dimension_numbers = #tpu.dot_dimension_numbers<[1], [0], [0], [1], [0, 0, 1, 1], [], []>} : vector<16x64xf32>, vector<64x128xf32>, vector<16x128xf32> -> vector<16x128xf32>
    %147 = vector.broadcast %11 : vector<1x128xf32> to vector<16x128xf32>
    %148 = arith.addf %146, %147 : vector<16x128xf32>
    %149 = vector.broadcast %145 : vector<16x1xf32> to vector<16x128xf32>
    %150 = arith.mulf %148, %149 : vector<16x128xf32>
    %151 = vector.shape_cast %150 : vector<16x128xf32> to vector<2x8x128xf32>
    %c0_63 = arith.constant 0 : index
    %c0_64 = arith.constant 0 : index
    %c0_65 = arith.constant 0 : index
    %152 = vector.load %arg15[%c0_63, %c0_64, %c0_65] : memref<2x8x128xf32, #tpu.memory_space<vmem>>, vector<2x8x128xf32>
    tpu.vector_store %arg15[%c0_63, %c0_64, %c0_65], %151 {strides = array<i32>} : memref<2x8x128xf32, #tpu.memory_space<vmem>>, vector<2x8x128xf32>,
    %153 = tpu.concatenate %76, %138 in 0 : vector<1x8x16xf32>, vector<1x8x16xf32> -> vector<2x8x16xf32>
    %cst_66 = arith.constant 0.000000e+00 : f32
    %154 = vector.broadcast %cst_66 : f32 to vector<2x8x112xf32>
    %155 = tpu.concatenate %153, %154 in 2 : vector<2x8x16xf32>, vector<2x8x112xf32> -> vector<2x8x128xf32>
    %156 = vector.shape_cast %145 : vector<16x1xf32> to vector<2x8x1xf32>
    %157 = vector.broadcast %156 : vector<2x8x1xf32> to vector<2x8x128xf32>
    %158 = arith.mulf %155, %157 : vector<2x8x128xf32>
    %c0_67 = arith.constant 0 : index
    %c0_68 = arith.constant 0 : index
    %c0_69 = arith.constant 0 : index
    %159 = vector.load %arg16[%c0_67, %c0_68, %c0_69] : memref<2x8x128xf32, #tpu.memory_space<vmem>>, vector<2x8x128xf32>
    tpu.vector_store %arg16[%c0_67, %c0_68, %c0_69], %158 {strides = array<i32>} : memref<2x8x128xf32, #tpu.memory_space<vmem>>, vector<2x8x128xf32>,
    return
  }
  func.func @transform_0(%arg0: i32, %arg1: i32) -> (i32, i32) {
    %c0_i32 = arith.constant 0 : i32
    %c0_i32_0 = arith.constant 0 : i32
    return %arg0, %c0_i32 : i32, i32
  }
  func.func @transform_1(%arg0: i32, %arg1: i32) -> (i32, i32) {
    %c0_i32 = arith.constant 0 : i32
    %c0_i32_0 = arith.constant 0 : i32
    return %arg0, %c0_i32 : i32, i32
  }
  func.func @transform_2(%arg0: i32, %arg1: i32) -> (i32, i32) {
    %c0_i32 = arith.constant 0 : i32
    %c0_i32_0 = arith.constant 0 : i32
    return %arg0, %c0_i32 : i32, i32
  }
  func.func @transform_3(%arg0: i32, %arg1: i32) -> (i32, i32, i32) {
    %c0_i32 = arith.constant 0 : i32
    %c0_i32_0 = arith.constant 0 : i32
    %c0_i32_1 = arith.constant 0 : i32
    return %arg0, %c0_i32, %c0_i32_0 : i32, i32, i32
  }
  func.func @transform_4(%arg0: i32, %arg1: i32) -> (i32, i32, i32) {
    %c0_i32 = arith.constant 0 : i32
    %c0_i32_0 = arith.constant 0 : i32
    %c0_i32_1 = arith.constant 0 : i32
    return %arg0, %c0_i32, %c0_i32_0 : i32, i32, i32
  }
  func.func @transform_5(%arg0: i32, %arg1: i32) -> (i32, i32, i32) {
    %c0_i32 = arith.constant 0 : i32
    %c0_i32_0 = arith.constant 0 : i32
    return %arg1, %arg0, %c0_i32 : i32, i32, i32
  }
  func.func @transform_6(%arg0: i32, %arg1: i32) -> (i32, i32) {
    %c0_i32 = arith.constant 0 : i32
    %c0_i32_0 = arith.constant 0 : i32
    %c0_i32_1 = arith.constant 0 : i32
    return %c0_i32, %c0_i32_0 : i32, i32
  }
  func.func @transform_7(%arg0: i32, %arg1: i32) -> (i32, i32) {
    %c0_i32 = arith.constant 0 : i32
    %c0_i32_0 = arith.constant 0 : i32
    %c0_i32_1 = arith.constant 0 : i32
    return %c0_i32, %c0_i32_0 : i32, i32
  }
  func.func @transform_8(%arg0: i32, %arg1: i32) -> (i32, i32) {
    %c0_i32 = arith.constant 0 : i32
    %c0_i32_0 = arith.constant 0 : i32
    %c0_i32_1 = arith.constant 0 : i32
    return %c0_i32, %c0_i32_0 : i32, i32
  }
  func.func @transform_9(%arg0: i32, %arg1: i32) -> (i32, i32) {
    %c0_i32 = arith.constant 0 : i32
    %c0_i32_0 = arith.constant 0 : i32
    %c0_i32_1 = arith.constant 0 : i32
    return %c0_i32, %c0_i32_0 : i32, i32
  }
  func.func @transform_10(%arg0: i32, %arg1: i32) -> (i32, i32) {
    %c0_i32 = arith.constant 0 : i32
    %c0_i32_0 = arith.constant 0 : i32
    %c0_i32_1 = arith.constant 0 : i32
    return %c0_i32, %c0_i32_0 : i32, i32
  }
  func.func @transform_11(%arg0: i32, %arg1: i32) -> (i32, i32) {
    %c0_i32 = arith.constant 0 : i32
    %c0_i32_0 = arith.constant 0 : i32
    %c0_i32_1 = arith.constant 0 : i32
    return %c0_i32, %c0_i32_0 : i32, i32
  }
  func.func @transform_12(%arg0: i32, %arg1: i32) -> (i32, i32) {
    %c0_i32 = arith.constant 0 : i32
    %c0_i32_0 = arith.constant 0 : i32
    %c0_i32_1 = arith.constant 0 : i32
    return %c0_i32, %c0_i32_0 : i32, i32
  }
  func.func @transform_13(%arg0: i32, %arg1: i32) -> (i32, i32, i32) {
    %c0_i32 = arith.constant 0 : i32
    %c0_i32_0 = arith.constant 0 : i32
    return %arg1, %arg0, %c0_i32 : i32, i32, i32
  }
  func.func @transform_14(%arg0: i32, %arg1: i32) -> (i32, i32, i32) {
    %c0_i32 = arith.constant 0 : i32
    %c0_i32_0 = arith.constant 0 : i32
    return %arg1, %arg0, %c0_i32 : i32, i32, i32
  }
}

</mosaic_0001>

<llo_original>
// kernel: tpu_custom_call.1
$region0: #{tpu_custom_call.1}
  #allocation0 [shape = 'u32[]', space=smem, size = 0x4, offset = 0x4, fixed_abs, tag = 'smem constant byte address 0x4 - core index']
  #allocation1 [shape = 'u32[72,128]{1,0:T(1,128)}', space=vmem, size = 0x9000, scoped, tag = 'internal scratch']
  %s0 = inlined_call_operand.hbm [shape: f32[8,128], index: 0, kind: input, shape index: {}]
  %s1 = inlined_call_operand.hbm [shape: f32[8,128], index: 1, kind: input, shape index: {}]
  %s2 = inlined_call_operand.hbm [shape: f32[8,128], index: 2, kind: output, shape index: {}]
  %s3 = sld [smem:[#allocation0]]
  $region49: #{tpu_custom_call.1} parent=0
    _
  %s5 = ssub.s32 1, %s3
  %s6 = scalar_select 0, %s5, %s3
  $region1: #{tpu_custom_call.1} parent=0
    #allocation2 [shape = 'u8[4096]{0}', space=vmem, size = 0x1000, scoped, tag = 'input window, operand 0, single buffered']
    #allocation3 [shape = 's32[2]{0}', space=sflag, size = 0x8, scoped, tag = 'scoped memory for tpu_custom_call.1']
    #allocation4 [shape = 's32[2]{0}', space=sflag, size = 0x8, scoped, tag = 'scoped memory for tpu_custom_call.1']
    #allocation5 [shape = 'u8[4096]{0}', space=vmem, size = 0x1000, scoped, tag = 'input window, operand 1, single buffered']
    #allocation6 [shape = 's32[1]{0}', space=sflag, size = 0x4, scoped, tag = 'scoped memory for tpu_custom_call.1']
    #allocation7 [shape = 'u8[4096]{0}', space=vmem, size = 0x1000, scoped, tag = 'output window, operand 0, single buffered']
    %7 = vsyncpa [#allocation3], 0
    %8 = vsyncpa [#allocation6], 0
    %9 = vsyncpa [#allocation4], 0
    loop: start=0, step=1, limit=4
    $region2: #{tpu_custom_call.1} parent=1 // loop_pre_header
      _
    $region3: #{tpu_custom_call.1} parent=1 // loop_header
      %s11 = sphi 0, %s15
      %p12 = scmp.ge.s32.totalorder %s11, 4
      %s19 = sphi 0, %s19
      %s21 = sphi 0, %s19
      %s22 = sphi 0, %s21
      %s36 = sphi 0, %s22
      %s40 = sphi 0, %s40
      %s42 = sphi 0, %s40
      %s43 = sphi 0, %s42
      %s57 = sphi 0, %s43
      %s61 = sphi 0, %s61
      %s63 = sphi 0, %s61
      %s64 = sphi 0, %s63
      %s78 = sphi 0, %s64
    $region4: #{tpu_custom_call.1} parent=1 // loop_header_branch
      %14 = sbr.rel (%p12) target = $region8
    $region5: #{tpu_custom_call.1} parent=1 // loop_body
      %s16 = ssub.s32 %s11, 1
      %s17 = ssub.s32 %s11, 2
      %s18 = sadd.s32 %s11, 1
      %s20 = sadd.s32 %s19, 1
      %p23 = scmp.eq.s32.totalorder %s11, 1
      %p24 = scmp.ne.s32.totalorder %s19, %s21
      %p25 = scmp.eq.s32.totalorder %s11, 0
      %p26 = por %p24, %p25
      %p27 = scmp.ne.s32.totalorder %s19, %s21
      %p28 = scmp.eq.s32.totalorder %s16, 1
      %p29 = por %p27, %p28
      %p30 = scmp.ne.s32.totalorder %s21, %s22
      %p31 = scmp.eq.s32.totalorder %s16, 0
      %p32 = por %p30, %p31
      %p33 = scmp.ne.s32.totalorder %s21, %s22
      %p34 = scmp.eq.s32.totalorder %s17, 1
      %p35 = por %p33, %p34
      %p37 = scmp.ne.s32.totalorder %s22, %s36
      %p38 = scmp.eq.s32.totalorder %s17, 0
      %p39 = por %p37, %p38
      %s41 = sadd.s32 %s40, 1
      %p44 = scmp.eq.s32.totalorder %s11, 1
      %p45 = scmp.ne.s32.totalorder %s40, %s42
      %p46 = scmp.eq.s32.totalorder %s11, 0
      %p47 = por %p45, %p46
      %p48 = scmp.ne.s32.totalorder %s40, %s42
      %p49 = scmp.eq.s32.totalorder %s16, 1
      %p50 = por %p48, %p49
      %p51 = scmp.ne.s32.totalorder %s42, %s43
      %p52 = scmp.eq.s32.totalorder %s16, 0
      %p53 = por %p51, %p52
      %p54 = scmp.ne.s32.totalorder %s42, %s43
      %p55 = scmp.eq.s32.totalorder %s17, 1
      %p56 = por %p54, %p55
      %p58 = scmp.ne.s32.totalorder %s43, %s57
      %p59 = scmp.eq.s32.totalorder %s17, 0
      %p60 = por %p58, %p59
      %s62 = sadd.s32 %s61, 1
      %p65 = scmp.eq.s32.totalorder %s11, 1
      %p66 = scmp.ne.s32.totalorder %s61, %s63
      %p67 = scmp.eq.s32.totalorder %s11, 0
      %p68 = por %p66, %p67
      %p69 = scmp.ne.s32.totalorder %s61, %s63
      %p70 = scmp.eq.s32.totalorder %s16, 1
      %p71 = por %p69, %p70
      %p72 = scmp.ne.s32.totalorder %s63, %s64
      %p73 = scmp.eq.s32.totalorder %s16, 0
      %p74 = por %p72, %p73
      %p75 = scmp.ne.s32.totalorder %s63, %s64
      %p76 = scmp.eq.s32.totalorder %s17, 1
      %p77 = por %p75, %p76
      %p79 = scmp.ne.s32.totalorder %s64, %s78
      %p80 = scmp.eq.s32.totalorder %s17, 0
      %p81 = por %p79, %p80
      %p82 = scmp.le.s32.totalorder 1, %s11
      %p83 = scmp.lt.s32.totalorder %s11, 3
      %p84 = pnand %p82, %p83
      %p85 = pneg %p84
      // Predicated region
      $region9: #{tpu_custom_call.1} parent=5 // pred_check
        _
      $region10: #{tpu_custom_call.1} parent=5 // pred_check_branch
        %87 = sbr.rel (%p84) target = $region12
      $region11: #{tpu_custom_call.1} parent=5 // pred_region
        %s88 = ssub.s32 %s11, 1
        // Predicated region
        $region13: #{tpu_custom_call.1} parent=11 // pred_check
          %p89 = pneg %p32
        $region14: #{tpu_custom_call.1} parent=11 // pred_check_branch
          %91 = sbr.rel (%p89) target = $region16
        $region15: #{tpu_custom_call.1} parent=11 // pred_region
          %93 = vsyncadd [#allocation3], 0
          %s95 = sshll.u32 %s0, 4
          %s96 = int_to_ptr.hbm [resolvable:$true] %s95
          %s97 = sshll.u32 [#allocation2], 4
          %s98 = int_to_ptr.vmem [resolvable:$true] %s97
          %100 = dma.hbm_to_vmem [thread:$0]  %s96, 128, %s98, [#allocation3]
        $region16: #{tpu_custom_call.1} parent=11 // pred_fallthru
          _
        // Predicated region
        $region17: #{tpu_custom_call.1} parent=11 // pred_check
          %p101 = pneg %p53
        $region18: #{tpu_custom_call.1} parent=11 // pred_check_branch
          %103 = sbr.rel (%p101) target = $region20
        $region19: #{tpu_custom_call.1} parent=11 // pred_region
          %105 = vsyncadd [#allocation6], 0
          %s107 = sshll.u32 %s1, 4
          %s108 = int_to_ptr.hbm [resolvable:$true] %s107
          %s109 = sshll.u32 [#allocation5], 4
          %s110 = int_to_ptr.vmem [resolvable:$true] %s109
          %112 = dma.hbm_to_vmem [thread:$0]  %s108, 128, %s110, [#allocation6]
        $region20: #{tpu_custom_call.1} parent=11 // pred_fallthru
          _
      $region12: #{tpu_custom_call.1} parent=5 // pred_fallthru
        _
      %p113 = scmp.lt.s32.totalorder %s11, 2
      // Predicated region
      $region21: #{tpu_custom_call.1} parent=5 // pred_check
        %p114 = pneg %p113
      $region22: #{tpu_custom_call.1} parent=5 // pred_check_branch
        %116 = sbr.rel (%p114) target = $region24
      $region23: #{tpu_custom_call.1} parent=5 // pred_region
        _
      $region24: #{tpu_custom_call.1} parent=5 // pred_fallthru
        _
      %p117 = scmp.le.s32.totalorder 1, %s11
      %p118 = scmp.lt.s32.totalorder %s11, 3
      %p119 = pnand %p117, %p118
      %p120 = pneg %p119
      // Predicated region
      $region25: #{tpu_custom_call.1} parent=5 // pred_check
        _
      $region26: #{tpu_custom_call.1} parent=5 // pred_check_branch
        %122 = sbr.rel (%p119) target = $region28
      $region27: #{tpu_custom_call.1} parent=5 // pred_region
        %s123 = ssub.s32 %s11, 1
        // Predicated region
        $region29: #{tpu_custom_call.1} parent=27 // pred_check
          %p124 = pneg %p32
        $region30: #{tpu_custom_call.1} parent=27 // pred_check_branch
          %126 = sbr.rel (%p124) target = $region32
        $region31: #{tpu_custom_call.1} parent=27 // pred_region
          %128 = dma.done [#allocation3], 128
        $region32: #{tpu_custom_call.1} parent=27 // pred_fallthru
          _
        // Predicated region
        $region33: #{tpu_custom_call.1} parent=27 // pred_check
          %p129 = pneg %p53
        $region34: #{tpu_custom_call.1} parent=27 // pred_check_branch
          %131 = sbr.rel (%p129) target = $region36
        $region35: #{tpu_custom_call.1} parent=27 // pred_region
          %133 = dma.done [#allocation6], 128
        $region36: #{tpu_custom_call.1} parent=27 // pred_fallthru
          _
        %p134 = pneg %p32
        %p135 = pneg %p29
        %p136 = pneg %p53
        %p137 = pneg %p50
        %p138 = pneg %p74
        %p139 = pneg %p71
        %v140 = vld [vmem:[#allocation2] sm:$0xff]
        %v141 = vld [vmem:[#allocation5] sm:$0xff]
        %v142 = vadd.f32 %v140, %v141
        %143 = vst [vmem:[#allocation7] sm:$0xff] %v142
        // Predicated region
        $region37: #{tpu_custom_call.1} parent=27 // pred_check
          %p144 = pneg %p71
        $region38: #{tpu_custom_call.1} parent=27 // pred_check_branch
          %146 = sbr.rel (%p144) target = $region40
        $region39: #{tpu_custom_call.1} parent=27 // pred_region
          %148 = vsyncadd [#allocation4], 0
          %s150 = sshll.u32 [#allocation7], 4
          %s151 = int_to_ptr.vmem [resolvable:$true] %s150
          %s152 = sshll.u32 %s2, 4
          %s153 = int_to_ptr.hbm [resolvable:$true] %s152
          %155 = dma.vmem_to_hbm [thread:$0]  %s151, 128, %s153, [#allocation4]
        $region40: #{tpu_custom_call.1} parent=27 // pred_fallthru
          _
        // Predicated region
        $region41: #{tpu_custom_call.1} parent=27 // pred_check
          %p156 = pneg %p71
        $region42: #{tpu_custom_call.1} parent=27 // pred_check_branch
          %158 = sbr.rel (%p156) target = $region44
        $region43: #{tpu_custom_call.1} parent=27 // pred_region
          %160 = dma.done [#allocation4], 128
        $region44: #{tpu_custom_call.1} parent=27 // pred_fallthru
          _
      $region28: #{tpu_custom_call.1} parent=5 // pred_fallthru
        _
      %p161 = scmp.le.s32.totalorder 2, %s11
      // Predicated region
      $region45: #{tpu_custom_call.1} parent=5 // pred_check
        %p162 = pneg %p161
      $region46: #{tpu_custom_call.1} parent=5 // pred_check_branch
        %164 = sbr.rel (%p162) target = $region48
      $region47: #{tpu_custom_call.1} parent=5 // pred_region
        %s165 = ssub.s32 %s11, 2
      $region48: #{tpu_custom_call.1} parent=5 // pred_fallthru
        _
    $region6: #{tpu_custom_call.1} parent=1 // loop_footer
      %s15 = sadd.s32 1, %s11
    $region7: #{tpu_custom_call.1} parent=1 // loop_footer_branch
      %10 = sbr.rel target = $region3
    $region8: #{tpu_custom_call.1} parent=1 // loop_exit
      _
    %166 = vsyncpa [#allocation3], 1
    %s167 = scalar_lea.sflag [#allocation3], 1
    %168 = vsyncpa %s167, 1
    %169 = vsyncpa [#allocation6], 1
    %170 = vsyncpa [#allocation4], 1
    %s171 = scalar_lea.sflag [#allocation4], 1
    %172 = vsyncpa %s171, 1

// kernel: tpu_custom_call.1
$region0: #{tpu_custom_call.1}
  #allocation0 [shape = 'u32[]', space=smem, size = 0x4, offset = 0x4, fixed_abs, tag = 'smem constant byte address 0x4 - core index']
  #allocation1 [shape = 'u32[72,128]{1,0:T(1,128)}', space=vmem, size = 0x9000, scoped, tag = 'internal scratch']
  #allocation2 [shape = 'f32[8,64]{1,0:T(8,128)}', space=vmem, size = 0x1000, scoped, tag = 'scratch operand']
  #allocation3 [shape = 'f32[8,64]{1,0:T(8,128)}', space=vmem, size = 0x1000, scoped, tag = 'scratch operand']
  %s0 = inlined_call_operand.vmem [shape: s32[16,1], index: 0, kind: input, shape index: {}]
  %s1 = inlined_call_operand.vmem [shape: f32[16,64], index: 1, kind: input, shape index: {}]
  %s2 = inlined_call_operand.vmem [shape: f32[16,64], index: 2, kind: input, shape index: {}]
  %s3 = inlined_call_operand.hbm [shape: f32[16,16,64], index: 3, kind: input, shape index: {}]
  %s4 = inlined_call_operand.hbm [shape: f32[16,16,32], index: 4, kind: input, shape index: {}]
  %s5 = inlined_call_operand.hbm [shape: f32[8,16,32], index: 5, kind: input, shape index: {}]
  %s6 = inlined_call_operand.vmem [shape: f32[64,32], index: 6, kind: input, shape index: {}]
  %s7 = inlined_call_operand.vmem [shape: f32[1,32], index: 7, kind: input, shape index: {}]
  %s8 = inlined_call_operand.vmem [shape: f32[32,256], index: 8, kind: input, shape index: {}]
  %s9 = inlined_call_operand.hbm [shape: f32[128,256], index: 9, kind: input, shape index: {}]
  %s10 = inlined_call_operand.vmem [shape: f32[1,256], index: 10, kind: input, shape index: {}]
  %s11 = inlined_call_operand.hbm [shape: f32[64,128], index: 11, kind: input, shape index: {}]
  %s12 = inlined_call_operand.vmem [shape: f32[1,128], index: 12, kind: input, shape index: {}]
  %s13 = inlined_call_operand.hbm [shape: f32[8,16,128], index: 13, kind: output, shape index: {0}]
  %s14 = inlined_call_operand.hbm [shape: f32[8,16,128], index: 14, kind: output, shape index: {1}]
  %15 = xla_tuple %s13, %s14
  %s16 = sld [smem:[#allocation0]]
  $region117: #{tpu_custom_call.1} parent=0
    _
  %s18 = ssub.s32 1, %s16
  %s19 = scalar_select 0, %s18, %s16
  $region1: #{tpu_custom_call.1} parent=0
    #allocation4 [shape = 'u8[131072]{0}', space=vmem, size = 0x20000, scoped, tag = 'input window, operand 3']
    #allocation5 [shape = 's32[2]{0}', space=sflag, size = 0x8, scoped, tag = 'scoped memory for tpu_custom_call.1']
    #allocation6 [shape = 's32[2]{0}', space=sflag, size = 0x8, scoped, tag = 'scoped memory for tpu_custom_call.1']
    #allocation7 [shape = 'u8[131072]{0}', space=vmem, size = 0x20000, scoped, tag = 'input window, operand 4']
    #allocation8 [shape = 's32[2]{0}', space=sflag, size = 0x8, scoped, tag = 'scoped memory for tpu_custom_call.1']
    #allocation9 [shape = 'u8[16384]{0}', space=vmem, size = 0x4000, scoped, tag = 'input window, operand 5']
    #allocation10 [shape = 'u8[131072]{0}', space=vmem, size = 0x20000, scoped, tag = 'input window, operand 9, single buffered']
    #allocation11 [shape = 's32[1]{0}', space=sflag, size = 0x4, scoped, tag = 'scoped memory for tpu_custom_call.1']
    #allocation12 [shape = 'u8[32768]{0}', space=vmem, size = 0x8000, scoped, tag = 'input window, operand 11, single buffered']
    #allocation13 [shape = 'u8[16384]{0}', space=vmem, size = 0x4000, scoped, tag = 'output window, operand 0']
    #allocation14 [shape = 'u8[16384]{0}', space=vmem, size = 0x4000, scoped, tag = 'output window, operand 1']
    #allocation15 [shape = 's32[2]{0}', space=sflag, size = 0x8, scoped, tag = 'scoped memory for tpu_custom_call.1']
    %20 = vsyncpa [#allocation5], 0
    %s21 = scalar_lea.sflag [#allocation5], 1
    %22 = vsyncpa %s21, 0
    %23 = vsyncpa [#allocation8], 0
    %s24 = scalar_lea.sflag [#allocation8], 1
    %25 = vsyncpa %s24, 0
    %26 = vsyncpa [#allocation11], 0
    %27 = vsyncpa [#allocation6], 0
    %s28 = scalar_lea.sflag [#allocation6], 1
    %29 = vsyncpa %s28, 0
    %30 = vsyncpa [#allocation15], 0
    %s31 = scalar_lea.sflag [#allocation15], 1
    %32 = vsyncpa %s31, 0
    loop: start=0, step=1, limit=10
    $region2: #{tpu_custom_call.1} parent=1 // loop_pre_header
      _
    $region3: #{tpu_custom_call.1} parent=1 // loop_header
      %s34 = sphi 0, %s38
      %p35 = scmp.ge.s32.totalorder %s34, 10
      %s41 = sphi 0, %s53
      %s42 = sphi 0, %s49
      %s43 = sphi 0, %s41
      %s44 = sphi 0, %s42
      %s45 = sphi 0, %s43
      %s46 = sphi 0, %s44
      %s56 = sphi 0, %s58
      %s59 = sphi 0, %s56
      %s60 = sphi 0, %s59
      %s76 = sphi 0, %s60
      %s82 = sphi 0, %s84
      %s85 = sphi 0, %s82
      %s86 = sphi 0, %s85
      %s102 = sphi 0, %s86
      %s108 = sphi 0, %s110
      %s111 = sphi 0, %s108
      %s112 = sphi 0, %s111
      %s128 = sphi 0, %s112
      %s134 = sphi 0, %s136
      %s137 = sphi 0, %s134
      %s138 = sphi 0, %s137
      %s154 = sphi 0, %s138
      %s160 = sphi 0, %s162
      %s163 = sphi 0, %s160
      %s164 = sphi 0, %s163
      %s180 = sphi 0, %s164
      %s188 = sphi 0, %s190
      %s191 = sphi 0, %s188
      %s192 = sphi 0, %s191
      %s208 = sphi 0, %s192
      %s212 = sphi 0, %s212
      %s214 = sphi 0, %s212
      %s215 = sphi 0, %s214
      %s229 = sphi 0, %s215
      %s233 = sphi 0, %s233
      %s235 = sphi 0, %s233
      %s236 = sphi 0, %s235
      %s250 = sphi 0, %s236
      %s254 = sphi 0, %s254
      %s256 = sphi 0, %s254
      %s257 = sphi 0, %s256
      %s271 = sphi 0, %s257
      %s275 = sphi 0, %s275
      %s277 = sphi 0, %s275
      %s278 = sphi 0, %s277
      %s292 = sphi 0, %s278
      %s296 = sphi 0, %s296
      %s298 = sphi 0, %s296
      %s299 = sphi 0, %s298
      %s313 = sphi 0, %s299
      %s317 = sphi 0, %s317
      %s319 = sphi 0, %s317
      %s320 = sphi 0, %s319
      %s334 = sphi 0, %s320
      %s338 = sphi 0, %s338
      %s340 = sphi 0, %s338
      %s341 = sphi 0, %s340
      %s355 = sphi 0, %s341
      %s363 = sphi 0, %s365
      %s366 = sphi 0, %s363
      %s367 = sphi 0, %s366
      %s383 = sphi 0, %s367
      %s391 = sphi 0, %s393
      %s394 = sphi 0, %s391
      %s395 = sphi 0, %s394
      %s411 = sphi 0, %s395
    $region4: #{tpu_custom_call.1} parent=1 // loop_header_branch
      %37 = sbr.rel (%p35) target = $region8
    $region5: #{tpu_custom_call.1} parent=1 // loop_body
      %s39 = ssub.s32 %s34, 1
      %s40 = ssub.s32 %s34, 2
      %s47 = sadd.s32 1, %s42
      %p48 = scmp.ge.s32.totalorder %s47, 4
      %s49 = scalar_select %p48, 0, %s47
      %s50 = sadd.s32 1, %s41
      %s51 = scalar_select %p48, %s50, %s41
      %p52 = scmp.ge.s32.totalorder %s51, 2
      %s53 = scalar_select %p52, 0, %s51
      %s54 = ssub.s32 %s41, %s53
      %p55 = scmp.eq.s32.totalorder %s54, 0
      %s57 = sadd.s32 %s56, 1
      %s58 = scalar_select %p55, %s56, %s57
      %p61 = pneg %p55
      %p62 = scmp.eq.s32.totalorder %s34, 7
      %p63 = por %p61, %p62
      %p64 = scmp.ne.s32.totalorder %s56, %s59
      %p65 = scmp.eq.s32.totalorder %s34, 0
      %p66 = por %p64, %p65
      %p67 = scmp.ne.s32.totalorder %s56, %s59
      %p68 = scmp.eq.s32.totalorder %s39, 7
      %p69 = por %p67, %p68
      %p70 = scmp.ne.s32.totalorder %s59, %s60
      %p71 = scmp.eq.s32.totalorder %s39, 0
      %p72 = por %p70, %p71
      %p73 = scmp.ne.s32.totalorder %s59, %s60
      %p74 = scmp.eq.s32.totalorder %s40, 7
      %p75 = por %p73, %p74
      %p77 = scmp.ne.s32.totalorder %s60, %s76
      %p78 = scmp.eq.s32.totalorder %s40, 0
      %p79 = por %p77, %p78
      %s80 = ssub.s32 %s41, %s53
      %p81 = scmp.eq.s32.totalorder %s80, 0
      %s83 = sadd.s32 %s82, 1
      %s84 = scalar_select %p81, %s82, %s83
      %p87 = pneg %p81
      %p88 = scmp.eq.s32.totalorder %s34, 7
      %p89 = por %p87, %p88
      %p90 = scmp.ne.s32.totalorder %s82, %s85
      %p91 = scmp.eq.s32.totalorder %s34, 0
      %p92 = por %p90, %p91
      %p93 = scmp.ne.s32.totalorder %s82, %s85
      %p94 = scmp.eq.s32.totalorder %s39, 7
      %p95 = por %p93, %p94
      %p96 = scmp.ne.s32.totalorder %s85, %s86
      %p97 = scmp.eq.s32.totalorder %s39, 0
      %p98 = por %p96, %p97
      %p99 = scmp.ne.s32.totalorder %s85, %s86
      %p100 = scmp.eq.s32.totalorder %s40, 7
      %p101 = por %p99, %p100
      %p103 = scmp.ne.s32.totalorder %s86, %s102
      %p104 = scmp.eq.s32.totalorder %s40, 0
      %p105 = por %p103, %p104
      %s106 = ssub.s32 %s41, %s53
      %p107 = scmp.eq.s32.totalorder %s106, 0
      %s109 = sadd.s32 %s108, 1
      %s110 = scalar_select %p107, %s108, %s109
      %p113 = pneg %p107
      %p114 = scmp.eq.s32.totalorder %s34, 7
      %p115 = por %p113, %p114
      %p116 = scmp.ne.s32.totalorder %s108, %s111
      %p117 = scmp.eq.s32.totalorder %s34, 0
      %p118 = por %p116, %p117
      %p119 = scmp.ne.s32.totalorder %s108, %s111
      %p120 = scmp.eq.s32.totalorder %s39, 7
      %p121 = por %p119, %p120
      %p122 = scmp.ne.s32.totalorder %s111, %s112
      %p123 = scmp.eq.s32.totalorder %s39, 0
      %p124 = por %p122, %p123
      %p125 = scmp.ne.s32.totalorder %s111, %s112
      %p126 = scmp.eq.s32.totalorder %s40, 7
      %p127 = por %p125, %p126
      %p129 = scmp.ne.s32.totalorder %s112, %s128
      %p130 = scmp.eq.s32.totalorder %s40, 0
      %p131 = por %p129, %p130
      %s132 = ssub.s32 %s41, %s53
      %p133 = scmp.eq.s32.totalorder %s132, 0
      %s135 = sadd.s32 %s134, 1
      %s136 = scalar_select %p133, %s134, %s135
      %p139 = pneg %p133
      %p140 = scmp.eq.s32.totalorder %s34, 7
      %p141 = por %p139, %p140
      %p142 = scmp.ne.s32.totalorder %s134, %s137
      %p143 = scmp.eq.s32.totalorder %s34, 0
      %p144 = por %p142, %p143
      %p145 = scmp.ne.s32.totalorder %s134, %s137
      %p146 = scmp.eq.s32.totalorder %s39, 7
      %p147 = por %p145, %p146
      %p148 = scmp.ne.s32.totalorder %s137, %s138
      %p149 = scmp.eq.s32.totalorder %s39, 0
      %p150 = por %p148, %p149
      %p151 = scmp.ne.s32.totalorder %s137, %s138
      %p152 = scmp.eq.s32.totalorder %s40, 7
      %p153 = por %p151, %p152
      %p155 = scmp.ne.s32.totalorder %s138, %s154
      %p156 = scmp.eq.s32.totalorder %s40, 0
      %p157 = por %p155, %p156
      %s158 = ssub.s32 %s41, %s53
      %p159 = scmp.eq.s32.totalorder %s158, 0
      %s161 = sadd.s32 %s160, 1
      %s162 = scalar_select %p159, %s160, %s161
      %p165 = pneg %p159
      %p166 = scmp.eq.s32.totalorder %s34, 7
      %p167 = por %p165, %p166
      %p168 = scmp.ne.s32.totalorder %s160, %s163
      %p169 = scmp.eq.s32.totalorder %s34, 0
      %p170 = por %p168, %p169
      %p171 = scmp.ne.s32.totalorder %s160, %s163
      %p172 = scmp.eq.s32.totalorder %s39, 7
      %p173 = por %p171, %p172
      %p174 = scmp.ne.s32.totalorder %s163, %s164
      %p175 = scmp.eq.s32.totalorder %s39, 0
      %p176 = por %p174, %p175
      %p177 = scmp.ne.s32.totalorder %s163, %s164
      %p178 = scmp.eq.s32.totalorder %s40, 7
      %p179 = por %p177, %p178
      %p181 = scmp.ne.s32.totalorder %s164, %s180
      %p182 = scmp.eq.s32.totalorder %s40, 0
      %p183 = por %p181, %p182
      %s184 = ssub.s32 %s42, %s49
      %s185 = ssub.s32 %s41, %s53
      %s186 = sor.u32 %s184, %s185
      %p187 = scmp.eq.s32.totalorder %s186, 0
      %s189 = sadd.s32 %s188, 1
      %s190 = scalar_select %p187, %s188, %s189
      %p193 = pneg %p187
      %p194 = scmp.eq.s32.totalorder %s34, 7
      %p195 = por %p193, %p194
      %p196 = scmp.ne.s32.totalorder %s188, %s191
      %p197 = scmp.eq.s32.totalorder %s34, 0
      %p198 = por %p196, %p197
      %p199 = scmp.ne.s32.totalorder %s188, %s191
      %p200 = scmp.eq.s32.totalorder %s39, 7
      %p201 = por %p199, %p200
      %p202 = scmp.ne.s32.totalorder %s191, %s192
      %p203 = scmp.eq.s32.totalorder %s39, 0
      %p204 = por %p202, %p203
      %p205 = scmp.ne.s32.totalorder %s191, %s192
      %p206 = scmp.eq.s32.totalorder %s40, 7
      %p207 = por %p205, %p206
      %p209 = scmp.ne.s32.totalorder %s192, %s208
      %p210 = scmp.eq.s32.totalorder %s40, 0
      %p211 = por %p209, %p210
      %s213 = sadd.s32 %s212, 1
      %p216 = scmp.eq.s32.totalorder %s34, 7
      %p217 = scmp.ne.s32.totalorder %s212, %s214
      %p218 = scmp.eq.s32.totalorder %s34, 0
      %p219 = por %p217, %p218
      %p220 = scmp.ne.s32.totalorder %s212, %s214
      %p221 = scmp.eq.s32.totalorder %s39, 7
      %p222 = por %p220, %p221
      %p223 = scmp.ne.s32.totalorder %s214, %s215
      %p224 = scmp.eq.s32.totalorder %s39, 0
      %p225 = por %p223, %p224
      %p226 = scmp.ne.s32.totalorder %s214, %s215
      %p227 = scmp.eq.s32.totalorder %s40, 7
      %p228 = por %p226, %p227
      %p230 = scmp.ne.s32.totalorder %s215, %s229
      %p231 = scmp.eq.s32.totalorder %s40, 0
      %p232 = por %p230, %p231
      %s234 = sadd.s32 %s233, 1
      %p237 = scmp.eq.s32.totalorder %s34, 7
      %p238 = scmp.ne.s32.totalorder %s233, %s235
      %p239 = scmp.eq.s32.totalorder %s34, 0
      %p240 = por %p238, %p239
      %p241 = scmp.ne.s32.totalorder %s233, %s235
      %p242 = scmp.eq.s32.totalorder %s39, 7
      %p243 = por %p241, %p242
      %p244 = scmp.ne.s32.totalorder %s235, %s236
      %p245 = scmp.eq.s32.totalorder %s39, 0
      %p246 = por %p244, %p245
      %p247 = scmp.ne.s32.totalorder %s235, %s236
      %p248 = scmp.eq.s32.totalorder %s40, 7
      %p249 = por %p247, %p248
      %p251 = scmp.ne.s32.totalorder %s236, %s250
      %p252 = scmp.eq.s32.totalorder %s40, 0
      %p253 = por %p251, %p252
      %s255 = sadd.s32 %s254, 1
      %p258 = scmp.eq.s32.totalorder %s34, 7
      %p259 = scmp.ne.s32.totalorder %s254, %s256
      %p260 = scmp.eq.s32.totalorder %s34, 0
      %p261 = por %p259, %p260
      %p262 = scmp.ne.s32.totalorder %s254, %s256
      %p263 = scmp.eq.s32.totalorder %s39, 7
      %p264 = por %p262, %p263
      %p265 = scmp.ne.s32.totalorder %s256, %s257
      %p266 = scmp.eq.s32.totalorder %s39, 0
      %p267 = por %p265, %p266
      %p268 = scmp.ne.s32.totalorder %s256, %s257
      %p269 = scmp.eq.s32.totalorder %s40, 7
      %p270 = por %p268, %p269
      %p272 = scmp.ne.s32.totalorder %s257, %s271
      %p273 = scmp.eq.s32.totalorder %s40, 0
      %p274 = por %p272, %p273
      %s276 = sadd.s32 %s275, 1
      %p279 = scmp.eq.s32.totalorder %s34, 7
      %p280 = scmp.ne.s32.totalorder %s275, %s277
      %p281 = scmp.eq.s32.totalorder %s34, 0
      %p282 = por %p280, %p281
      %p283 = scmp.ne.s32.totalorder %s275, %s277
      %p284 = scmp.eq.s32.totalorder %s39, 7
      %p285 = por %p283, %p284
      %p286 = scmp.ne.s32.totalorder %s277, %s278
      %p287 = scmp.eq.s32.totalorder %s39, 0
      %p288 = por %p286, %p287
      %p289 = scmp.ne.s32.totalorder %s277, %s278
      %p290 = scmp.eq.s32.totalorder %s40, 7
      %p291 = por %p289, %p290
      %p293 = scmp.ne.s32.totalorder %s278, %s292
      %p294 = scmp.eq.s32.totalorder %s40, 0
      %p295 = por %p293, %p294
      %s297 = sadd.s32 %s296, 1
      %p300 = scmp.eq.s32.totalorder %s34, 7
      %p301 = scmp.ne.s32.totalorder %s296, %s298
      %p302 = scmp.eq.s32.totalorder %s34, 0
      %p303 = por %p301, %p302
      %p304 = scmp.ne.s32.totalorder %s296, %s298
      %p305 = scmp.eq.s32.totalorder %s39, 7
      %p306 = por %p304, %p305
      %p307 = scmp.ne.s32.totalorder %s298, %s299
      %p308 = scmp.eq.s32.totalorder %s39, 0
      %p309 = por %p307, %p308
      %p310 = scmp.ne.s32.totalorder %s298, %s299
      %p311 = scmp.eq.s32.totalorder %s40, 7
      %p312 = por %p310, %p311
      %p314 = scmp.ne.s32.totalorder %s299, %s313
      %p315 = scmp.eq.s32.totalorder %s40, 0
      %p316 = por %p314, %p315
      %s318 = sadd.s32 %s317, 1
      %p321 = scmp.eq.s32.totalorder %s34, 7
      %p322 = scmp.ne.s32.totalorder %s317, %s319
      %p323 = scmp.eq.s32.totalorder %s34, 0
      %p324 = por %p322, %p323
      %p325 = scmp.ne.s32.totalorder %s317, %s319
      %p326 = scmp.eq.s32.totalorder %s39, 7
      %p327 = por %p325, %p326
      %p328 = scmp.ne.s32.totalorder %s319, %s320
      %p329 = scmp.eq.s32.totalorder %s39, 0
      %p330 = por %p328, %p329
      %p331 = scmp.ne.s32.totalorder %s319, %s320
      %p332 = scmp.eq.s32.totalorder %s40, 7
      %p333 = por %p331, %p332
      %p335 = scmp.ne.s32.totalorder %s320, %s334
      %p336 = scmp.eq.s32.totalorder %s40, 0
      %p337 = por %p335, %p336
      %s339 = sadd.s32 %s338, 1
      %p342 = scmp.eq.s32.totalorder %s34, 7
      %p343 = scmp.ne.s32.totalorder %s338, %s340
      %p344 = scmp.eq.s32.totalorder %s34, 0
      %p345 = por %p343, %p344
      %p346 = scmp.ne.s32.totalorder %s338, %s340
      %p347 = scmp.eq.s32.totalorder %s39, 7
      %p348 = por %p346, %p347
      %p349 = scmp.ne.s32.totalorder %s340, %s341
      %p350 = scmp.eq.s32.totalorder %s39, 0
      %p351 = por %p349, %p350
      %p352 = scmp.ne.s32.totalorder %s340, %s341
      %p353 = scmp.eq.s32.totalorder %s40, 7
      %p354 = por %p352, %p353
      %p356 = scmp.ne.s32.totalorder %s341, %s355
      %p357 = scmp.eq.s32.totalorder %s40, 0
      %p358 = por %p356, %p357
      %s359 = ssub.s32 %s42, %s49
      %s360 = ssub.s32 %s41, %s53
      %s361 = sor.u32 %s359, %s360
      %p362 = scmp.eq.s32.totalorder %s361, 0
      %s364 = sadd.s32 %s363, 1
      %s365 = scalar_select %p362, %s363, %s364
      %p368 = pneg %p362
      %p369 = scmp.eq.s32.totalorder %s34, 7
      %p370 = por %p368, %p369
      %p371 = scmp.ne.s32.totalorder %s363, %s366
      %p372 = scmp.eq.s32.totalorder %s34, 0
      %p373 = por %p371, %p372
      %p374 = scmp.ne.s32.totalorder %s363, %s366
      %p375 = scmp.eq.s32.totalorder %s39, 7
      %p376 = por %p374, %p375
      %p377 = scmp.ne.s32.totalorder %s366, %s367
      %p378 = scmp.eq.s32.totalorder %s39, 0
      %p379 = por %p377, %p378
      %p380 = scmp.ne.s32.totalorder %s366, %s367
      %p381 = scmp.eq.s32.totalorder %s40, 7
      %p382 = por %p380, %p381
      %p384 = scmp.ne.s32.totalorder %s367, %s383
      %p385 = scmp.eq.s32.totalorder %s40, 0
      %p386 = por %p384, %p385
      %s387 = ssub.s32 %s42, %s49
      %s388 = ssub.s32 %s41, %s53
      %s389 = sor.u32 %s387, %s388
      %p390 = scmp.eq.s32.totalorder %s389, 0
      %s392 = sadd.s32 %s391, 1
      %s393 = scalar_select %p390, %s391, %s392
      %p396 = pneg %p390
      %p397 = scmp.eq.s32.totalorder %s34, 7
      %p398 = por %p396, %p397
      %p399 = scmp.ne.s32.totalorder %s391, %s394
      %p400 = scmp.eq.s32.totalorder %s34, 0
      %p401 = por %p399, %p400
      %p402 = scmp.ne.s32.totalorder %s391, %s394
      %p403 = scmp.eq.s32.totalorder %s39, 7
      %p404 = por %p402, %p403
      %p405 = scmp.ne.s32.totalorder %s394, %s395
      %p406 = scmp.eq.s32.totalorder %s39, 0
      %p407 = por %p405, %p406
      %p408 = scmp.ne.s32.totalorder %s394, %s395
      %p409 = scmp.eq.s32.totalorder %s40, 7
      %p410 = por %p408, %p409
      %p412 = scmp.ne.s32.totalorder %s395, %s411
      %p413 = scmp.eq.s32.totalorder %s40, 0
      %p414 = por %p412, %p413
      %p415 = scmp.le.s32.totalorder 1, %s34
      %p416 = scmp.lt.s32.totalorder %s34, 9
      %p417 = pnand %p415, %p416
      %p418 = pneg %p417
      // Predicated region
      $region9: #{tpu_custom_call.1} parent=5 // pred_check
        _
      $region10: #{tpu_custom_call.1} parent=5 // pred_check_branch
        %420 = sbr.rel (%p417) target = $region12
      $region11: #{tpu_custom_call.1} parent=5 // pred_region
        %s421 = ssub.s32 %s34, 1
        // Predicated region
        $region13: #{tpu_custom_call.1} parent=11 // pred_check
          %p422 = pneg %p225
        $region14: #{tpu_custom_call.1} parent=11 // pred_check_branch
          %424 = sbr.rel (%p422) target = $region16
        $region15: #{tpu_custom_call.1} parent=11 // pred_region
          _
        $region16: #{tpu_custom_call.1} parent=11 // pred_fallthru
          _
        // Predicated region
        $region17: #{tpu_custom_call.1} parent=11 // pred_check
          %p425 = pneg %p246
        $region18: #{tpu_custom_call.1} parent=11 // pred_check_branch
          %427 = sbr.rel (%p425) target = $region20
        $region19: #{tpu_custom_call.1} parent=11 // pred_region
          _
        $region20: #{tpu_custom_call.1} parent=11 // pred_fallthru
          _
        // Predicated region
        $region21: #{tpu_custom_call.1} parent=11 // pred_check
          %p428 = pneg %p267
        $region22: #{tpu_custom_call.1} parent=11 // pred_check_branch
          %430 = sbr.rel (%p428) target = $region24
        $region23: #{tpu_custom_call.1} parent=11 // pred_region
          _
        $region24: #{tpu_custom_call.1} parent=11 // pred_fallthru
          _
        // Predicated region
        $region25: #{tpu_custom_call.1} parent=11 // pred_check
          %p431 = pneg %p288
        $region26: #{tpu_custom_call.1} parent=11 // pred_check_branch
          %433 = sbr.rel (%p431) target = $region28
        $region27: #{tpu_custom_call.1} parent=11 // pred_region
          %435 = vsyncadd [#allocation11], 0
          %s436 = sshll.u32 %s9, 4
          %s437 = int_to_ptr.hbm [resolvable:$true] %s436
          %s438 = sshll.u32 [#allocation10], 4
          %s439 = int_to_ptr.vmem [resolvable:$true] %s438
          %444 = dma.hbm_to_vmem [thread:$0]  %s437, 4096, %s439, [#allocation11], 256, 256, 16
        $region28: #{tpu_custom_call.1} parent=11 // pred_fallthru
          _
        // Predicated region
        $region29: #{tpu_custom_call.1} parent=11 // pred_check
          %p445 = pneg %p309
        $region30: #{tpu_custom_call.1} parent=11 // pred_check_branch
          %447 = sbr.rel (%p445) target = $region32
        $region31: #{tpu_custom_call.1} parent=11 // pred_region
          _
        $region32: #{tpu_custom_call.1} parent=11 // pred_fallthru
          _
        // Predicated region
        $region33: #{tpu_custom_call.1} parent=11 // pred_check
          %p448 = pneg %p330
        $region34: #{tpu_custom_call.1} parent=11 // pred_check_branch
          %450 = sbr.rel (%p448) target = $region36
        $region35: #{tpu_custom_call.1} parent=11 // pred_region
          %452 = vsyncadd [#allocation11], 0
          %s453 = sshll.u32 %s11, 4
          %s454 = int_to_ptr.hbm [resolvable:$true] %s453
          %s455 = sshll.u32 [#allocation12], 4
          %s456 = int_to_ptr.vmem [resolvable:$true] %s455
          %461 = dma.hbm_to_vmem [thread:$0]  %s454, 1024, %s456, [#allocation11], 128, 128, 8
        $region36: #{tpu_custom_call.1} parent=11 // pred_fallthru
          _
        // Predicated region
        $region37: #{tpu_custom_call.1} parent=11 // pred_check
          %p462 = pneg %p351
        $region38: #{tpu_custom_call.1} parent=11 // pred_check_branch
          %464 = sbr.rel (%p462) target = $region40
        $region39: #{tpu_custom_call.1} parent=11 // pred_region
          _
        $region40: #{tpu_custom_call.1} parent=11 // pred_fallthru
          _
      $region12: #{tpu_custom_call.1} parent=5 // pred_fallthru
        _
      %p465 = scmp.lt.s32.totalorder %s34, 8
      // Predicated region
      $region41: #{tpu_custom_call.1} parent=5 // pred_check
        %p466 = pneg %p465
      $region42: #{tpu_custom_call.1} parent=5 // pred_check_branch
        %468 = sbr.rel (%p466) target = $region44
      $region43: #{tpu_custom_call.1} parent=5 // pred_region
        // Predicated region
        $region45: #{tpu_custom_call.1} parent=43 // pred_check
          %p469 = pneg %p66
        $region46: #{tpu_custom_call.1} parent=43 // pred_check_branch
          %471 = sbr.rel (%p469) target = $region48
        $region47: #{tpu_custom_call.1} parent=43 // pred_region
          %p472 = scmp.lt.s32.totalorder %s41, 1
          %s473 = scalar_select %p472, %s41, 1
          %s474 = smul.addr %s473, 8
          %s475 = scalar_lea.vmem %s0, %s474
        $region48: #{tpu_custom_call.1} parent=43 // pred_fallthru
          _
        // Predicated region
        $region49: #{tpu_custom_call.1} parent=43 // pred_check
          %p476 = pneg %p92
        $region50: #{tpu_custom_call.1} parent=43 // pred_check_branch
          %478 = sbr.rel (%p476) target = $region52
        $region51: #{tpu_custom_call.1} parent=43 // pred_region
          %p479 = scmp.lt.s32.totalorder %s41, 1
          %s480 = scalar_select %p479, %s41, 1
          %s481 = smul.addr %s480, 8
          %s482 = scalar_lea.vmem %s1, %s481
        $region52: #{tpu_custom_call.1} parent=43 // pred_fallthru
          _
        // Predicated region
        $region53: #{tpu_custom_call.1} parent=43 // pred_check
          %p483 = pneg %p118
        $region54: #{tpu_custom_call.1} parent=43 // pred_check_branch
          %485 = sbr.rel (%p483) target = $region56
        $region55: #{tpu_custom_call.1} parent=43 // pred_region
          %p486 = scmp.lt.s32.totalorder %s41, 1
          %s487 = scalar_select %p486, %s41, 1
          %s488 = smul.addr %s487, 8
          %s489 = scalar_lea.vmem %s2, %s488
        $region56: #{tpu_custom_call.1} parent=43 // pred_fallthru
          _
        // Predicated region
        $region57: #{tpu_custom_call.1} parent=43 // pred_check
          %p490 = pneg %p144
        $region58: #{tpu_custom_call.1} parent=43 // pred_check_branch
          %492 = sbr.rel (%p490) target = $region60
        $region59: #{tpu_custom_call.1} parent=43 // pred_region
          %s493 = sand.u32 %s134, 1
          %s494 = scalar_lea.sflag [#allocation5], %s493
          %s495 = sand.u32 %s134, 1
          %s496 = smul.addr %s495, 128
          %s497 = scalar_lea.vmem [#allocation4], %s496
          %s498 = smul.u32 8, %s41
          %500 = vsyncadd %s494, 0
          %s501 = smul.addr %s498, 2
          %s502 = smul.addr %s501, 8
          %s503 = scalar_lea.hbm %s3, %s502
          %s504 = sshll.u32 %s503, 4
          %s505 = int_to_ptr.hbm [resolvable:$true] %s504
          %s506 = sshll.u32 %s497, 4
          %s507 = int_to_ptr.vmem [resolvable:$true] %s506
          %512 = dma.hbm_to_vmem [thread:$0]  %s505, 2048, %s507, %s494, 128, 128, 8
        $region60: #{tpu_custom_call.1} parent=43 // pred_fallthru
          _
        // Predicated region
        $region61: #{tpu_custom_call.1} parent=43 // pred_check
          %p513 = pneg %p170
        $region62: #{tpu_custom_call.1} parent=43 // pred_check_branch
          %515 = sbr.rel (%p513) target = $region64
        $region63: #{tpu_custom_call.1} parent=43 // pred_region
          %s516 = sand.u32 %s34, 1
          %s517 = scalar_lea.sflag [#allocation8], %s516
          %s518 = sand.u32 %s160, 1
          %s519 = smul.addr %s518, 128
          %s520 = scalar_lea.vmem [#allocation7], %s519
          %s521 = smul.u32 8, %s41
          %523 = vsyncadd %s517, 0
          %s524 = smul.addr %s521, 2
          %s525 = smul.addr %s524, 8
          %s526 = scalar_lea.hbm %s4, %s525
          %s527 = sshll.u32 %s526, 4
          %s528 = int_to_ptr.hbm [resolvable:$true] %s527
          %s529 = sshll.u32 %s520, 4
          %s530 = int_to_ptr.vmem [resolvable:$true] %s529
          %535 = dma.hbm_to_vmem [thread:$0]  %s528, 2048, %s530, %s517, 128, 128, 8
        $region64: #{tpu_custom_call.1} parent=43 // pred_fallthru
          _
        // Predicated region
        $region65: #{tpu_custom_call.1} parent=43 // pred_check
          %p536 = pneg %p198
        $region66: #{tpu_custom_call.1} parent=43 // pred_check_branch
          %538 = sbr.rel (%p536) target = $region68
        $region67: #{tpu_custom_call.1} parent=43 // pred_region
          %s539 = sand.u32 %s34, 1
          %s540 = scalar_lea.sflag [#allocation8], %s539
          %s541 = sand.u32 %s188, 1
          %s542 = smul.addr %s541, 16
          %s543 = scalar_lea.vmem [#allocation9], %s542
          %s544 = smul.u32 2, %s42
          %546 = vsyncadd %s540, 0
          %s547 = smul.addr %s544, 2
          %s548 = sadd.s32 %s41, %s547
          %s549 = smul.addr %s548, 8
          %s550 = scalar_lea.hbm %s5, %s549
          %s551 = sshll.u32 %s550, 4
          %s552 = int_to_ptr.hbm [resolvable:$true] %s551
          %s553 = sshll.u32 %s543, 4
          %s554 = int_to_ptr.vmem [resolvable:$true] %s553
          %559 = dma.hbm_to_vmem [thread:$0]  %s552, 256, %s554, %s540, 256, 128, 8
        $region68: #{tpu_custom_call.1} parent=43 // pred_fallthru
          _
      $region44: #{tpu_custom_call.1} parent=5 // pred_fallthru
        _
      %p560 = scmp.le.s32.totalorder 1, %s34
      %p561 = scmp.lt.s32.totalorder %s34, 9
      %p562 = pnand %p560, %p561
      %p563 = pneg %p562
      // Predicated region
      $region69: #{tpu_custom_call.1} parent=5 // pred_check
        _
      $region70: #{tpu_custom_call.1} parent=5 // pred_check_branch
        %565 = sbr.rel (%p562) target = $region72
      $region71: #{tpu_custom_call.1} parent=5 // pred_region
        %s566 = ssub.s32 %s34, 1
        %s567 = sand.u32 %s137, 1
        %s568 = scalar_lea.sflag [#allocation5], %s567
        %s569 = sand.u32 %s137, 1
        %s570 = smul.addr %s569, 128
        %s571 = scalar_lea.vmem [#allocation4], %s570
        // Predicated region
        $region73: #{tpu_custom_call.1} parent=71 // pred_check
          %p572 = pneg %p150
        $region74: #{tpu_custom_call.1} parent=71 // pred_check_branch
          %574 = sbr.rel (%p572) target = $region76
        $region75: #{tpu_custom_call.1} parent=71 // pred_region
          %576 = dma.done %s568, 2048
        $region76: #{tpu_custom_call.1} parent=71 // pred_fallthru
          _
        %s577 = sand.u32 %s39, 1
        %s578 = scalar_lea.sflag [#allocation8], %s577
        %s579 = sand.u32 %s163, 1
        %s580 = smul.addr %s579, 128
        %s581 = scalar_lea.vmem [#allocation7], %s580
        // Predicated region
        $region77: #{tpu_custom_call.1} parent=71 // pred_check
          %p582 = pneg %p176
        $region78: #{tpu_custom_call.1} parent=71 // pred_check_branch
          %584 = sbr.rel (%p582) target = $region80
        $region79: #{tpu_custom_call.1} parent=71 // pred_region
          %586 = dma.done %s578, 2048
        $region80: #{tpu_custom_call.1} parent=71 // pred_fallthru
          _
        %s587 = sand.u32 %s39, 1
        %s588 = scalar_lea.sflag [#allocation8], %s587
        %s589 = sand.u32 %s191, 1
        %s590 = smul.addr %s589, 16
        %s591 = scalar_lea.vmem [#allocation9], %s590
        // Predicated region
        $region81: #{tpu_custom_call.1} parent=71 // pred_check
          %p592 = pneg %p204
        $region82: #{tpu_custom_call.1} parent=71 // pred_check_branch
          %594 = sbr.rel (%p592) target = $region84
        $region83: #{tpu_custom_call.1} parent=71 // pred_region
          %596 = dma.done %s588, 256
        $region84: #{tpu_custom_call.1} parent=71 // pred_fallthru
          _
        // Predicated region
        $region85: #{tpu_custom_call.1} parent=71 // pred_check
          %p597 = pneg %p288
        $region86: #{tpu_custom_call.1} parent=71 // pred_check_branch
          %599 = sbr.rel (%p597) target = $region88
        $region87: #{tpu_custom_call.1} parent=71 // pred_region
          %601 = dma.done [#allocation11], 4096
        $region88: #{tpu_custom_call.1} parent=71 // pred_fallthru
          _
        // Predicated region
        $region89: #{tpu_custom_call.1} parent=71 // pred_check
          %p602 = pneg %p330
        $region90: #{tpu_custom_call.1} parent=71 // pred_check_branch
          %604 = sbr.rel (%p602) target = $region92
        $region91: #{tpu_custom_call.1} parent=71 // pred_region
          %606 = dma.done [#allocation11], 1024
        $region92: #{tpu_custom_call.1} parent=71 // pred_fallthru
          _
        %p607 = scmp.lt.s32.totalorder %s43, 1
        %s608 = scalar_select %p607, %s43, 1
        %s609 = smul.addr %s608, 8
        %s610 = scalar_lea.vmem %s0, %s609
        %p611 = pneg %p72
        %p612 = pneg %p69
        %p613 = scmp.lt.s32.totalorder %s43, 1
        %s614 = scalar_select %p613, %s43, 1
        %s615 = smul.addr %s614, 8
        %s616 = scalar_lea.vmem %s1, %s615
        %p617 = pneg %p98
        %p618 = pneg %p95
        %p619 = scmp.lt.s32.totalorder %s43, 1
        %s620 = scalar_select %p619, %s43, 1
        %s621 = smul.addr %s620, 8
        %s622 = scalar_lea.vmem %s2, %s621
        %p623 = pneg %p124
        %p624 = pneg %p121
        %s625 = sand.u32 %s137, 1
        %s626 = scalar_lea.sflag [#allocation5], %s625
        %s627 = sand.u32 %s137, 1
        %s628 = smul.addr %s627, 128
        %s629 = scalar_lea.vmem [#allocation4], %s628
        %p630 = pneg %p150
        %p631 = pneg %p147
        %s632 = sand.u32 %s39, 1
        %s633 = scalar_lea.sflag [#allocation8], %s632
        %s634 = sand.u32 %s163, 1
        %s635 = smul.addr %s634, 128
        %s636 = scalar_lea.vmem [#allocation7], %s635
        %p637 = pneg %p176
        %p638 = pneg %p173
        %s639 = sand.u32 %s39, 1
        %s640 = scalar_lea.sflag [#allocation8], %s639
        %s641 = sand.u32 %s191, 1
        %s642 = smul.addr %s641, 16
        %s643 = scalar_lea.vmem [#allocation9], %s642
        %p644 = pneg %p204
        %p645 = pneg %p201
        %p646 = pneg %p225
        %p647 = pneg %p222
        %p648 = pneg %p246
        %p649 = pneg %p243
        %p650 = pneg %p267
        %p651 = pneg %p264
        %p652 = pneg %p288
        %p653 = pneg %p285
        %p654 = pneg %p309
        %p655 = pneg %p306
        %p656 = pneg %p330
        %p657 = pneg %p327
        %p658 = pneg %p351
        %p659 = pneg %p348
        %p660 = pneg %p379
        %p661 = pneg %p376
        %s662 = sand.u32 %s366, 1
        %s663 = scalar_lea.sflag [#allocation6], %s662
        %s664 = sand.u32 %s366, 1
        %s665 = smul.addr %s664, 16
        %s666 = scalar_lea.vmem [#allocation13], %s665
        %p667 = pneg %p407
        %p668 = pneg %p404
        %s669 = sand.u32 %s394, 1
        %s670 = scalar_lea.sflag [#allocation15], %s669
        %s671 = sand.u32 %s394, 1
        %s672 = smul.addr %s671, 16
        %s673 = scalar_lea.vmem [#allocation14], %s672
        %p674 = scmp.lt.s32.totalorder %s43, 1
        %s675 = scalar_select %p674, %s43, 1
        %s676 = smul.addr %s675, 8
        %s677 = scalar_lea.vmem %s0, %s676
        %p678 = scmp.lt.s32.totalorder %s43, 1
        %s679 = scalar_select %p678, %s43, 1
        %s680 = smul.addr %s679, 8
        %s681 = scalar_lea.vmem %s1, %s680
        %p682 = scmp.lt.s32.totalorder %s43, 1
        %s683 = scalar_select %p682, %s43, 1
        %s684 = smul.addr %s683, 8
        %s685 = scalar_lea.vmem %s2, %s684
        %s686 = smul.u32 8, %s43
        %s687 = smul.u32 8, %s43
        %s688 = smul.u32 2, %s44
        %s689 = smul.u32 2, %s44
        %s690 = smul.u32 2, %s44
        %p691 = scmp.eq.s32.totalorder %s44, 0
        // Predicated region
        $region93: #{tpu_custom_call.1} parent=71 // pred_check
          %p692 = pneg %p691
        $region94: #{tpu_custom_call.1} parent=71 // pred_check_branch
          %694 = sbr.rel (%p692) target = $region96
        $region95: #{tpu_custom_call.1} parent=71 // pred_region
          %v695 = vld [vmem:[%s681] sm:$0xff]
          %vm696 = vcmask 523264
          %697 = vst.msk [vmem:[#allocation2] sm:$0xff] %vm696, %v695
          %v698 = vld [vmem:[%s685] sm:$0xff]
          %699 = vst.msk [vmem:[#allocation3] sm:$0xff] %vm696, %v698
        $region96: #{tpu_custom_call.1} parent=71 // pred_fallthru
          _
        %v700 = vld [vmem:[%s571] sm:$0xff]
        %v701 = vld [vmem:[%s571 + $0x8] sm:$0xff]
        %v702 = vld [vmem:[%s571 + $0x10] sm:$0xff]
        %v703 = vld [vmem:[%s571 + $0x18] sm:$0xff]
        %v704 = vld [vmem:[%s571 + $0x20] sm:$0xff]
        %v705 = vld [vmem:[%s571 + $0x28] sm:$0xff]
        %v706 = vld [vmem:[%s571 + $0x30] sm:$0xff]
        %v707 = vld [vmem:[%s571 + $0x38] sm:$0xff]
        %v708 = vld [vmem:[%s571 + $0x40] sm:$0xff]
        %v709 = vld [vmem:[%s571 + $0x48] sm:$0xff]
        %v710 = vld [vmem:[%s571 + $0x50] sm:$0xff]
        %v711 = vld [vmem:[%s571 + $0x58] sm:$0xff]
        %v712 = vld [vmem:[%s571 + $0x60] sm:$0xff]
        %v713 = vld [vmem:[%s571 + $0x68] sm:$0xff]
        %v714 = vld [vmem:[%s571 + $0x70] sm:$0xff]
        %v715 = vld [vmem:[%s571 + $0x78] sm:$0xff]
        %v716 = vld [vmem:[%s581] sm:$0xff]
        %v717 = vld [vmem:[%s581 + $0x8] sm:$0xff]
        %v718 = vld [vmem:[%s581 + $0x10] sm:$0xff]
        %v719 = vld [vmem:[%s581 + $0x18] sm:$0xff]
        %v720 = vld [vmem:[%s581 + $0x20] sm:$0xff]
        %v721 = vld [vmem:[%s581 + $0x28] sm:$0xff]
        %v722 = vld [vmem:[%s581 + $0x30] sm:$0xff]
        %v723 = vld [vmem:[%s581 + $0x38] sm:$0xff]
        %v724 = vld [vmem:[%s581 + $0x40] sm:$0xff]
        %v725 = vld [vmem:[%s581 + $0x48] sm:$0xff]
        %v726 = vld [vmem:[%s581 + $0x50] sm:$0xff]
        %v727 = vld [vmem:[%s581 + $0x58] sm:$0xff]
        %v728 = vld [vmem:[%s581 + $0x60] sm:$0xff]
        %v729 = vld [vmem:[%s581 + $0x68] sm:$0xff]
        %v730 = vld [vmem:[%s581 + $0x70] sm:$0xff]
        %v731 = vld [vmem:[%s581 + $0x78] sm:$0xff]
        %v732 = vld [vmem:[%s677] sm:$0xff]
        %v733 = vld [vmem:[%s7] sm:$0x1]
        %v734 = vld [vmem:[%s6] sm:$0xff]
        %v735 = vld [vmem:[%s6 + $0x8] sm:$0xff]
        %v736 = vld [vmem:[%s6 + $0x10] sm:$0xff]
        %v737 = vld [vmem:[%s6 + $0x18] sm:$0xff]
        %v738 = vld [vmem:[%s6 + $0x20] sm:$0xff]
        %v739 = vld [vmem:[%s6 + $0x28] sm:$0xff]
        %v740 = vld [vmem:[%s6 + $0x30] sm:$0xff]
        %v741 = vld [vmem:[%s6 + $0x38] sm:$0xff]
        %v742 = vld [vmem:[#allocation10] sm:$0xff]
        %v743 = vld [vmem:[#allocation10 + $0x8] sm:$0xff]
        %v744 = vld [vmem:[#allocation10 + $0x10] sm:$0xff]
        %v745 = vld [vmem:[#allocation10 + $0x18] sm:$0xff]
        %v746 = vld [vmem:[#allocation10 + $0x20] sm:$0xff]
        %v747 = vld [vmem:[#allocation10 + $0x28] sm:$0xff]
        %v748 = vld [vmem:[#allocation10 + $0x30] sm:$0xff]
        %v749 = vld [vmem:[#allocation10 + $0x38] sm:$0xff]
        %v750 = vld [vmem:[#allocation10 + $0x40] sm:$0xff]
        %v751 = vld [vmem:[#allocation10 + $0x48] sm:$0xff]
        %v752 = vld [vmem:[#allocation10 + $0x50] sm:$0xff]
        %v753 = vld [vmem:[#allocation10 + $0x58] sm:$0xff]
        %v754 = vld [vmem:[#allocation10 + $0x60] sm:$0xff]
        %v755 = vld [vmem:[#allocation10 + $0x68] sm:$0xff]
        %v756 = vld [vmem:[#allocation10 + $0x70] sm:$0xff]
        %v757 = vld [vmem:[#allocation10 + $0x78] sm:$0xff]
        %v758 = vld [vmem:[#allocation10 + $0x80] sm:$0xff]
        %v759 = vld [vmem:[#allocation10 + $0x88] sm:$0xff]
        %v760 = vld [vmem:[#allocation10 + $0x90] sm:$0xff]
        %v761 = vld [vmem:[#allocation10 + $0x98] sm:$0xff]
        %v762 = vld [vmem:[#allocation10 + $0xa0] sm:$0xff]
        %v763 = vld [vmem:[#allocation10 + $0xa8] sm:$0xff]
        %v764 = vld [vmem:[#allocation10 + $0xb0] sm:$0xff]
        %v765 = vld [vmem:[#allocation10 + $0xb8] sm:$0xff]
        %v766 = vld [vmem:[#allocation10 + $0xc0] sm:$0xff]
        %v767 = vld [vmem:[#allocation10 + $0xc8] sm:$0xff]
        %v768 = vld [vmem:[#allocation10 + $0xd0] sm:$0xff]
        %v769 = vld [vmem:[#allocation10 + $0xd8] sm:$0xff]
        %v770 = vld [vmem:[#allocation10 + $0xe0] sm:$0xff]
        %v771 = vld [vmem:[#allocation10 + $0xe8] sm:$0xff]
        %v772 = vld [vmem:[#allocation10 + $0xf0] sm:$0xff]
        %v773 = vld [vmem:[#allocation10 + $0xf8] sm:$0xff]
        %v774 = vld [vmem:[#allocation12] sm:$0xff]
        %v775 = vld [vmem:[#allocation12 + $0x8] sm:$0xff]
        %v776 = vld [vmem:[#allocation12 + $0x10] sm:$0xff]
        %v777 = vld [vmem:[#allocation12 + $0x18] sm:$0xff]
        %v778 = vld [vmem:[#allocation12 + $0x20] sm:$0xff]
        %v779 = vld [vmem:[#allocation12 + $0x28] sm:$0xff]
        %v780 = vld [vmem:[#allocation12 + $0x30] sm:$0xff]
        %v781 = vld [vmem:[#allocation12 + $0x38] sm:$0xff]
        %v782 = vld [vmem:[%s12] sm:$0x1]
        %v783 = vld [vmem:[%s591] sm:$0xff]
        %v784 = vld [vmem:[%s591 + $0x8] sm:$0xff]
        %v785 = vld [vmem:[%s8] sm:$0xff]
        %v786 = vld [vmem:[%s8 + $0x8] sm:$0xff]
        %v787 = vld [vmem:[%s8 + $0x10] sm:$0xff]
        %v788 = vld [vmem:[%s8 + $0x18] sm:$0xff]
        %v789 = vld [vmem:[%s8 + $0x20] sm:$0xff]
        %v790 = vld [vmem:[%s8 + $0x28] sm:$0xff]
        %v791 = vld [vmem:[%s8 + $0x30] sm:$0xff]
        %v792 = vld [vmem:[%s8 + $0x38] sm:$0xff]
        %v793 = vld [vmem:[%s10] sm:$0x3]
        %v795 = vperm.slane %v793, 0
        %v796 = vperm.slane %v793, 1
        %vm799 = vcmask 261120
        %v801 = vsel %vm799, %v783, 0
        %v804 = vsel %vm799, %v784, 0
        %806 = vmatpush.msra.mxu0 0.0
        %807 = vmatpush.msra.mxu0 0.0
        %808 = vmatpush.msra.mxu0 0.0
        %809 = vmatpush.msra.mxu0 0.0
        %810 = vmatpush.msra.mxu0 0.0
        %811 = vmatpush.msra.mxu0 0.0
        %812 = vmatpush.msra.mxu0 0.0
        %813 = vmatpush.msra.mxu0 0.0
        %814 = vmatpush.msra.mxu0 0.0
        %815 = vmatpush.msra.mxu0 0.0
        %816 = vmatpush.msra.mxu0 0.0
        %817 = vmatpush.msra.mxu0 0.0
        %818 = vmatpush.msra.mxu0 %v791
        %819 = vmatpush.msra.mxu0 %v789
        %820 = vmatpush.msra.mxu0 %v787
        %821 = vmatpush.msra.mxu0 %v785
        %822 = vmatmul.f32.gmra.mxu0 %v801
        %v823 = vpop.f32.mrf.mxu0
        %v824 = vadd.f32 %v795, %v823
        %825 = vmatmul.f32.gmra.mxu0 %v804
        %v826 = vpop.f32.mrf.mxu0
        %v827 = vadd.f32 %v795, %v826
        %828 = vdwg.mxu0
        %829 = vmatpush.msra.mxu0 0.0
        %830 = vmatpush.msra.mxu0 0.0
        %831 = vmatpush.msra.mxu0 0.0
        %832 = vmatpush.msra.mxu0 0.0
        %833 = vmatpush.msra.mxu0 0.0
        %834 = vmatpush.msra.mxu0 0.0
        %835 = vmatpush.msra.mxu0 0.0
        %836 = vmatpush.msra.mxu0 0.0
        %837 = vmatpush.msra.mxu0 0.0
        %838 = vmatpush.msra.mxu0 0.0
        %839 = vmatpush.msra.mxu0 0.0
        %840 = vmatpush.msra.mxu0 0.0
        %841 = vmatpush.msra.mxu0 %v792
        %842 = vmatpush.msra.mxu0 %v790
        %843 = vmatpush.msra.mxu0 %v788
        %844 = vmatpush.msra.mxu0 %v786
        %845 = vmatmul.f32.gmra.mxu0 %v801
        %v846 = vpop.f32.mrf.mxu0
        %v847 = vadd.f32 %v796, %v846
        %848 = vmatmul.f32.gmra.mxu0 %v804
        %v849 = vpop.f32.mrf.mxu0
        %v850 = vadd.f32 %v796, %v849
        %851 = vdwg.mxu0
        %s852 = smul.u32 %s44, 2
        %v853 = vld [vmem:[#allocation2] sm:$0xff]
        %v854 = vld [vmem:[#allocation3] sm:$0xff]
        %vm855 = vcmask 523264
        %v857 = vsel %vm855, %v853, 0
        %859 = vmatpush.msra.mxu0 0.0
        %860 = vmatpush.msra.mxu0 0.0
        %861 = vmatpush.msra.mxu0 0.0
        %862 = vmatpush.msra.mxu0 0.0
        %863 = vmatpush.msra.mxu0 0.0
        %864 = vmatpush.msra.mxu0 0.0
        %865 = vmatpush.msra.mxu0 0.0
        %866 = vmatpush.msra.mxu0 0.0
        %867 = vmatpush.msra.mxu0 %v741
        %868 = vmatpush.msra.mxu0 %v740
        %869 = vmatpush.msra.mxu0 %v739
        %870 = vmatpush.msra.mxu0 %v738
        %871 = vmatpush.msra.mxu0 %v737
        %872 = vmatpush.msra.mxu0 %v736
        %873 = vmatpush.msra.mxu0 %v735
        %874 = vmatpush.msra.mxu0 %v734
        %875 = vmatmul.f32.gmra.mxu0 %v857
        %v876 = vpop.f32.mrf.mxu0
        %v877 = vadd.f32 0.0, %v876
        %878 = vdwg.mxu0
        %v880 = vrot.slane %v877, 1
        %v881 = vrot.slane %v877, 2
        %v882 = vrot.slane %v877, 3
        %v883 = vrot.slane %v877, 4
        %v884 = vrot.slane %v877, 5
        %v885 = vrot.slane %v877, 6
        %v886 = vrot.slane %v877, 7
        %v887 = vperm.slane %v877, 0
        %v888 = vperm.slane %v880, 0
        %v889 = vperm.slane %v881, 0
        %v890 = vperm.slane %v882, 0
        %v891 = vperm.slane %v883, 0
        %v892 = vperm.slane %v884, 0
        %v893 = vperm.slane %v885, 0
        %v894 = vperm.slane %v886, 0
        %v903 = vadd.f32 %v716, %v887
        %v904 = vadd.f32 %v717, %v887
        %v905 = vadd.f32 %v718, %v888
        %v906 = vadd.f32 %v719, %v888
        %v907 = vadd.f32 %v720, %v889
        %v908 = vadd.f32 %v721, %v889
        %v909 = vadd.f32 %v722, %v890
        %v910 = vadd.f32 %v723, %v890
        %v911 = vadd.f32 %v724, %v891
        %v912 = vadd.f32 %v725, %v891
        %v913 = vadd.f32 %v726, %v892
        %v914 = vadd.f32 %v727, %v892
        %v915 = vadd.f32 %v728, %v893
        %v916 = vadd.f32 %v729, %v893
        %v917 = vadd.f32 %v730, %v894
        %v918 = vadd.f32 %v731, %v894
        %v919 = vmax.f32 %v903, 0.0
        %v920 = vmax.f32 %v904, 0.0
        %v921 = vmax.f32 %v905, 0.0
        %v922 = vmax.f32 %v906, 0.0
        %v923 = vmax.f32 %v907, 0.0
        %v924 = vmax.f32 %v908, 0.0
        %v925 = vmax.f32 %v909, 0.0
        %v926 = vmax.f32 %v910, 0.0
        %v927 = vmax.f32 %v911, 0.0
        %v928 = vmax.f32 %v912, 0.0
        %v929 = vmax.f32 %v913, 0.0
        %v930 = vmax.f32 %v914, 0.0
        %v931 = vmax.f32 %v915, 0.0
        %v932 = vmax.f32 %v916, 0.0
        %v933 = vmax.f32 %v917, 0.0
        %v934 = vmax.f32 %v918, 0.0
        %v936 = vperm.slane %v733, 0
        %v938 = vmul.f32 %v919, %v936
        %v939 = vmul.f32 %v920, %v936
        %v940 = vmul.f32 %v921, %v936
        %v941 = vmul.f32 %v922, %v936
        %v942 = vmul.f32 %v923, %v936
        %v943 = vmul.f32 %v924, %v936
        %v944 = vmul.f32 %v925, %v936
        %v945 = vmul.f32 %v926, %v936
        %v946 = vmul.f32 %v927, %v936
        %v947 = vmul.f32 %v928, %v936
        %v948 = vmul.f32 %v929, %v936
        %v949 = vmul.f32 %v930, %v936
        %v950 = vmul.f32 %v931, %v936
        %v951 = vmul.f32 %v932, %v936
        %v952 = vmul.f32 %v933, %v936
        %v953 = vmul.f32 %v934, %v936
        %v954 = vsel %vm799, %v938, 0.0
        %955 = vadd.xlane.f32.xlu0 %v954
        %v956 = vpop.xlane.xlu0 %955
        %v957 = vsel %vm799, %v939, 0.0
        %958 = vadd.xlane.f32.xlu0 %v957
        %v959 = vpop.xlane.xlu0 %958
        %v960 = vsel %vm799, %v940, 0.0
        %961 = vadd.xlane.f32.xlu0 %v960
        %v962 = vpop.xlane.xlu0 %961
        %v963 = vsel %vm799, %v941, 0.0
        %964 = vadd.xlane.f32.xlu0 %v963
        %v965 = vpop.xlane.xlu0 %964
        %v966 = vsel %vm799, %v942, 0.0
        %967 = vadd.xlane.f32.xlu0 %v966
        %v968 = vpop.xlane.xlu0 %967
        %v969 = vsel %vm799, %v943, 0.0
        %970 = vadd.xlane.f32.xlu0 %v969
        %v971 = vpop.xlane.xlu0 %970
        %v972 = vsel %vm799, %v944, 0.0
        %973 = vadd.xlane.f32.xlu0 %v972
        %v974 = vpop.xlane.xlu0 %973
        %v975 = vsel %vm799, %v945, 0.0
        %976 = vadd.xlane.f32.xlu0 %v975
        %v977 = vpop.xlane.xlu0 %976
        %v978 = vsel %vm799, %v946, 0.0
        %979 = vadd.xlane.f32.xlu0 %v978
        %v980 = vpop.xlane.xlu0 %979
        %v981 = vsel %vm799, %v947, 0.0
        %982 = vadd.xlane.f32.xlu0 %v981
        %v983 = vpop.xlane.xlu0 %982
        %v984 = vsel %vm799, %v948, 0.0
        %985 = vadd.xlane.f32.xlu0 %v984
        %v986 = vpop.xlane.xlu0 %985
        %v987 = vsel %vm799, %v949, 0.0
        %988 = vadd.xlane.f32.xlu0 %v987
        %v989 = vpop.xlane.xlu0 %988
        %v990 = vsel %vm799, %v950, 0.0
        %991 = vadd.xlane.f32.xlu0 %v990
        %v992 = vpop.xlane.xlu0 %991
        %v993 = vsel %vm799, %v951, 0.0
        %994 = vadd.xlane.f32.xlu0 %v993
        %v995 = vpop.xlane.xlu0 %994
        %v996 = vsel %vm799, %v952, 0.0
        %997 = vadd.xlane.f32.xlu0 %v996
        %v998 = vpop.xlane.xlu0 %997
        %v999 = vsel %vm799, %v953, 0.0
        %1000 = vadd.xlane.f32.xlu0 %v999
        %v1001 = vpop.xlane.xlu0 %1000
        %v1018 = vlaneseq
        %v1019 = vand.u32 %v1018, 127
        %v1020 = vperm.slane %v956, %v1019
        %v1021 = vadd.s32 %v1019, 4294967288
        %v1022 = vperm.slane %v959, %v1021
        %vm1023 = vcmask 130112
        %v1024 = vsel %vm1023, %v1022, %v1020
        %v1025 = vperm.slane %v962, %v1019
        %v1026 = vperm.slane %v965, %v1021
        %v1027 = vsel %vm1023, %v1026, %v1025
        %v1028 = vperm.slane %v968, %v1019
        %v1029 = vperm.slane %v971, %v1021
        %v1030 = vsel %vm1023, %v1029, %v1028
        %v1031 = vperm.slane %v974, %v1019
        %v1032 = vperm.slane %v977, %v1021
        %v1033 = vsel %vm1023, %v1032, %v1031
        %v1034 = vperm.slane %v980, %v1019
        %v1035 = vperm.slane %v983, %v1021
        %v1036 = vsel %vm1023, %v1035, %v1034
        %v1037 = vperm.slane %v986, %v1019
        %v1038 = vperm.slane %v989, %v1021
        %v1039 = vsel %vm1023, %v1038, %v1037
        %v1040 = vperm.slane %v992, %v1019
        %v1041 = vperm.slane %v995, %v1021
        %v1042 = vsel %vm1023, %v1041, %v1040
        %v1043 = vperm.slane %v998, %v1019
        %v1044 = vperm.slane %v1001, %v1021
        %v1045 = vsel %vm1023, %v1044, %v1043
        %vm1046 = vcmask 1041409
        %v1047 = vsel %vm1046, %v1027, %v1024
        %vm1048 = vcmask 1042434
        %v1049 = vsel %vm1048, %v1030, %v1047
        %vm1050 = vcmask 1043459
        %v1051 = vsel %vm1050, %v1033, %v1049
        %vm1052 = vcmask 1044484
        %v1053 = vsel %vm1052, %v1036, %v1051
        %vm1054 = vcmask 1045509
        %v1055 = vsel %vm1054, %v1039, %v1053
        %vm1056 = vcmask 1046534
        %v1057 = vsel %vm1056, %v1042, %v1055
        %vm1058 = vcmask 1047559
        %v1059 = vsel %vm1058, %v1045, %v1057
        %vm1061 = vcmask 130048
        %v1062 = vsel %vm1061, %v1059, -inf
        %1063 = vmax.xlane.f32.xlu0 %v1062
        %v1064 = vpop.xlane.xlu0 %1063
        %v1066 = vperm.slane %v1064, 0
        %v1067 = vperm.slane %v1064, 1
        %v1068 = vperm.slane %v1064, 2
        %v1069 = vperm.slane %v1064, 3
        %v1070 = vperm.slane %v1064, 4
        %v1071 = vperm.slane %v1064, 5
        %v1072 = vperm.slane %v1064, 6
        %v1073 = vperm.slane %v1064, 7
        %v1082 = vsub.f32 %v956, %v1066
        %v1083 = vsub.f32 %v959, %v1066
        %v1084 = vsub.f32 %v962, %v1067
        %v1085 = vsub.f32 %v965, %v1067
        %v1086 = vsub.f32 %v968, %v1068
        %v1087 = vsub.f32 %v971, %v1068
        %v1088 = vsub.f32 %v974, %v1069
        %v1089 = vsub.f32 %v977, %v1069
        %v1090 = vsub.f32 %v980, %v1070
        %v1091 = vsub.f32 %v983, %v1070
        %v1092 = vsub.f32 %v986, %v1071
        %v1093 = vsub.f32 %v989, %v1071
        %v1094 = vsub.f32 %v992, %v1072
        %v1095 = vsub.f32 %v995, %v1072
        %v1096 = vsub.f32 %v998, %v1073
        %v1097 = vsub.f32 %v1001, %v1073
        %v1098 = vmul.f32 %v1082, 1.442695
        %v1099 = vpow.pop %v1098
        %v1100 = vmul.f32 %v1083, 1.442695
        %v1101 = vpow.pop %v1100
        %v1102 = vmul.f32 %v1084, 1.442695
        %v1103 = vpow.pop %v1102
        %v1104 = vmul.f32 %v1085, 1.442695
        %v1105 = vpow.pop %v1104
        %v1106 = vmul.f32 %v1086, 1.442695
        %v1107 = vpow.pop %v1106
        %v1108 = vmul.f32 %v1087, 1.442695
        %v1109 = vpow.pop %v1108
        %v1110 = vmul.f32 %v1088, 1.442695
        %v1111 = vpow.pop %v1110
        %v1112 = vmul.f32 %v1089, 1.442695
        %v1113 = vpow.pop %v1112
        %v1114 = vmul.f32 %v1090, 1.442695
        %v1115 = vpow.pop %v1114
        %v1116 = vmul.f32 %v1091, 1.442695
        %v1117 = vpow.pop %v1116
        %v1118 = vmul.f32 %v1092, 1.442695
        %v1119 = vpow.pop %v1118
        %v1120 = vmul.f32 %v1093, 1.442695
        %v1121 = vpow.pop %v1120
        %v1122 = vmul.f32 %v1094, 1.442695
        %v1123 = vpow.pop %v1122
        %v1124 = vmul.f32 %v1095, 1.442695
        %v1125 = vpow.pop %v1124
        %v1126 = vmul.f32 %v1096, 1.442695
        %v1127 = vpow.pop %v1126
        %v1128 = vmul.f32 %v1097, 1.442695
        %v1129 = vpow.pop %v1128
        %1146 = vset.pattern.permute.xlu0 0
        %1147 = vperm.xlu0 %1146, %v1099
        %v1148 = vpop.permute.xlu0 %1147
        %1149 = vset.pattern.permute.xlu0 0
        %1150 = vperm.xlu0 %1149, %v1101
        %v1151 = vpop.permute.xlu0 %1150
        %1152 = vset.pattern.permute.xlu0 0
        %1153 = vperm.xlu0 %1152, %v1103
        %v1154 = vpop.permute.xlu0 %1153
        %1155 = vset.pattern.permute.xlu0 0
        %1156 = vperm.xlu0 %1155, %v1105
        %v1157 = vpop.permute.xlu0 %1156
        %1158 = vset.pattern.permute.xlu0 0
        %1159 = vperm.xlu0 %1158, %v1107
        %v1160 = vpop.permute.xlu0 %1159
        %1161 = vset.pattern.permute.xlu0 0
        %1162 = vperm.xlu0 %1161, %v1109
        %v1163 = vpop.permute.xlu0 %1162
        %1164 = vset.pattern.permute.xlu0 0
        %1165 = vperm.xlu0 %1164, %v1111
        %v1166 = vpop.permute.xlu0 %1165
        %1167 = vset.pattern.permute.xlu0 0
        %1168 = vperm.xlu0 %1167, %v1113
        %v1169 = vpop.permute.xlu0 %1168
        %1170 = vset.pattern.permute.xlu0 0
        %1171 = vperm.xlu0 %1170, %v1115
        %v1172 = vpop.permute.xlu0 %1171
        %1173 = vset.pattern.permute.xlu0 0
        %1174 = vperm.xlu0 %1173, %v1117
        %v1175 = vpop.permute.xlu0 %1174
        %1176 = vset.pattern.permute.xlu0 0
        %1177 = vperm.xlu0 %1176, %v1119
        %v1178 = vpop.permute.xlu0 %1177
        %1179 = vset.pattern.permute.xlu0 0
        %1180 = vperm.xlu0 %1179, %v1121
        %v1181 = vpop.permute.xlu0 %1180
        %1182 = vset.pattern.permute.xlu0 0
        %1183 = vperm.xlu0 %1182, %v1123
        %v1184 = vpop.permute.xlu0 %1183
        %1185 = vset.pattern.permute.xlu0 0
        %1186 = vperm.xlu0 %1185, %v1125
        %v1187 = vpop.permute.xlu0 %1186
        %1188 = vset.pattern.permute.xlu0 0
        %1189 = vperm.xlu0 %1188, %v1127
        %v1190 = vpop.permute.xlu0 %1189
        %1191 = vset.pattern.permute.xlu0 0
        %1192 = vperm.xlu0 %1191, %v1129
        %v1193 = vpop.permute.xlu0 %1192
        %v1194 = vperm.slane %v1148, %v1019
        %v1195 = vperm.slane %v1151, %v1021
        %v1196 = vsel %vm1023, %v1195, %v1194
        %v1197 = vperm.slane %v1154, %v1019
        %v1198 = vperm.slane %v1157, %v1021
        %v1199 = vsel %vm1023, %v1198, %v1197
        %v1200 = vperm.slane %v1160, %v1019
        %v1201 = vperm.slane %v1163, %v1021
        %v1202 = vsel %vm1023, %v1201, %v1200
        %v1203 = vperm.slane %v1166, %v1019
        %v1204 = vperm.slane %v1169, %v1021
        %v1205 = vsel %vm1023, %v1204, %v1203
        %v1206 = vperm.slane %v1172, %v1019
        %v1207 = vperm.slane %v1175, %v1021
        %v1208 = vsel %vm1023, %v1207, %v1206
        %v1209 = vperm.slane %v1178, %v1019
        %v1210 = vperm.slane %v1181, %v1021
        %v1211 = vsel %vm1023, %v1210, %v1209
        %v1212 = vperm.slane %v1184, %v1019
        %v1213 = vperm.slane %v1187, %v1021
        %v1214 = vsel %vm1023, %v1213, %v1212
        %v1215 = vperm.slane %v1190, %v1019
        %v1216 = vperm.slane %v1193, %v1021
        %v1217 = vsel %vm1023, %v1216, %v1215
        %v1218 = vsel %vm1046, %v1199, %v1196
        %v1219 = vsel %vm1048, %v1202, %v1218
        %v1220 = vsel %vm1050, %v1205, %v1219
        %v1221 = vsel %vm1052, %v1208, %v1220
        %v1222 = vsel %vm1054, %v1211, %v1221
        %v1223 = vsel %vm1056, %v1214, %v1222
        %v1224 = vsel %vm1058, %v1217, %v1223
        %v1226 = vsel %vm1061, %v1224, 0.0
        %1227 = vadd.xlane.f32.xlu0 %v1226
        %v1228 = vpop.xlane.xlu0 %1227
        %v1229 = vrcp.pop %v1228
        %v1230 = vmul.f32 %v1228, %v1229
        %v1231 = vsub.f32 1.0, %v1230
        %v1232 = vmul.f32 %v1229, %v1231
        %v1233 = vadd.f32 %v1229, %v1232
        %vm1234 = vweird.f32 %v1228
        %vm1235 = vweird.f32 %v1229
        %vm1236 = vmor %vm1234, %vm1235
        %v1237 = vsel %vm1236, %v1229, %v1233
        %v1238 = vand.u32 2147483647, %v1228
        %vm1239 = vcmp.eq.f32.partialorder %v1238, 8.507059e+37
        %v1240 = vand.u32 %v1228, 2147483648
        %v1241 = vor.u32 1.1754944e-38, %v1240
        %v1242 = vsel %vm1239, %v1241, %v1237
        %v1244 = vperm.slane %v1242, 0
        %v1245 = vperm.slane %v1242, 1
        %v1246 = vperm.slane %v1242, 2
        %v1247 = vperm.slane %v1242, 3
        %v1248 = vperm.slane %v1242, 4
        %v1249 = vperm.slane %v1242, 5
        %v1250 = vperm.slane %v1242, 6
        %v1251 = vperm.slane %v1242, 7
        %v1260 = vmul.f32 %v1099, %v1244
        %v1261 = vmul.f32 %v1101, %v1244
        %v1262 = vmul.f32 %v1103, %v1245
        %v1263 = vmul.f32 %v1105, %v1245
        %v1264 = vmul.f32 %v1107, %v1246
        %v1265 = vmul.f32 %v1109, %v1246
        %v1266 = vmul.f32 %v1111, %v1247
        %v1267 = vmul.f32 %v1113, %v1247
        %v1268 = vmul.f32 %v1115, %v1248
        %v1269 = vmul.f32 %v1117, %v1248
        %v1270 = vmul.f32 %v1119, %v1249
        %v1271 = vmul.f32 %v1121, %v1249
        %v1272 = vmul.f32 %v1123, %v1250
        %v1273 = vmul.f32 %v1125, %v1250
        %v1274 = vmul.f32 %v1127, %v1251
        %v1275 = vmul.f32 %v1129, %v1251
        %1277 = vset.pattern.permute.xlu0 0
        %1278 = vperm.xlu0 %1277, %v1260
        %v1279 = vpop.permute.xlu0 %1278
        %1282 = vset.pattern.permute.xlu0 0
        %1283 = vperm.xlu0 %1282, %v1261
        %v1284 = vpop.permute.xlu0 %1283
        %1287 = vset.pattern.permute.xlu0 0
        %1288 = vperm.xlu0 %1287, %v1262
        %v1289 = vpop.permute.xlu0 %1288
        %1292 = vset.pattern.permute.xlu0 0
        %1293 = vperm.xlu0 %1292, %v1263
        %v1294 = vpop.permute.xlu0 %1293
        %1297 = vset.pattern.permute.xlu0 0
        %1298 = vperm.xlu0 %1297, %v1264
        %v1299 = vpop.permute.xlu0 %1298
        %1302 = vset.pattern.permute.xlu0 0
        %1303 = vperm.xlu0 %1302, %v1265
        %v1304 = vpop.permute.xlu0 %1303
        %1307 = vset.pattern.permute.xlu0 0
        %1308 = vperm.xlu0 %1307, %v1266
        %v1309 = vpop.permute.xlu0 %1308
        %1312 = vset.pattern.permute.xlu0 0
        %1313 = vperm.xlu0 %1312, %v1267
        %v1314 = vpop.permute.xlu0 %1313
        %1317 = vset.pattern.permute.xlu0 0
        %1318 = vperm.xlu0 %1317, %v1268
        %v1319 = vpop.permute.xlu0 %1318
        %1322 = vset.pattern.permute.xlu0 0
        %1323 = vperm.xlu0 %1322, %v1269
        %v1324 = vpop.permute.xlu0 %1323
        %1327 = vset.pattern.permute.xlu0 0
        %1328 = vperm.xlu0 %1327, %v1270
        %v1329 = vpop.permute.xlu0 %1328
        %1332 = vset.pattern.permute.xlu0 0
        %1333 = vperm.xlu0 %1332, %v1271
        %v1334 = vpop.permute.xlu0 %1333
        %1337 = vset.pattern.permute.xlu0 0
        %1338 = vperm.xlu0 %1337, %v1272
        %v1339 = vpop.permute.xlu0 %1338
        %1342 = vset.pattern.permute.xlu0 0
        %1343 = vperm.xlu0 %1342, %v1273
        %v1344 = vpop.permute.xlu0 %1343
        %1347 = vset.pattern.permute.xlu0 0
        %1348 = vperm.xlu0 %1347, %v1274
        %v1349 = vpop.permute.xlu0 %1348
        %1352 = vset.pattern.permute.xlu0 0
        %1353 = vperm.xlu0 %1352, %v1275
        %v1354 = vpop.permute.xlu0 %1353
        %v1356 = vmul.f32 %v700, %v1279
        %v1357 = vmul.f32 %v701, %v1284
        %v1358 = vmul.f32 %v702, %v1289
        %v1359 = vmul.f32 %v703, %v1294
        %v1360 = vmul.f32 %v704, %v1299
        %v1361 = vmul.f32 %v705, %v1304
        %v1362 = vmul.f32 %v706, %v1309
        %v1363 = vmul.f32 %v707, %v1314
        %v1364 = vmul.f32 %v708, %v1319
        %v1365 = vmul.f32 %v709, %v1324
        %v1366 = vmul.f32 %v710, %v1329
        %v1367 = vmul.f32 %v711, %v1334
        %v1368 = vmul.f32 %v712, %v1339
        %v1369 = vmul.f32 %v713, %v1344
        %v1370 = vmul.f32 %v714, %v1349
        %v1371 = vmul.f32 %v715, %v1354
        %v1372 = vsel %vm855, %v1356, 0.0
        %v1373 = vsel %vm855, %v1357, 0.0
        %v1374 = vadd.f32 %v1372, %v1373
        %v1375 = vrot.slane %v1374, 4
        %v1376 = vadd.f32 %v1374, %v1375
        %v1377 = vrot.slane %v1376, 2
        %v1378 = vadd.f32 %v1376, %v1377
        %v1379 = vrot.slane %v1378, 1
        %v1380 = vadd.f32 %v1378, %v1379
        %v1381 = vsel %vm855, %v1358, 0.0
        %v1382 = vsel %vm855, %v1359, 0.0
        %v1383 = vadd.f32 %v1381, %v1382
        %v1384 = vrot.slane %v1383, 4
        %v1385 = vadd.f32 %v1383, %v1384
        %v1386 = vrot.slane %v1385, 2
        %v1387 = vadd.f32 %v1385, %v1386
        %v1388 = vrot.slane %v1387, 1
        %v1389 = vadd.f32 %v1387, %v1388
        %v1390 = vsel %vm855, %v1360, 0.0
        %v1391 = vsel %vm855, %v1361, 0.0
        %v1392 = vadd.f32 %v1390, %v1391
        %v1393 = vrot.slane %v1392, 4
        %v1394 = vadd.f32 %v1392, %v1393
        %v1395 = vrot.slane %v1394, 2
        %v1396 = vadd.f32 %v1394, %v1395
        %v1397 = vrot.slane %v1396, 1
        %v1398 = vadd.f32 %v1396, %v1397
        %v1399 = vsel %vm855, %v1362, 0.0
        %v1400 = vsel %vm855, %v1363, 0.0
        %v1401 = vadd.f32 %v1399, %v1400
        %v1402 = vrot.slane %v1401, 4
        %v1403 = vadd.f32 %v1401, %v1402
        %v1404 = vrot.slane %v1403, 2
        %v1405 = vadd.f32 %v1403, %v1404
        %v1406 = vrot.slane %v1405, 1
        %v1407 = vadd.f32 %v1405, %v1406
        %v1408 = vsel %vm855, %v1364, 0.0
        %v1409 = vsel %vm855, %v1365, 0.0
        %v1410 = vadd.f32 %v1408, %v1409
        %v1411 = vrot.slane %v1410, 4
        %v1412 = vadd.f32 %v1410, %v1411
        %v1413 = vrot.slane %v1412, 2
        %v1414 = vadd.f32 %v1412, %v1413
        %v1415 = vrot.slane %v1414, 1
        %v1416 = vadd.f32 %v1414, %v1415
        %v1417 = vsel %vm855, %v1366, 0.0
        %v1418 = vsel %vm855, %v1367, 0.0
        %v1419 = vadd.f32 %v1417, %v1418
        %v1420 = vrot.slane %v1419, 4
        %v1421 = vadd.f32 %v1419, %v1420
        %v1422 = vrot.slane %v1421, 2
        %v1423 = vadd.f32 %v1421, %v1422
        %v1424 = vrot.slane %v1423, 1
        %v1425 = vadd.f32 %v1423, %v1424
        %v1426 = vsel %vm855, %v1368, 0.0
        %v1427 = vsel %vm855, %v1369, 0.0
        %v1428 = vadd.f32 %v1426, %v1427
        %v1429 = vrot.slane %v1428, 4
        %v1430 = vadd.f32 %v1428, %v1429
        %v1431 = vrot.slane %v1430, 2
        %v1432 = vadd.f32 %v1430, %v1431
        %v1433 = vrot.slane %v1432, 1
        %v1434 = vadd.f32 %v1432, %v1433
        %v1435 = vsel %vm855, %v1370, 0.0
        %v1436 = vsel %vm855, %v1371, 0.0
        %v1437 = vadd.f32 %v1435, %v1436
        %v1438 = vrot.slane %v1437, 4
        %v1439 = vadd.f32 %v1437, %v1438
        %v1440 = vrot.slane %v1439, 2
        %v1441 = vadd.f32 %v1439, %v1440
        %v1442 = vrot.slane %v1441, 1
        %v1443 = vadd.f32 %v1441, %v1442
        %v1452 = vsel %vm1046, %v1389, %v1380
        %v1453 = vsel %vm1048, %v1398, %v1452
        %v1454 = vsel %vm1050, %v1407, %v1453
        %v1455 = vsel %vm1052, %v1416, %v1454
        %v1456 = vsel %vm1054, %v1425, %v1455
        %v1457 = vsel %vm1056, %v1434, %v1456
        %v1458 = vsel %vm1058, %v1443, %v1457
        %1460 = vrot.lane.b32.xlu0 %v853, 64
        %v1461 = vpop.permute.xlu0 %1460
        %v1463 = vsel %vm855, %v1458, %v1461
        %1464 = vmatpush.msra.mxu0 %v772
        %1465 = vmatpush.msra.mxu0 %v770
        %1466 = vmatpush.msra.mxu0 %v768
        %1467 = vmatpush.msra.mxu0 %v766
        %1468 = vmatpush.msra.mxu0 %v764
        %1469 = vmatpush.msra.mxu0 %v762
        %1470 = vmatpush.msra.mxu0 %v760
        %1471 = vmatpush.msra.mxu0 %v758
        %1472 = vmatpush.msra.mxu0 %v756
        %1473 = vmatpush.msra.mxu0 %v754
        %1474 = vmatpush.msra.mxu0 %v752
        %1475 = vmatpush.msra.mxu0 %v750
        %1476 = vmatpush.msra.mxu0 %v748
        %1477 = vmatpush.msra.mxu0 %v746
        %1478 = vmatpush.msra.mxu0 %v744
        %1479 = vmatpush.msra.mxu0 %v742
        %1480 = vmatmul.f32.gmra.mxu0 %v1463
        %v1481 = vpop.f32.mrf.mxu0
        %v1482 = vadd.f32 0.0, %v1481
        %1483 = vdwg.mxu0
        %1484 = vmatpush.msra.mxu0 %v773
        %1485 = vmatpush.msra.mxu0 %v771
        %1486 = vmatpush.msra.mxu0 %v769
        %1487 = vmatpush.msra.mxu0 %v767
        %1488 = vmatpush.msra.mxu0 %v765
        %1489 = vmatpush.msra.mxu0 %v763
        %1490 = vmatpush.msra.mxu0 %v761
        %1491 = vmatpush.msra.mxu0 %v759
        %1492 = vmatpush.msra.mxu0 %v757
        %1493 = vmatpush.msra.mxu0 %v755
        %1494 = vmatpush.msra.mxu0 %v753
        %1495 = vmatpush.msra.mxu0 %v751
        %1496 = vmatpush.msra.mxu0 %v749
        %1497 = vmatpush.msra.mxu0 %v747
        %1498 = vmatpush.msra.mxu0 %v745
        %1499 = vmatpush.msra.mxu0 %v743
        %1500 = vmatmul.f32.gmra.mxu0 %v1463
        %v1501 = vpop.f32.mrf.mxu0
        %v1502 = vadd.f32 0.0, %v1501
        %1503 = vdwg.mxu0
        %v1504 = vadd.f32 %v824, %v1482
        %v1505 = vadd.f32 %v847, %v1502
        %v1506 = vxor.u32 %v1504, 2147483648
        %v1507 = vmul.f32 %v1506, 1.442695
        %v1508 = vpow.pop %v1507
        %v1509 = vadd.f32 %v1508, 1.0
        %v1510 = vrcp.pop %v1509
        %v1511 = vmul.f32 %v1509, %v1510
        %v1512 = vsub.f32 1.0, %v1511
        %v1513 = vmul.f32 %v1510, %v1512
        %v1514 = vadd.f32 %v1510, %v1513
        %vm1515 = vweird.f32 %v1509
        %vm1516 = vweird.f32 %v1510
        %vm1517 = vmor %vm1515, %vm1516
        %v1518 = vsel %vm1517, %v1510, %v1514
        %v1519 = vand.u32 2147483647, %v1509
        %vm1520 = vcmp.eq.f32.partialorder %v1519, 8.507059e+37
        %v1521 = vand.u32 %v1509, 2147483648
        %v1522 = vor.u32 1.1754944e-38, %v1521
        %v1523 = vsel %vm1520, %v1522, %v1518
        %v1524 = vmul.f32 1.0, %v1523
        %v1525 = vtanh.pop %v1505
        %v1526 = vxor.u32 %v1505, 2147483648
        %v1527 = vmul.f32 %v1526, 1.442695
        %v1528 = vpow.pop %v1527
        %v1529 = vadd.f32 %v1528, 1.0
        %v1530 = vrcp.pop %v1529
        %v1531 = vmul.f32 %v1529, %v1530
        %v1532 = vsub.f32 1.0, %v1531
        %v1533 = vmul.f32 %v1530, %v1532
        %v1534 = vadd.f32 %v1530, %v1533
        %vm1535 = vweird.f32 %v1529
        %vm1536 = vweird.f32 %v1530
        %vm1537 = vmor %vm1535, %vm1536
        %v1538 = vsel %vm1537, %v1530, %v1534
        %v1539 = vand.u32 2147483647, %v1529
        %vm1540 = vcmp.eq.f32.partialorder %v1539, 8.507059e+37
        %v1541 = vand.u32 %v1529, 2147483648
        %v1542 = vor.u32 1.1754944e-38, %v1541
        %v1543 = vsel %vm1540, %v1542, %v1538
        %v1544 = vmul.f32 1.0, %v1543
        %1546 = vrot.lane.b32.xlu0 %v854, 64
        %v1547 = vpop.permute.xlu0 %1546
        %v1549 = vmul.f32 %v1524, %v1547
        %v1550 = vmul.f32 %v1524, %v1525
        %1552 = vrot.lane.b32.xlu0 %v1550, 64
        %v1553 = vpop.permute.xlu0 %1552
        %v1555 = vadd.f32 %v1549, %v1553
        %v1556 = vtanh.pop %v1555
        %v1557 = vmul.f32 %v1544, %v1556
        %1559 = vrot.lane.b32.xlu0 %v1557, 64
        %v1560 = vpop.permute.xlu0 %1559
        %1562 = vst.msk [vmem:[#allocation2] sm:$0xff] %vm855, %v1560
        %1564 = vrot.lane.b32.xlu0 %v1555, 64
        %v1565 = vpop.permute.xlu0 %1564
        %1567 = vst.msk [vmem:[#allocation3] sm:$0xff] %vm855, %v1565
        %v1568 = vstv %s852
        %vm1569 = vcmp.gt.s32.totalorder %v732, %v1568
        %v1570 = vsel %vm1569, 1, 0
        %v1571 = vcvt.s32.f32 %v1570
        %v1572 = vld [vmem:[#allocation2] sm:$0xff]
        %v1573 = vld [vmem:[#allocation3] sm:$0xff]
        %v1575 = vsel %vm855, %v1572, 0
        %1577 = vmatpush.msra.mxu0 0.0
        %1578 = vmatpush.msra.mxu0 0.0
        %1579 = vmatpush.msra.mxu0 0.0
        %1580 = vmatpush.msra.mxu0 0.0
        %1581 = vmatpush.msra.mxu0 0.0
        %1582 = vmatpush.msra.mxu0 0.0
        %1583 = vmatpush.msra.mxu0 0.0
        %1584 = vmatpush.msra.mxu0 0.0
        %1585 = vmatpush.msra.mxu0 %v741
        %1586 = vmatpush.msra.mxu0 %v740
        %1587 = vmatpush.msra.mxu0 %v739
        %1588 = vmatpush.msra.mxu0 %v738
        %1589 = vmatpush.msra.mxu0 %v737
        %1590 = vmatpush.msra.mxu0 %v736
        %1591 = vmatpush.msra.mxu0 %v735
        %1592 = vmatpush.msra.mxu0 %v734
        %1593 = vmatmul.f32.gmra.mxu0 %v1575
        %v1594 = vpop.f32.mrf.mxu0
        %v1595 = vadd.f32 0.0, %v1594
        %1596 = vdwg.mxu0
        %v1598 = vrot.slane %v1595, 1
        %v1599 = vrot.slane %v1595, 2
        %v1600 = vrot.slane %v1595, 3
        %v1601 = vrot.slane %v1595, 4
        %v1602 = vrot.slane %v1595, 5
        %v1603 = vrot.slane %v1595, 6
        %v1604 = vrot.slane %v1595, 7
        %v1605 = vperm.slane %v1595, 0
        %v1606 = vperm.slane %v1598, 0
        %v1607 = vperm.slane %v1599, 0
        %v1608 = vperm.slane %v1600, 0
        %v1609 = vperm.slane %v1601, 0
        %v1610 = vperm.slane %v1602, 0
        %v1611 = vperm.slane %v1603, 0
        %v1612 = vperm.slane %v1604, 0
        %v1621 = vadd.f32 %v716, %v1605
        %v1622 = vadd.f32 %v717, %v1605
        %v1623 = vadd.f32 %v718, %v1606
        %v1624 = vadd.f32 %v719, %v1606
        %v1625 = vadd.f32 %v720, %v1607
        %v1626 = vadd.f32 %v721, %v1607
        %v1627 = vadd.f32 %v722, %v1608
        %v1628 = vadd.f32 %v723, %v1608
        %v1629 = vadd.f32 %v724, %v1609
        %v1630 = vadd.f32 %v725, %v1609
        %v1631 = vadd.f32 %v726, %v1610
        %v1632 = vadd.f32 %v727, %v1610
        %v1633 = vadd.f32 %v728, %v1611
        %v1634 = vadd.f32 %v729, %v1611
        %v1635 = vadd.f32 %v730, %v1612
        %v1636 = vadd.f32 %v731, %v1612
        %v1637 = vmax.f32 %v1621, 0.0
        %v1638 = vmax.f32 %v1622, 0.0
        %v1639 = vmax.f32 %v1623, 0.0
        %v1640 = vmax.f32 %v1624, 0.0
        %v1641 = vmax.f32 %v1625, 0.0
        %v1642 = vmax.f32 %v1626, 0.0
        %v1643 = vmax.f32 %v1627, 0.0
        %v1644 = vmax.f32 %v1628, 0.0
        %v1645 = vmax.f32 %v1629, 0.0
        %v1646 = vmax.f32 %v1630, 0.0
        %v1647 = vmax.f32 %v1631, 0.0
        %v1648 = vmax.f32 %v1632, 0.0
        %v1649 = vmax.f32 %v1633, 0.0
        %v1650 = vmax.f32 %v1634, 0.0
        %v1651 = vmax.f32 %v1635, 0.0
        %v1652 = vmax.f32 %v1636, 0.0
        %v1653 = vmul.f32 %v1637, %v936
        %v1654 = vmul.f32 %v1638, %v936
        %v1655 = vmul.f32 %v1639, %v936
        %v1656 = vmul.f32 %v1640, %v936
        %v1657 = vmul.f32 %v1641, %v936
        %v1658 = vmul.f32 %v1642, %v936
        %v1659 = vmul.f32 %v1643, %v936
        %v1660 = vmul.f32 %v1644, %v936
        %v1661 = vmul.f32 %v1645, %v936
        %v1662 = vmul.f32 %v1646, %v936
        %v1663 = vmul.f32 %v1647, %v936
        %v1664 = vmul.f32 %v1648, %v936
        %v1665 = vmul.f32 %v1649, %v936
        %v1666 = vmul.f32 %v1650, %v936
        %v1667 = vmul.f32 %v1651, %v936
        %v1668 = vmul.f32 %v1652, %v936
        %v1669 = vsel %vm799, %v1653, 0.0
        %1670 = vadd.xlane.f32.xlu0 %v1669
        %v1671 = vpop.xlane.xlu0 %1670
        %v1672 = vsel %vm799, %v1654, 0.0
        %1673 = vadd.xlane.f32.xlu0 %v1672
        %v1674 = vpop.xlane.xlu0 %1673
        %v1675 = vsel %vm799, %v1655, 0.0
        %1676 = vadd.xlane.f32.xlu0 %v1675
        %v1677 = vpop.xlane.xlu0 %1676
        %v1678 = vsel %vm799, %v1656, 0.0
        %1679 = vadd.xlane.f32.xlu0 %v1678
        %v1680 = vpop.xlane.xlu0 %1679
        %v1681 = vsel %vm799, %v1657, 0.0
        %1682 = vadd.xlane.f32.xlu0 %v1681
        %v1683 = vpop.xlane.xlu0 %1682
        %v1684 = vsel %vm799, %v1658, 0.0
        %1685 = vadd.xlane.f32.xlu0 %v1684
        %v1686 = vpop.xlane.xlu0 %1685
        %v1687 = vsel %vm799, %v1659, 0.0
        %1688 = vadd.xlane.f32.xlu0 %v1687
        %v1689 = vpop.xlane.xlu0 %1688
        %v1690 = vsel %vm799, %v1660, 0.0
        %1691 = vadd.xlane.f32.xlu0 %v1690
        %v1692 = vpop.xlane.xlu0 %1691
        %v1693 = vsel %vm799, %v1661, 0.0
        %1694 = vadd.xlane.f32.xlu0 %v1693
        %v1695 = vpop.xlane.xlu0 %1694
        %v1696 = vsel %vm799, %v1662, 0.0
        %1697 = vadd.xlane.f32.xlu0 %v1696
        %v1698 = vpop.xlane.xlu0 %1697
        %v1699 = vsel %vm799, %v1663, 0.0
        %1700 = vadd.xlane.f32.xlu0 %v1699
        %v1701 = vpop.xlane.xlu0 %1700
        %v1702 = vsel %vm799, %v1664, 0.0
        %1703 = vadd.xlane.f32.xlu0 %v1702
        %v1704 = vpop.xlane.xlu0 %1703
        %v1705 = vsel %vm799, %v1665, 0.0
        %1706 = vadd.xlane.f32.xlu0 %v1705
        %v1707 = vpop.xlane.xlu0 %1706
        %v1708 = vsel %vm799, %v1666, 0.0
        %1709 = vadd.xlane.f32.xlu0 %v1708
        %v1710 = vpop.xlane.xlu0 %1709
        %v1711 = vsel %vm799, %v1667, 0.0
        %1712 = vadd.xlane.f32.xlu0 %v1711
        %v1713 = vpop.xlane.xlu0 %1712
        %v1714 = vsel %vm799, %v1668, 0.0
        %1715 = vadd.xlane.f32.xlu0 %v1714
        %v1716 = vpop.xlane.xlu0 %1715
        %v1733 = vperm.slane %v1671, %v1019
        %v1734 = vperm.slane %v1674, %v1021
        %v1735 = vsel %vm1023, %v1734, %v1733
        %v1736 = vperm.slane %v1677, %v1019
        %v1737 = vperm.slane %v1680, %v1021
        %v1738 = vsel %vm1023, %v1737, %v1736
        %v1739 = vperm.slane %v1683, %v1019
        %v1740 = vperm.slane %v1686, %v1021
        %v1741 = vsel %vm1023, %v1740, %v1739
        %v1742 = vperm.slane %v1689, %v1019
        %v1743 = vperm.slane %v1692, %v1021
        %v1744 = vsel %vm1023, %v1743, %v1742
        %v1745 = vperm.slane %v1695, %v1019
        %v1746 = vperm.slane %v1698, %v1021
        %v1747 = vsel %vm1023, %v1746, %v1745
        %v1748 = vperm.slane %v1701, %v1019
        %v1749 = vperm.slane %v1704, %v1021
        %v1750 = vsel %vm1023, %v1749, %v1748
        %v1751 = vperm.slane %v1707, %v1019
        %v1752 = vperm.slane %v1710, %v1021
        %v1753 = vsel %vm1023, %v1752, %v1751
        %v1754 = vperm.slane %v1713, %v1019
        %v1755 = vperm.slane %v1716, %v1021
        %v1756 = vsel %vm1023, %v1755, %v1754
        %v1757 = vsel %vm1046, %v1738, %v1735
        %v1758 = vsel %vm1048, %v1741, %v1757
        %v1759 = vsel %vm1050, %v1744, %v1758
        %v1760 = vsel %vm1052, %v1747, %v1759
        %v1761 = vsel %vm1054, %v1750, %v1760
        %v1762 = vsel %vm1056, %v1753, %v1761
        %v1763 = vsel %vm1058, %v1756, %v1762
        %v1765 = vsel %vm1061, %v1763, -inf
        %1766 = vmax.xlane.f32.xlu0 %v1765
        %v1767 = vpop.xlane.xlu0 %1766
        %v1769 = vperm.slane %v1767, 0
        %v1770 = vperm.slane %v1767, 1
        %v1771 = vperm.slane %v1767, 2
        %v1772 = vperm.slane %v1767, 3
        %v1773 = vperm.slane %v1767, 4
        %v1774 = vperm.slane %v1767, 5
        %v1775 = vperm.slane %v1767, 6
        %v1776 = vperm.slane %v1767, 7
        %v1785 = vsub.f32 %v1671, %v1769
        %v1786 = vsub.f32 %v1674, %v1769
        %v1787 = vsub.f32 %v1677, %v1770
        %v1788 = vsub.f32 %v1680, %v1770
        %v1789 = vsub.f32 %v1683, %v1771
        %v1790 = vsub.f32 %v1686, %v1771
        %v1791 = vsub.f32 %v1689, %v1772
        %v1792 = vsub.f32 %v1692, %v1772
        %v1793 = vsub.f32 %v1695, %v1773
        %v1794 = vsub.f32 %v1698, %v1773
        %v1795 = vsub.f32 %v1701, %v1774
        %v1796 = vsub.f32 %v1704, %v1774
        %v1797 = vsub.f32 %v1707, %v1775
        %v1798 = vsub.f32 %v1710, %v1775
        %v1799 = vsub.f32 %v1713, %v1776
        %v1800 = vsub.f32 %v1716, %v1776
        %v1801 = vmul.f32 %v1785, 1.442695
        %v1802 = vpow.pop %v1801
        %v1803 = vmul.f32 %v1786, 1.442695
        %v1804 = vpow.pop %v1803
        %v1805 = vmul.f32 %v1787, 1.442695
        %v1806 = vpow.pop %v1805
        %v1807 = vmul.f32 %v1788, 1.442695
        %v1808 = vpow.pop %v1807
        %v1809 = vmul.f32 %v1789, 1.442695
        %v1810 = vpow.pop %v1809
        %v1811 = vmul.f32 %v1790, 1.442695
        %v1812 = vpow.pop %v1811
        %v1813 = vmul.f32 %v1791, 1.442695
        %v1814 = vpow.pop %v1813
        %v1815 = vmul.f32 %v1792, 1.442695
        %v1816 = vpow.pop %v1815
        %v1817 = vmul.f32 %v1793, 1.442695
        %v1818 = vpow.pop %v1817
        %v1819 = vmul.f32 %v1794, 1.442695
        %v1820 = vpow.pop %v1819
        %v1821 = vmul.f32 %v1795, 1.442695
        %v1822 = vpow.pop %v1821
        %v1823 = vmul.f32 %v1796, 1.442695
        %v1824 = vpow.pop %v1823
        %v1825 = vmul.f32 %v1797, 1.442695
        %v1826 = vpow.pop %v1825
        %v1827 = vmul.f32 %v1798, 1.442695
        %v1828 = vpow.pop %v1827
        %v1829 = vmul.f32 %v1799, 1.442695
        %v1830 = vpow.pop %v1829
        %v1831 = vmul.f32 %v1800, 1.442695
        %v1832 = vpow.pop %v1831
        %1849 = vset.pattern.permute.xlu0 0
        %1850 = vperm.xlu0 %1849, %v1802
        %v1851 = vpop.permute.xlu0 %1850
        %1852 = vset.pattern.permute.xlu0 0
        %1853 = vperm.xlu0 %1852, %v1804
        %v1854 = vpop.permute.xlu0 %1853
        %1855 = vset.pattern.permute.xlu0 0
        %1856 = vperm.xlu0 %1855, %v1806
        %v1857 = vpop.permute.xlu0 %1856
        %1858 = vset.pattern.permute.xlu0 0
        %1859 = vperm.xlu0 %1858, %v1808
        %v1860 = vpop.permute.xlu0 %1859
        %1861 = vset.pattern.permute.xlu0 0
        %1862 = vperm.xlu0 %1861, %v1810
        %v1863 = vpop.permute.xlu0 %1862
        %1864 = vset.pattern.permute.xlu0 0
        %1865 = vperm.xlu0 %1864, %v1812
        %v1866 = vpop.permute.xlu0 %1865
        %1867 = vset.pattern.permute.xlu0 0
        %1868 = vperm.xlu0 %1867, %v1814
        %v1869 = vpop.permute.xlu0 %1868
        %1870 = vset.pattern.permute.xlu0 0
        %1871 = vperm.xlu0 %1870, %v1816
        %v1872 = vpop.permute.xlu0 %1871
        %1873 = vset.pattern.permute.xlu0 0
        %1874 = vperm.xlu0 %1873, %v1818
        %v1875 = vpop.permute.xlu0 %1874
        %1876 = vset.pattern.permute.xlu0 0
        %1877 = vperm.xlu0 %1876, %v1820
        %v1878 = vpop.permute.xlu0 %1877
        %1879 = vset.pattern.permute.xlu0 0
        %1880 = vperm.xlu0 %1879, %v1822
        %v1881 = vpop.permute.xlu0 %1880
        %1882 = vset.pattern.permute.xlu0 0
        %1883 = vperm.xlu0 %1882, %v1824
        %v1884 = vpop.permute.xlu0 %1883
        %1885 = vset.pattern.permute.xlu0 0
        %1886 = vperm.xlu0 %1885, %v1826
        %v1887 = vpop.permute.xlu0 %1886
        %1888 = vset.pattern.permute.xlu0 0
        %1889 = vperm.xlu0 %1888, %v1828
        %v1890 = vpop.permute.xlu0 %1889
        %1891 = vset.pattern.permute.xlu0 0
        %1892 = vperm.xlu0 %1891, %v1830
        %v1893 = vpop.permute.xlu0 %1892
        %1894 = vset.pattern.permute.xlu0 0
        %1895 = vperm.xlu0 %1894, %v1832
        %v1896 = vpop.permute.xlu0 %1895
        %v1897 = vperm.slane %v1851, %v1019
        %v1898 = vperm.slane %v1854, %v1021
        %v1899 = vsel %vm1023, %v1898, %v1897
        %v1900 = vperm.slane %v1857, %v1019
        %v1901 = vperm.slane %v1860, %v1021
        %v1902 = vsel %vm1023, %v1901, %v1900
        %v1903 = vperm.slane %v1863, %v1019
        %v1904 = vperm.slane %v1866, %v1021
        %v1905 = vsel %vm1023, %v1904, %v1903
        %v1906 = vperm.slane %v1869, %v1019
        %v1907 = vperm.slane %v1872, %v1021
        %v1908 = vsel %vm1023, %v1907, %v1906
        %v1909 = vperm.slane %v1875, %v1019
        %v1910 = vperm.slane %v1878, %v1021
        %v1911 = vsel %vm1023, %v1910, %v1909
        %v1912 = vperm.slane %v1881, %v1019
        %v1913 = vperm.slane %v1884, %v1021
        %v1914 = vsel %vm1023, %v1913, %v1912
        %v1915 = vperm.slane %v1887, %v1019
        %v1916 = vperm.slane %v1890, %v1021
        %v1917 = vsel %vm1023, %v1916, %v1915
        %v1918 = vperm.slane %v1893, %v1019
        %v1919 = vperm.slane %v1896, %v1021
        %v1920 = vsel %vm1023, %v1919, %v1918
        %v1921 = vsel %vm1046, %v1902, %v1899
        %v1922 = vsel %vm1048, %v1905, %v1921
        %v1923 = vsel %vm1050, %v1908, %v1922
        %v1924 = vsel %vm1052, %v1911, %v1923
        %v1925 = vsel %vm1054, %v1914, %v1924
        %v1926 = vsel %vm1056, %v1917, %v1925
        %v1927 = vsel %vm1058, %v1920, %v1926
        %v1929 = vsel %vm1061, %v1927, 0.0
        %1930 = vadd.xlane.f32.xlu0 %v1929
        %v1931 = vpop.xlane.xlu0 %1930
        %v1932 = vrcp.pop %v1931
        %v1933 = vmul.f32 %v1931, %v1932
        %v1934 = vsub.f32 1.0, %v1933
        %v1935 = vmul.f32 %v1932, %v1934
        %v1936 = vadd.f32 %v1932, %v1935
        %vm1937 = vweird.f32 %v1931
        %vm1938 = vweird.f32 %v1932
        %vm1939 = vmor %vm1937, %vm1938
        %v1940 = vsel %vm1939, %v1932, %v1936
        %v1941 = vand.u32 2147483647, %v1931
        %vm1942 = vcmp.eq.f32.partialorder %v1941, 8.507059e+37
        %v1943 = vand.u32 %v1931, 2147483648
        %v1944 = vor.u32 1.1754944e-38, %v1943
        %v1945 = vsel %vm1942, %v1944, %v1940
        %v1947 = vperm.slane %v1945, 0
        %v1948 = vperm.slane %v1945, 1
        %v1949 = vperm.slane %v1945, 2
        %v1950 = vperm.slane %v1945, 3
        %v1951 = vperm.slane %v1945, 4
        %v1952 = vperm.slane %v1945, 5
        %v1953 = vperm.slane %v1945, 6
        %v1954 = vperm.slane %v1945, 7
        %v1963 = vmul.f32 %v1802, %v1947
        %v1964 = vmul.f32 %v1804, %v1947
        %v1965 = vmul.f32 %v1806, %v1948
        %v1966 = vmul.f32 %v1808, %v1948
        %v1967 = vmul.f32 %v1810, %v1949
        %v1968 = vmul.f32 %v1812, %v1949
        %v1969 = vmul.f32 %v1814, %v1950
        %v1970 = vmul.f32 %v1816, %v1950
        %v1971 = vmul.f32 %v1818, %v1951
        %v1972 = vmul.f32 %v1820, %v1951
        %v1973 = vmul.f32 %v1822, %v1952
        %v1974 = vmul.f32 %v1824, %v1952
        %v1975 = vmul.f32 %v1826, %v1953
        %v1976 = vmul.f32 %v1828, %v1953
        %v1977 = vmul.f32 %v1830, %v1954
        %v1978 = vmul.f32 %v1832, %v1954
        %1980 = vset.pattern.permute.xlu0 0
        %1981 = vperm.xlu0 %1980, %v1963
        %v1982 = vpop.permute.xlu0 %1981
        %1985 = vset.pattern.permute.xlu0 0
        %1986 = vperm.xlu0 %1985, %v1964
        %v1987 = vpop.permute.xlu0 %1986
        %1990 = vset.pattern.permute.xlu0 0
        %1991 = vperm.xlu0 %1990, %v1965
        %v1992 = vpop.permute.xlu0 %1991
        %1995 = vset.pattern.permute.xlu0 0
        %1996 = vperm.xlu0 %1995, %v1966
        %v1997 = vpop.permute.xlu0 %1996
        %2000 = vset.pattern.permute.xlu0 0
        %2001 = vperm.xlu0 %2000, %v1967
        %v2002 = vpop.permute.xlu0 %2001
        %2005 = vset.pattern.permute.xlu0 0
        %2006 = vperm.xlu0 %2005, %v1968
        %v2007 = vpop.permute.xlu0 %2006
        %2010 = vset.pattern.permute.xlu0 0
        %2011 = vperm.xlu0 %2010, %v1969
        %v2012 = vpop.permute.xlu0 %2011
        %2015 = vset.pattern.permute.xlu0 0
        %2016 = vperm.xlu0 %2015, %v1970
        %v2017 = vpop.permute.xlu0 %2016
        %2020 = vset.pattern.permute.xlu0 0
        %2021 = vperm.xlu0 %2020, %v1971
        %v2022 = vpop.permute.xlu0 %2021
        %2025 = vset.pattern.permute.xlu0 0
        %2026 = vperm.xlu0 %2025, %v1972
        %v2027 = vpop.permute.xlu0 %2026
        %2030 = vset.pattern.permute.xlu0 0
        %2031 = vperm.xlu0 %2030, %v1973
        %v2032 = vpop.permute.xlu0 %2031
        %2035 = vset.pattern.permute.xlu0 0
        %2036 = vperm.xlu0 %2035, %v1974
        %v2037 = vpop.permute.xlu0 %2036
        %2040 = vset.pattern.permute.xlu0 0
        %2041 = vperm.xlu0 %2040, %v1975
        %v2042 = vpop.permute.xlu0 %2041
        %2045 = vset.pattern.permute.xlu0 0
        %2046 = vperm.xlu0 %2045, %v1976
        %v2047 = vpop.permute.xlu0 %2046
        %2050 = vset.pattern.permute.xlu0 0
        %2051 = vperm.xlu0 %2050, %v1977
        %v2052 = vpop.permute.xlu0 %2051
        %2055 = vset.pattern.permute.xlu0 0
        %2056 = vperm.xlu0 %2055, %v1978
        %v2057 = vpop.permute.xlu0 %2056
        %v2059 = vmul.f32 %v700, %v1982
        %v2060 = vmul.f32 %v701, %v1987
        %v2061 = vmul.f32 %v702, %v1992
        %v2062 = vmul.f32 %v703, %v1997
        %v2063 = vmul.f32 %v704, %v2002
        %v2064 = vmul.f32 %v705, %v2007
        %v2065 = vmul.f32 %v706, %v2012
        %v2066 = vmul.f32 %v707, %v2017
        %v2067 = vmul.f32 %v708, %v2022
        %v2068 = vmul.f32 %v709, %v2027
        %v2069 = vmul.f32 %v710, %v2032
        %v2070 = vmul.f32 %v711, %v2037
        %v2071 = vmul.f32 %v712, %v2042
        %v2072 = vmul.f32 %v713, %v2047
        %v2073 = vmul.f32 %v714, %v2052
        %v2074 = vmul.f32 %v715, %v2057
        %v2075 = vsel %vm855, %v2059, 0.0
        %v2076 = vsel %vm855, %v2060, 0.0
        %v2077 = vadd.f32 %v2075, %v2076
        %v2078 = vrot.slane %v2077, 4
        %v2079 = vadd.f32 %v2077, %v2078
        %v2080 = vrot.slane %v2079, 2
        %v2081 = vadd.f32 %v2079, %v2080
        %v2082 = vrot.slane %v2081, 1
        %v2083 = vadd.f32 %v2081, %v2082
        %v2084 = vsel %vm855, %v2061, 0.0
        %v2085 = vsel %vm855, %v2062, 0.0
        %v2086 = vadd.f32 %v2084, %v2085
        %v2087 = vrot.slane %v2086, 4
        %v2088 = vadd.f32 %v2086, %v2087
        %v2089 = vrot.slane %v2088, 2
        %v2090 = vadd.f32 %v2088, %v2089
        %v2091 = vrot.slane %v2090, 1
        %v2092 = vadd.f32 %v2090, %v2091
        %v2093 = vsel %vm855, %v2063, 0.0
        %v2094 = vsel %vm855, %v2064, 0.0
        %v2095 = vadd.f32 %v2093, %v2094
        %v2096 = vrot.slane %v2095, 4
        %v2097 = vadd.f32 %v2095, %v2096
        %v2098 = vrot.slane %v2097, 2
        %v2099 = vadd.f32 %v2097, %v2098
        %v2100 = vrot.slane %v2099, 1
        %v2101 = vadd.f32 %v2099, %v2100
        %v2102 = vsel %vm855, %v2065, 0.0
        %v2103 = vsel %vm855, %v2066, 0.0
        %v2104 = vadd.f32 %v2102, %v2103
        %v2105 = vrot.slane %v2104, 4
        %v2106 = vadd.f32 %v2104, %v2105
        %v2107 = vrot.slane %v2106, 2
        %v2108 = vadd.f32 %v2106, %v2107
        %v2109 = vrot.slane %v2108, 1
        %v2110 = vadd.f32 %v2108, %v2109
        %v2111 = vsel %vm855, %v2067, 0.0
        %v2112 = vsel %vm855, %v2068, 0.0
        %v2113 = vadd.f32 %v2111, %v2112
        %v2114 = vrot.slane %v2113, 4
        %v2115 = vadd.f32 %v2113, %v2114
        %v2116 = vrot.slane %v2115, 2
        %v2117 = vadd.f32 %v2115, %v2116
        %v2118 = vrot.slane %v2117, 1
        %v2119 = vadd.f32 %v2117, %v2118
        %v2120 = vsel %vm855, %v2069, 0.0
        %v2121 = vsel %vm855, %v2070, 0.0
        %v2122 = vadd.f32 %v2120, %v2121
        %v2123 = vrot.slane %v2122, 4
        %v2124 = vadd.f32 %v2122, %v2123
        %v2125 = vrot.slane %v2124, 2
        %v2126 = vadd.f32 %v2124, %v2125
        %v2127 = vrot.slane %v2126, 1
        %v2128 = vadd.f32 %v2126, %v2127
        %v2129 = vsel %vm855, %v2071, 0.0
        %v2130 = vsel %vm855, %v2072, 0.0
        %v2131 = vadd.f32 %v2129, %v2130
        %v2132 = vrot.slane %v2131, 4
        %v2133 = vadd.f32 %v2131, %v2132
        %v2134 = vrot.slane %v2133, 2
        %v2135 = vadd.f32 %v2133, %v2134
        %v2136 = vrot.slane %v2135, 1
        %v2137 = vadd.f32 %v2135, %v2136
        %v2138 = vsel %vm855, %v2073, 0.0
        %v2139 = vsel %vm855, %v2074, 0.0
        %v2140 = vadd.f32 %v2138, %v2139
        %v2141 = vrot.slane %v2140, 4
        %v2142 = vadd.f32 %v2140, %v2141
        %v2143 = vrot.slane %v2142, 2
        %v2144 = vadd.f32 %v2142, %v2143
        %v2145 = vrot.slane %v2144, 1
        %v2146 = vadd.f32 %v2144, %v2145
        %v2155 = vsel %vm1046, %v2092, %v2083
        %v2156 = vsel %vm1048, %v2101, %v2155
        %v2157 = vsel %vm1050, %v2110, %v2156
        %v2158 = vsel %vm1052, %v2119, %v2157
        %v2159 = vsel %vm1054, %v2128, %v2158
        %v2160 = vsel %vm1056, %v2137, %v2159
        %v2161 = vsel %vm1058, %v2146, %v2160
        %2163 = vrot.lane.b32.xlu0 %v1572, 64
        %v2164 = vpop.permute.xlu0 %2163
        %v2166 = vsel %vm855, %v2161, %v2164
        %2167 = vmatpush.msra.mxu0 %v772
        %2168 = vmatpush.msra.mxu0 %v770
        %2169 = vmatpush.msra.mxu0 %v768
        %2170 = vmatpush.msra.mxu0 %v766
        %2171 = vmatpush.msra.mxu0 %v764
        %2172 = vmatpush.msra.mxu0 %v762
        %2173 = vmatpush.msra.mxu0 %v760
        %2174 = vmatpush.msra.mxu0 %v758
        %2175 = vmatpush.msra.mxu0 %v756
        %2176 = vmatpush.msra.mxu0 %v754
        %2177 = vmatpush.msra.mxu0 %v752
        %2178 = vmatpush.msra.mxu0 %v750
        %2179 = vmatpush.msra.mxu0 %v748
        %2180 = vmatpush.msra.mxu0 %v746
        %2181 = vmatpush.msra.mxu0 %v744
        %2182 = vmatpush.msra.mxu0 %v742
        %2183 = vmatmul.f32.gmra.mxu0 %v2166
        %v2184 = vpop.f32.mrf.mxu0
        %v2185 = vadd.f32 0.0, %v2184
        %2186 = vdwg.mxu0
        %2187 = vmatpush.msra.mxu0 %v773
        %2188 = vmatpush.msra.mxu0 %v771
        %2189 = vmatpush.msra.mxu0 %v769
        %2190 = vmatpush.msra.mxu0 %v767
        %2191 = vmatpush.msra.mxu0 %v765
        %2192 = vmatpush.msra.mxu0 %v763
        %2193 = vmatpush.msra.mxu0 %v761
        %2194 = vmatpush.msra.mxu0 %v759
        %2195 = vmatpush.msra.mxu0 %v757
        %2196 = vmatpush.msra.mxu0 %v755
        %2197 = vmatpush.msra.mxu0 %v753
        %2198 = vmatpush.msra.mxu0 %v751
        %2199 = vmatpush.msra.mxu0 %v749
        %2200 = vmatpush.msra.mxu0 %v747
        %2201 = vmatpush.msra.mxu0 %v745
        %2202 = vmatpush.msra.mxu0 %v743
        %2203 = vmatmul.f32.gmra.mxu0 %v2166
        %v2204 = vpop.f32.mrf.mxu0
        %v2205 = vadd.f32 0.0, %v2204
        %2206 = vdwg.mxu0
        %v2207 = vadd.f32 %v827, %v2185
        %v2208 = vadd.f32 %v850, %v2205
        %v2209 = vxor.u32 %v2207, 2147483648
        %v2210 = vmul.f32 %v2209, 1.442695
        %v2211 = vpow.pop %v2210
        %v2212 = vadd.f32 %v2211, 1.0
        %v2213 = vrcp.pop %v2212
        %v2214 = vmul.f32 %v2212, %v2213
        %v2215 = vsub.f32 1.0, %v2214
        %v2216 = vmul.f32 %v2213, %v2215
        %v2217 = vadd.f32 %v2213, %v2216
        %vm2218 = vweird.f32 %v2212
        %vm2219 = vweird.f32 %v2213
        %vm2220 = vmor %vm2218, %vm2219
        %v2221 = vsel %vm2220, %v2213, %v2217
        %v2222 = vand.u32 2147483647, %v2212
        %vm2223 = vcmp.eq.f32.partialorder %v2222, 8.507059e+37
        %v2224 = vand.u32 %v2212, 2147483648
        %v2225 = vor.u32 1.1754944e-38, %v2224
        %v2226 = vsel %vm2223, %v2225, %v2221
        %v2227 = vmul.f32 1.0, %v2226
        %v2228 = vtanh.pop %v2208
        %v2229 = vxor.u32 %v2208, 2147483648
        %v2230 = vmul.f32 %v2229, 1.442695
        %v2231 = vpow.pop %v2230
        %v2232 = vadd.f32 %v2231, 1.0
        %v2233 = vrcp.pop %v2232
        %v2234 = vmul.f32 %v2232, %v2233
        %v2235 = vsub.f32 1.0, %v2234
        %v2236 = vmul.f32 %v2233, %v2235
        %v2237 = vadd.f32 %v2233, %v2236
        %vm2238 = vweird.f32 %v2232
        %vm2239 = vweird.f32 %v2233
        %vm2240 = vmor %vm2238, %vm2239
        %v2241 = vsel %vm2240, %v2233, %v2237
        %v2242 = vand.u32 2147483647, %v2232
        %vm2243 = vcmp.eq.f32.partialorder %v2242, 8.507059e+37
        %v2244 = vand.u32 %v2232, 2147483648
        %v2245 = vor.u32 1.1754944e-38, %v2244
        %v2246 = vsel %vm2243, %v2245, %v2241
        %v2247 = vmul.f32 1.0, %v2246
        %2249 = vrot.lane.b32.xlu0 %v1573, 64
        %v2250 = vpop.permute.xlu0 %2249
        %v2252 = vmul.f32 %v2227, %v2250
        %v2253 = vmul.f32 %v2227, %v2228
        %2255 = vrot.lane.b32.xlu0 %v2253, 64
        %v2256 = vpop.permute.xlu0 %2255
        %v2258 = vadd.f32 %v2252, %v2256
        %v2259 = vtanh.pop %v2258
        %v2260 = vmul.f32 %v2247, %v2259
        %2262 = vrot.lane.b32.xlu0 %v2260, 64
        %v2263 = vpop.permute.xlu0 %2262
        %2265 = vst.msk [vmem:[#allocation2] sm:$0xff] %vm855, %v2263
        %2267 = vrot.lane.b32.xlu0 %v2258, 64
        %v2268 = vpop.permute.xlu0 %2267
        %2270 = vst.msk [vmem:[#allocation3] sm:$0xff] %vm855, %v2268
        %s2271 = sadd.s32 %s852, 1
        %v2272 = vstv %s2271
        %vm2273 = vcmp.gt.s32.totalorder %v732, %v2272
        %v2274 = vsel %vm2273, 1, 0
        %v2275 = vcvt.s32.f32 %v2274
        %v2277 = vperm.slane %v782, 0
        %v2279 = vsel %vm855, %v1560, 0
        %v2281 = vsel %vm855, %v2263, 0
        %2283 = vmatpush.msra.mxu0 0.0
        %2284 = vmatpush.msra.mxu0 0.0
        %2285 = vmatpush.msra.mxu0 0.0
        %2286 = vmatpush.msra.mxu0 0.0
        %2287 = vmatpush.msra.mxu0 0.0
        %2288 = vmatpush.msra.mxu0 0.0
        %2289 = vmatpush.msra.mxu0 0.0
        %2290 = vmatpush.msra.mxu0 0.0
        %2291 = vmatpush.msra.mxu0 %v781
        %2292 = vmatpush.msra.mxu0 %v780
        %2293 = vmatpush.msra.mxu0 %v779
        %2294 = vmatpush.msra.mxu0 %v778
        %2295 = vmatpush.msra.mxu0 %v777
        %2296 = vmatpush.msra.mxu0 %v776
        %2297 = vmatpush.msra.mxu0 %v775
        %2298 = vmatpush.msra.mxu0 %v774
        %2299 = vmatmul.f32.gmra.mxu0 %v2279
        %v2300 = vpop.f32.mrf.mxu0
        %v2301 = vadd.f32 %v2277, %v2300
        %2302 = vmatmul.f32.gmra.mxu0 %v2281
        %v2303 = vpop.f32.mrf.mxu0
        %v2304 = vadd.f32 %v2277, %v2303
        %2305 = vdwg.mxu0
        %2307 = vset.pattern.permute.xlu0 0
        %2308 = vperm.xlu0 %2307, %v1571
        %v2309 = vpop.permute.xlu0 %2308
        %2312 = vset.pattern.permute.xlu0 0
        %2313 = vperm.xlu0 %2312, %v2275
        %v2314 = vpop.permute.xlu0 %2313
        %v2316 = vmul.f32 %v2301, %v2309
        %v2317 = vmul.f32 %v2304, %v2314
        %2318 = vst [vmem:[%s666] sm:$0xff] %v2316
        %2319 = vst [vmem:[%s666 + $0x8] sm:$0xff] %v2317
        %v2320 = vperm.slane %v1279, %v1019
        %v2321 = vperm.slane %v1284, %v1021
        %v2322 = vsel %vm1023, %v2321, %v2320
        %v2323 = vperm.slane %v1289, %v1019
        %v2324 = vperm.slane %v1294, %v1021
        %v2325 = vsel %vm1023, %v2324, %v2323
        %v2326 = vperm.slane %v1299, %v1019
        %v2327 = vperm.slane %v1304, %v1021
        %v2328 = vsel %vm1023, %v2327, %v2326
        %v2329 = vperm.slane %v1309, %v1019
        %v2330 = vperm.slane %v1314, %v1021
        %v2331 = vsel %vm1023, %v2330, %v2329
        %v2332 = vperm.slane %v1319, %v1019
        %v2333 = vperm.slane %v1324, %v1021
        %v2334 = vsel %vm1023, %v2333, %v2332
        %v2335 = vperm.slane %v1329, %v1019
        %v2336 = vperm.slane %v1334, %v1021
        %v2337 = vsel %vm1023, %v2336, %v2335
        %v2338 = vperm.slane %v1339, %v1019
        %v2339 = vperm.slane %v1344, %v1021
        %v2340 = vsel %vm1023, %v2339, %v2338
        %v2341 = vperm.slane %v1349, %v1019
        %v2342 = vperm.slane %v1354, %v1021
        %v2343 = vsel %vm1023, %v2342, %v2341
        %v2344 = vperm.slane %v1982, %v1019
        %v2345 = vperm.slane %v1987, %v1021
        %v2346 = vsel %vm1023, %v2345, %v2344
        %v2347 = vperm.slane %v1992, %v1019
        %v2348 = vperm.slane %v1997, %v1021
        %v2349 = vsel %vm1023, %v2348, %v2347
        %v2350 = vperm.slane %v2002, %v1019
        %v2351 = vperm.slane %v2007, %v1021
        %v2352 = vsel %vm1023, %v2351, %v2350
        %v2353 = vperm.slane %v2012, %v1019
        %v2354 = vperm.slane %v2017, %v1021
        %v2355 = vsel %vm1023, %v2354, %v2353
        %v2356 = vperm.slane %v2022, %v1019
        %v2357 = vperm.slane %v2027, %v1021
        %v2358 = vsel %vm1023, %v2357, %v2356
        %v2359 = vperm.slane %v2032, %v1019
        %v2360 = vperm.slane %v2037, %v1021
        %v2361 = vsel %vm1023, %v2360, %v2359
        %v2362 = vperm.slane %v2042, %v1019
        %v2363 = vperm.slane %v2047, %v1021
        %v2364 = vsel %vm1023, %v2363, %v2362
        %v2365 = vperm.slane %v2052, %v1019
        %v2366 = vperm.slane %v2057, %v1021
        %v2367 = vsel %vm1023, %v2366, %v2365
        %v2368 = vsel %vm1046, %v2325, %v2322
        %v2369 = vsel %vm1048, %v2328, %v2368
        %v2370 = vsel %vm1050, %v2331, %v2369
        %v2371 = vsel %vm1052, %v2334, %v2370
        %v2372 = vsel %vm1054, %v2337, %v2371
        %v2373 = vsel %vm1056, %v2340, %v2372
        %v2374 = vsel %vm1058, %v2343, %v2373
        %v2375 = vsel %vm1046, %v2349, %v2346
        %v2376 = vsel %vm1048, %v2352, %v2375
        %v2377 = vsel %vm1050, %v2355, %v2376
        %v2378 = vsel %vm1052, %v2358, %v2377
        %v2379 = vsel %vm1054, %v2361, %v2378
        %v2380 = vsel %vm1056, %v2364, %v2379
        %v2381 = vsel %vm1058, %v2367, %v2380
        %v2384 = vsel %vm1061, %v2374, 0.0
        %v2385 = vsel %vm1061, %v2381, 0.0
        %v2386 = vmul.f32 %v2384, %v2309
        %v2387 = vmul.f32 %v2385, %v2314
        %2388 = vst [vmem:[%s673] sm:$0xff] %v2386
        %2389 = vst [vmem:[%s673 + $0x8] sm:$0xff] %v2387
        %s2390 = sand.u32 %s366, 1
        %s2391 = scalar_lea.sflag [#allocation6], %s2390
        %s2392 = sand.u32 %s366, 1
        %s2393 = smul.addr %s2392, 16
        %s2394 = scalar_lea.vmem [#allocation13], %s2393
        %s2395 = sand.u32 %s394, 1
        %s2396 = scalar_lea.sflag [#allocation15], %s2395
        %s2397 = sand.u32 %s394, 1
        %s2398 = smul.addr %s2397, 16
        %s2399 = scalar_lea.vmem [#allocation14], %s2398
        // Predicated region
        $region97: #{tpu_custom_call.1} parent=71 // pred_check
          %p2400 = pneg %p376
        $region98: #{tpu_custom_call.1} parent=71 // pred_check_branch
          %2402 = sbr.rel (%p2400) target = $region100
        $region99: #{tpu_custom_call.1} parent=71 // pred_region
          %s2403 = smul.u32 2, %s44
          %2405 = vsyncadd %s2391, 0
          %s2406 = smul.addr %s2403, 2
          %s2407 = sadd.s32 %s43, %s2406
          %s2408 = smul.addr %s2407, 8
          %s2409 = scalar_lea.hbm %s13, %s2408
          %s2410 = sshll.u32 %s2394, 4
          %s2411 = int_to_ptr.vmem [resolvable:$true] %s2410
          %s2412 = sshll.u32 %s2409, 4
          %s2413 = int_to_ptr.hbm [resolvable:$true] %s2412
          %2418 = dma.vmem_to_hbm [thread:$0]  %s2411, 256, %s2413, %s2391, 128, 256, 8
        $region100: #{tpu_custom_call.1} parent=71 // pred_fallthru
          _
        // Predicated region
        $region101: #{tpu_custom_call.1} parent=71 // pred_check
          %p2419 = pneg %p404
        $region102: #{tpu_custom_call.1} parent=71 // pred_check_branch
          %2421 = sbr.rel (%p2419) target = $region104
        $region103: #{tpu_custom_call.1} parent=71 // pred_region
          %s2422 = smul.u32 2, %s44
          %2424 = vsyncadd %s2396, 0
          %s2425 = smul.addr %s2422, 2
          %s2426 = sadd.s32 %s43, %s2425
          %s2427 = smul.addr %s2426, 8
          %s2428 = scalar_lea.hbm %s14, %s2427
          %s2429 = sshll.u32 %s2399, 4
          %s2430 = int_to_ptr.vmem [resolvable:$true] %s2429
          %s2431 = sshll.u32 %s2428, 4
          %s2432 = int_to_ptr.hbm [resolvable:$true] %s2431
          %2437 = dma.vmem_to_hbm [thread:$0]  %s2430, 256, %s2432, %s2396, 128, 256, 8
        $region104: #{tpu_custom_call.1} parent=71 // pred_fallthru
          _
      $region72: #{tpu_custom_call.1} parent=5 // pred_fallthru
        _
      %p2438 = scmp.le.s32.totalorder 2, %s34
      // Predicated region
      $region105: #{tpu_custom_call.1} parent=5 // pred_check
        %p2439 = pneg %p2438
      $region106: #{tpu_custom_call.1} parent=5 // pred_check_branch
        %2441 = sbr.rel (%p2439) target = $region108
      $region107: #{tpu_custom_call.1} parent=5 // pred_region
        %s2442 = ssub.s32 %s34, 2
        // Predicated region
        $region109: #{tpu_custom_call.1} parent=107 // pred_check
          %p2443 = pneg %p382
        $region110: #{tpu_custom_call.1} parent=107 // pred_check_branch
          %2445 = sbr.rel (%p2443) target = $region112
        $region111: #{tpu_custom_call.1} parent=107 // pred_region
          %s2446 = sand.u32 %s367, 1
          %s2447 = scalar_lea.sflag [#allocation6], %s2446
          %s2448 = sand.u32 %s367, 1
          %s2449 = smul.addr %s2448, 16
          %s2450 = scalar_lea.vmem [#allocation13], %s2449
          %2452 = dma.done %s2447, 256
        $region112: #{tpu_custom_call.1} parent=107 // pred_fallthru
          _
        // Predicated region
        $region113: #{tpu_custom_call.1} parent=107 // pred_check
          %p2453 = pneg %p410
        $region114: #{tpu_custom_call.1} parent=107 // pred_check_branch
          %2455 = sbr.rel (%p2453) target = $region116
        $region115: #{tpu_custom_call.1} parent=107 // pred_region
          %s2456 = sand.u32 %s395, 1
          %s2457 = scalar_lea.sflag [#allocation15], %s2456
          %s2458 = sand.u32 %s395, 1
          %s2459 = smul.addr %s2458, 16
          %s2460 = scalar_lea.vmem [#allocation14], %s2459
          %2462 = dma.done %s2457, 256
        $region116: #{tpu_custom_call.1} parent=107 // pred_fallthru
          _
      $region108: #{tpu_custom_call.1} parent=5 // pred_fallthru
        _
    $region6: #{tpu_custom_call.1} parent=1 // loop_footer
      %s38 = sadd.s32 1, %s34
    $region7: #{tpu_custom_call.1} parent=1 // loop_footer_branch
      %33 = sbr.rel target = $region3
    $region8: #{tpu_custom_call.1} parent=1 // loop_exit
      _
    %2463 = vsyncpa [#allocation5], 1
    %s2464 = scalar_lea.sflag [#allocation5], 1
    %2465 = vsyncpa %s2464, 1
    %2466 = vsyncpa [#allocation8], 1
    %s2467 = scalar_lea.sflag [#allocation8], 1
    %2468 = vsyncpa %s2467, 1
    %2469 = vsyncpa [#allocation11], 1
    %2470 = vsyncpa [#allocation6], 1
    %s2471 = scalar_lea.sflag [#allocation6], 1
    %2472 = vsyncpa %s2471, 1
    %2473 = vsyncpa [#allocation15], 1
    %s2474 = scalar_lea.sflag [#allocation15], 1
    %2475 = vsyncpa %s2474, 1

</llo_original>
